<compile_context>
chip_gen: v5e
topology: v5e:2x2
jax: 0.10.0
libtpu: 0.0.40
codegen_flags: <defaults>
</compile_context>

<pallas_src>
import functools

import jax
import jax.numpy as jnp
from jax.experimental import pallas as pl
from jax.experimental.pallas import tpu as pltpu

EPS = 1e-5
HEAD_PAD = 128  # pad num_classes up to a lane-dense multiple of 128


def _round_up(x, m):
    return (x + m - 1) // m * m


def _has_bf16_vpu():
    """True on TPU generations with a bf16 VALU (v6e, v7x); False on v5e and older."""
    try:
        kind = jax.devices()[0].device_kind.lower()
        return not any(v in kind for v in ("v2", "v3", "v4", "v5"))
    except Exception:
        return False


# -----------------------------------------------------------------------------
# Kernel: 4 matmuls + bias + ReLU.  BN already folded, dropout = identity (eval).
# -----------------------------------------------------------------------------
def mlp_kernel(x_ref,
               w1_ref, b1_ref,
               w2_ref, b2_ref,
               w3_ref, b3_ref,
               w4_ref, b4_ref,
               out_ref,
               *, bf16_relu):
    def hidden(h_bf16, w_ref, b_ref):
        a = jnp.dot(h_bf16, w_ref[...], preferred_element_type=jnp.float32) + b_ref[...]
        if bf16_relu:
            # v6e/v7x: max commutes with the downcast -> do ReLU on bf16 vregs.
            return jnp.maximum(a.astype(jnp.bfloat16), 0.0)
        # v5e: no bf16 VPU -> ReLU in f32, then cast for the next MXU op.
        return jnp.maximum(a, 0.0).astype(jnp.bfloat16)

    h = hidden(x_ref[...], w1_ref, b1_ref)   # x arrives already bf16
    h = hidden(h, w2_ref, b2_ref)
    h = hidden(h, w3_ref, b3_ref)
    out = jnp.dot(h, w4_ref[...], preferred_element_type=jnp.float32) + b4_ref[...]
    out_ref[...] = out.astype(out_ref.dtype)


# -----------------------------------------------------------------------------
# Wrapper: batch-tiled grid, resident single-buffered bf16 weights, ragged last block.
# -----------------------------------------------------------------------------
def mlp_forward(x, packed, num_classes):
    B, F = x.shape
    w1, b1, w2, b2, w3, b3, w4, b4 = packed
    n_out = w4.shape[1]  # padded head width (multiple of 128)

    # Pre-cast activations to bf16 in the wrapper (halves streamed HBM bytes).
    x = x.astype(jnp.bfloat16)

    # Batch tile: large tiles to amortize per-grid-step overhead, but keep the grid
    # at >=2 steps whenever possible so v7x can shard the batch over its 2 TCs.
    TB_MAX = 1024 if B >= 4096 else 512
    TB = min(TB_MAX, max(8, _round_up(pl.cdiv(B, 2), 8)))
    TB = min(TB, _round_up(B, 8))
    grid = (pl.cdiv(B, TB),)

    def resident(arr):
        # Constant block index -> stays VMEM-resident across grid steps; single buffer
        # (no re-DMA ever happens, double-buffering would just waste VMEM).
        return pl.BlockSpec(arr.shape, lambda i: (0, 0), pipeline_mode=pl.Buffered(1))

    flops = 2 * B * (F * 1024 + 1024 * 512 + 512 * 256 + 256 * n_out)
    bytes_accessed = (
        x.size * 2
        + sum(int(w.size) * 2 for w in (w1, w2, w3, w4))
        + sum(int(b.size) * 4 for b in (b1, b2, b3, b4))
        + B * n_out * 4
    )

    kernel = functools.partial(mlp_kernel, bf16_relu=_has_bf16_vpu())

    out = pl.pallas_call(
        kernel,
        out_shape=jax.ShapeDtypeStruct((B, n_out), jnp.float32),
        grid=grid,
        in_specs=[
            pl.BlockSpec((TB, F), lambda i: (i, 0)),
            resident(w1), resident(b1),
            resident(w2), resident(b2),
            resident(w3), resident(b3),
            resident(w4), resident(b4),
        ],
        out_specs=pl.BlockSpec((TB, n_out), lambda i: (i, 0)),
        compiler_params=pltpu.CompilerParams(
            dimension_semantics=("parallel",),
            vmem_limit_bytes=32 << 20,
        ),
        cost_estimate=pl.CostEstimate(
            flops=flops, transcendentals=0, bytes_accessed=bytes_accessed),
    )(x, w1, b1, w2, b2, w3, b3, w4, b4)

    return out[:B, :num_classes]


# -----------------------------------------------------------------------------
# Parameter init (PyTorch-equivalent layout) and BN folding / packing.
# -----------------------------------------------------------------------------
def init_params(key, input_dim, num_classes):
    """Deterministic parameter init, shapes matching the PyTorch module (eval state)."""
    dims = [(input_dim, 1024), (1024, 512), (512, 256), (256, num_classes)]
    params = {}
    keys = jax.random.split(key, len(dims))
    for idx, ((fan_in, fan_out), k) in enumerate(zip(dims, keys), start=1):
        kw, kb = jax.random.split(k)
        bound = 1.0 / jnp.sqrt(jnp.float32(fan_in))
        # stored as [in, out] (transpose of PyTorch's [out, in]) for direct x @ W
        params[f"w{idx}"] = jax.random.uniform(kw, (fan_in, fan_out), jnp.float32, -bound, bound)
        params[f"b{idx}"] = jax.random.uniform(kb, (1, fan_out), jnp.float32, -bound, bound)
        if idx <= 3:  # BatchNorm1d after the first three Linears (fresh PyTorch init)
            params[f"g{idx}"] = jnp.ones((1, fan_out), jnp.float32)    # weight (gamma)
            params[f"be{idx}"] = jnp.zeros((1, fan_out), jnp.float32)  # bias (beta)
            params[f"rm{idx}"] = jnp.zeros((1, fan_out), jnp.float32)  # running_mean
            params[f"rv{idx}"] = jnp.ones((1, fan_out), jnp.float32)   # running_var
    return params


def fold_bn_and_pack(params, num_classes):
    """Fold eval-mode BN into the Linears (in f32), downcast weights to bf16,
    pad the classifier head to a lane-dense width."""
    packed = []
    for idx in (1, 2, 3):
        scale = params[f"g{idx}"] * jax.lax.rsqrt(params[f"rv{idx}"] + EPS)        # (1, C)
        w = params[f"w{idx}"] * scale                                              # per-column
        b = (params[f"b{idx}"] - params[f"rm{idx}"]) * scale + params[f"be{idx}"]
        packed += [w.astype(jnp.bfloat16), b.astype(jnp.float32)]

    pad = _round_up(num_classes, HEAD_PAD) - num_classes
    w4p = jnp.pad(params["w4"], ((0, 0), (0, pad)))
    b4p = jnp.pad(params["b4"], ((0, 0), (0, pad)))
    packed += [w4p.astype(jnp.bfloat16), b4p.astype(jnp.float32)]
    return tuple(packed)


# -----------------------------------------------------------------------------
# Pure-JAX reference (original unfused f32 semantics) for correctness checking.
# -----------------------------------------------------------------------------
def mlp_reference(x, p):
    h = x
    for idx in (1, 2, 3):
        h = h @ p[f"w{idx}"] + p[f"b{idx}"]
        h = p[f"g{idx}"] * (h - p[f"rm{idx}"]) * jax.lax.rsqrt(p[f"rv{idx}"] + EPS) + p[f"be{idx}"]
        h = jnp.maximum(h, 0.0)
    return h @ p["w4"] + p["b4"]


if __name__ == "__main__":
    # Small shapes consistent with the module: input_dim is a ctor arg (scaled down),
    # hidden widths 1024/512/256 and num_classes=7 are fixed by the module.
    batch, input_dim, num_classes = 8, 512, 7

    key = jax.random.PRNGKey(0)
    k_params, k_x = jax.random.split(key)
    params = init_params(k_params, input_dim, num_classes)
    x = jax.random.normal(k_x, (batch, input_dim), jnp.float32)

    packed = fold_bn_and_pack(params, num_classes)
    out = mlp_forward(x, packed, num_classes)
    out = jax.block_until_ready(out)

    ref = mlp_reference(x, params)
    assert out.shape == (batch, num_classes)
    # bf16 weight + activation streaming vs f32 reference: relaxed tolerance.
    assert jnp.allclose(out, ref, atol=5e-2, rtol=5e-2), "mismatch vs JAX reference"

    print("KERNEL_OK")
</pallas_src>

<mosaic_0001>
module attributes {stable_mosaic.version = 11 : i64} {
  func.func @mlp_kernel(%arg0: i32, %arg1: memref<8x512xbf16, #tpu.memory_space<vmem>>, %arg2: memref<512x1024xbf16, #tpu.memory_space<vmem>>, %arg3: memref<1x1024xf32, #tpu.memory_space<vmem>>, %arg4: memref<1024x512xbf16, #tpu.memory_space<vmem>>, %arg5: memref<1x512xf32, #tpu.memory_space<vmem>>, %arg6: memref<512x256xbf16, #tpu.memory_space<vmem>>, %arg7: memref<1x256xf32, #tpu.memory_space<vmem>>, %arg8: memref<256x128xbf16, #tpu.memory_space<vmem>>, %arg9: memref<1x128xf32, #tpu.memory_space<vmem>>, %arg10: memref<8x128xf32, #tpu.memory_space<vmem>>) attributes {dimension_semantics = [#tpu.dimension_semantics<parallel>], iteration_bounds = array<i64: 1>, scalar_prefetch = 0 : i64, scratch_operands = 0 : i64, tpu.core_type = #tpu.core_type<tc>, window_params = [{transform_indices = @transform_0, window_bounds = array<i64: 8, 512>}, {pipeline_mode = #tpu.pipeline_mode<synchronous>, transform_indices = @transform_1, window_bounds = array<i64: 512, 1024>}, {pipeline_mode = #tpu.pipeline_mode<synchronous>, transform_indices = @transform_2, window_bounds = array<i64: 1, 1024>}, {pipeline_mode = #tpu.pipeline_mode<synchronous>, transform_indices = @transform_3, window_bounds = array<i64: 1024, 512>}, {pipeline_mode = #tpu.pipeline_mode<synchronous>, transform_indices = @transform_4, window_bounds = array<i64: 1, 512>}, {pipeline_mode = #tpu.pipeline_mode<synchronous>, transform_indices = @transform_5, window_bounds = array<i64: 512, 256>}, {pipeline_mode = #tpu.pipeline_mode<synchronous>, transform_indices = @transform_6, window_bounds = array<i64: 1, 256>}, {pipeline_mode = #tpu.pipeline_mode<synchronous>, transform_indices = @transform_7, window_bounds = array<i64: 256, 128>}, {pipeline_mode = #tpu.pipeline_mode<synchronous>, transform_indices = @transform_8, window_bounds = array<i64: 1, 128>}, {transform_indices = @transform_9, window_bounds = array<i64: 8, 128>}]} {
    %c0 = arith.constant 0 : index
    %c0_0 = arith.constant 0 : index
    %0 = vector.load %arg1[%c0, %c0_0] : memref<8x512xbf16, #tpu.memory_space<vmem>>, vector<8x512xbf16>
    %c0_1 = arith.constant 0 : index
    %c0_2 = arith.constant 0 : index
    %1 = vector.load %arg2[%c0_1, %c0_2] : memref<512x1024xbf16, #tpu.memory_space<vmem>>, vector<512x1024xbf16>
    %cst = arith.constant dense<0.000000e+00> : vector<8x1024xf32>
    %2 = tpu.matmul %0, %1, %cst {dimension_numbers = #tpu.dot_dimension_numbers<[1], [0], [0], [1], [0, 0, 1, 1], [], []>} : vector<8x512xbf16>, vector<512x1024xbf16>, vector<8x1024xf32> -> vector<8x1024xf32>
    %c0_3 = arith.constant 0 : index
    %c0_4 = arith.constant 0 : index
    %3 = vector.load %arg3[%c0_3, %c0_4] : memref<1x1024xf32, #tpu.memory_space<vmem>>, vector<1x1024xf32>
    %4 = vector.broadcast %3 : vector<1x1024xf32> to vector<8x1024xf32>
    %5 = arith.addf %2, %4 : vector<8x1024xf32>
    %6 = arith.truncf %5 : vector<8x1024xf32> to vector<8x1024xbf16>
    %cst_5 = arith.constant 0.000000e+00 : bf16
    %7 = vector.broadcast %cst_5 : bf16 to vector<8x1024xbf16>
    %8 = arith.maximumf %6, %7 : vector<8x1024xbf16>
    %c0_6 = arith.constant 0 : index
    %c0_7 = arith.constant 0 : index
    %9 = vector.load %arg4[%c0_6, %c0_7] : memref<1024x512xbf16, #tpu.memory_space<vmem>>, vector<1024x512xbf16>
    %cst_8 = arith.constant dense<0.000000e+00> : vector<8x512xf32>
    %10 = tpu.matmul %8, %9, %cst_8 {dimension_numbers = #tpu.dot_dimension_numbers<[1], [0], [0], [1], [0, 0, 1, 1], [], []>} : vector<8x1024xbf16>, vector<1024x512xbf16>, vector<8x512xf32> -> vector<8x512xf32>
    %c0_9 = arith.constant 0 : index
    %c0_10 = arith.constant 0 : index
    %11 = vector.load %arg5[%c0_9, %c0_10] : memref<1x512xf32, #tpu.memory_space<vmem>>, vector<1x512xf32>
    %12 = vector.broadcast %11 : vector<1x512xf32> to vector<8x512xf32>
    %13 = arith.addf %10, %12 : vector<8x512xf32>
    %14 = arith.truncf %13 : vector<8x512xf32> to vector<8x512xbf16>
    %cst_11 = arith.constant 0.000000e+00 : bf16
    %15 = vector.broadcast %cst_11 : bf16 to vector<8x512xbf16>
    %16 = arith.maximumf %14, %15 : vector<8x512xbf16>
    %c0_12 = arith.constant 0 : index
    %c0_13 = arith.constant 0 : index
    %17 = vector.load %arg6[%c0_12, %c0_13] : memref<512x256xbf16, #tpu.memory_space<vmem>>, vector<512x256xbf16>
    %cst_14 = arith.constant dense<0.000000e+00> : vector<8x256xf32>
    %18 = tpu.matmul %16, %17, %cst_14 {dimension_numbers = #tpu.dot_dimension_numbers<[1], [0], [0], [1], [0, 0, 1, 1], [], []>} : vector<8x512xbf16>, vector<512x256xbf16>, vector<8x256xf32> -> vector<8x256xf32>
    %c0_15 = arith.constant 0 : index
    %c0_16 = arith.constant 0 : index
    %19 = vector.load %arg7[%c0_15, %c0_16] : memref<1x256xf32, #tpu.memory_space<vmem>>, vector<1x256xf32>
    %20 = vector.broadcast %19 : vector<1x256xf32> to vector<8x256xf32>
    %21 = arith.addf %18, %20 : vector<8x256xf32>
    %22 = arith.truncf %21 : vector<8x256xf32> to vector<8x256xbf16>
    %cst_17 = arith.constant 0.000000e+00 : bf16
    %23 = vector.broadcast %cst_17 : bf16 to vector<8x256xbf16>
    %24 = arith.maximumf %22, %23 : vector<8x256xbf16>
    %c0_18 = arith.constant 0 : index
    %c0_19 = arith.constant 0 : index
    %25 = vector.load %arg8[%c0_18, %c0_19] : memref<256x128xbf16, #tpu.memory_space<vmem>>, vector<256x128xbf16>
    %cst_20 = arith.constant dense<0.000000e+00> : vector<8x128xf32>
    %26 = tpu.matmul %24, %25, %cst_20 {dimension_numbers = #tpu.dot_dimension_numbers<[1], [0], [0], [1], [0, 0, 1, 1], [], []>} : vector<8x256xbf16>, vector<256x128xbf16>, vector<8x128xf32> -> vector<8x128xf32>
    %c0_21 = arith.constant 0 : index
    %c0_22 = arith.constant 0 : index
    %27 = vector.load %arg9[%c0_21, %c0_22] : memref<1x128xf32, #tpu.memory_space<vmem>>, vector<1x128xf32>
    %28 = vector.broadcast %27 : vector<1x128xf32> to vector<8x128xf32>
    %29 = arith.addf %26, %28 : vector<8x128xf32>
    %c0_23 = arith.constant 0 : index
    %c0_24 = arith.constant 0 : index
    %30 = vector.load %arg10[%c0_23, %c0_24] : memref<8x128xf32, #tpu.memory_space<vmem>>, vector<8x128xf32>
    tpu.vector_store %arg10[%c0_23, %c0_24], %29 {strides = array<i32>} : memref<8x128xf32, #tpu.memory_space<vmem>>, vector<8x128xf32>,
    return
  }
  func.func @transform_0(%arg0: i32) -> (i32, i32) {
    %c0_i32 = arith.constant 0 : i32
    %c0_i32_0 = arith.constant 0 : i32
    return %arg0, %c0_i32 : i32, i32
  }
  func.func @transform_1(%arg0: i32) -> (i32, i32) {
    %c0_i32 = arith.constant 0 : i32
    %c0_i32_0 = arith.constant 0 : i32
    %c0_i32_1 = arith.constant 0 : i32
    return %c0_i32, %c0_i32_0 : i32, i32
  }
  func.func @transform_2(%arg0: i32) -> (i32, i32) {
    %c0_i32 = arith.constant 0 : i32
    %c0_i32_0 = arith.constant 0 : i32
    %c0_i32_1 = arith.constant 0 : i32
    return %c0_i32, %c0_i32_0 : i32, i32
  }
  func.func @transform_3(%arg0: i32) -> (i32, i32) {
    %c0_i32 = arith.constant 0 : i32
    %c0_i32_0 = arith.constant 0 : i32
    %c0_i32_1 = arith.constant 0 : i32
    return %c0_i32, %c0_i32_0 : i32, i32
  }
  func.func @transform_4(%arg0: i32) -> (i32, i32) {
    %c0_i32 = arith.constant 0 : i32
    %c0_i32_0 = arith.constant 0 : i32
    %c0_i32_1 = arith.constant 0 : i32
    return %c0_i32, %c0_i32_0 : i32, i32
  }
  func.func @transform_5(%arg0: i32) -> (i32, i32) {
    %c0_i32 = arith.constant 0 : i32
    %c0_i32_0 = arith.constant 0 : i32
    %c0_i32_1 = arith.constant 0 : i32
    return %c0_i32, %c0_i32_0 : i32, i32
  }
  func.func @transform_6(%arg0: i32) -> (i32, i32) {
    %c0_i32 = arith.constant 0 : i32
    %c0_i32_0 = arith.constant 0 : i32
    %c0_i32_1 = arith.constant 0 : i32
    return %c0_i32, %c0_i32_0 : i32, i32
  }
  func.func @transform_7(%arg0: i32) -> (i32, i32) {
    %c0_i32 = arith.constant 0 : i32
    %c0_i32_0 = arith.constant 0 : i32
    %c0_i32_1 = arith.constant 0 : i32
    return %c0_i32, %c0_i32_0 : i32, i32
  }
  func.func @transform_8(%arg0: i32) -> (i32, i32) {
    %c0_i32 = arith.constant 0 : i32
    %c0_i32_0 = arith.constant 0 : i32
    %c0_i32_1 = arith.constant 0 : i32
    return %c0_i32, %c0_i32_0 : i32, i32
  }
  func.func @transform_9(%arg0: i32) -> (i32, i32) {
    %c0_i32 = arith.constant 0 : i32
    %c0_i32_0 = arith.constant 0 : i32
    return %arg0, %c0_i32 : i32, i32
  }
}

</mosaic_0001>

<llo_original>
// kernel: tpu_custom_call.1
$region0: #{tpu_custom_call.1}
  #allocation0 [shape = 'u32[]', space=smem, size = 0x4, offset = 0x4, fixed_abs, tag = 'smem constant byte address 0x4 - core index']
  #allocation1 [shape = 'u32[72,128]{1,0:T(1,128)}', space=vmem, size = 0x9000, scoped, tag = 'internal scratch']
  %s0 = inlined_call_operand.hbm [shape: bf16[8,512], index: 0, kind: input, shape index: {}]
  %s1 = inlined_call_operand.hbm [shape: bf16[512,1024], index: 1, kind: input, shape index: {}]
  %s2 = inlined_call_operand.hbm [shape: f32[1,1024], index: 2, kind: input, shape index: {}]
  %s3 = inlined_call_operand.hbm [shape: bf16[1024,512], index: 3, kind: input, shape index: {}]
  %s4 = inlined_call_operand.hbm [shape: f32[1,512], index: 4, kind: input, shape index: {}]
  %s5 = inlined_call_operand.hbm [shape: bf16[512,256], index: 5, kind: input, shape index: {}]
  %s6 = inlined_call_operand.vmem [shape: f32[1,256], index: 6, kind: input, shape index: {}]
  %s7 = inlined_call_operand.hbm [shape: bf16[256,128], index: 7, kind: input, shape index: {}]
  %s8 = inlined_call_operand.vmem [shape: f32[1,128], index: 8, kind: input, shape index: {}]
  %s9 = inlined_call_operand.hbm [shape: f32[8,128], index: 9, kind: output, shape index: {}]
  %s10 = sld [smem:[#allocation0]]
  $region74: #{tpu_custom_call.1} parent=0
    _
  %s12 = ssub.s32 1, %s10
  %s13 = scalar_select 0, %s12, %s10
  $region1: #{tpu_custom_call.1} parent=0
    #allocation2 [shape = 'u8[8192]{0}', space=vmem, size = 0x2000, scoped, tag = 'input window, operand 0, single buffered']
    #allocation3 [shape = 's32[1]{0}', space=sflag, size = 0x4, scoped, tag = 'scoped memory for tpu_custom_call.1']
    #allocation4 [shape = 's32[1]{0}', space=sflag, size = 0x4, scoped, tag = 'scoped memory for tpu_custom_call.1']
    #allocation5 [shape = 'u8[1048576]{0}', space=vmem, size = 0x100000, scoped, tag = 'input window, operand 1, single buffered']
    #allocation6 [shape = 's32[1]{0}', space=sflag, size = 0x4, scoped, tag = 'scoped memory for tpu_custom_call.1']
    #allocation7 [shape = 'u8[4096]{0}', space=vmem, size = 0x1000, scoped, tag = 'input window, operand 2, single buffered']
    #allocation8 [shape = 'u8[1048576]{0}', space=vmem, size = 0x100000, scoped, tag = 'input window, operand 3, single buffered']
    #allocation9 [shape = 's32[1]{0}', space=sflag, size = 0x4, scoped, tag = 'scoped memory for tpu_custom_call.1']
    #allocation10 [shape = 'u8[2048]{0}', space=vmem, size = 0x800, scoped, tag = 'input window, operand 4, single buffered']
    #allocation11 [shape = 'u8[262144]{0}', space=vmem, size = 0x40000, scoped, tag = 'input window, operand 5, single buffered']
    #allocation12 [shape = 's32[1]{0}', space=sflag, size = 0x4, scoped, tag = 'scoped memory for tpu_custom_call.1']
    #allocation13 [shape = 'u8[65536]{0}', space=vmem, size = 0x10000, scoped, tag = 'input window, operand 7, single buffered']
    #allocation14 [shape = 'u8[4096]{0}', space=vmem, size = 0x1000, scoped, tag = 'output window, operand 0, single buffered']
    %14 = vsyncpa [#allocation3], 0
    %15 = vsyncpa [#allocation6], 0
    %16 = vsyncpa [#allocation9], 0
    %17 = vsyncpa [#allocation12], 0
    %18 = vsyncpa [#allocation4], 0
    // Predicated region
    $region2: #{tpu_custom_call.1} parent=1 // pred_check
      _
    $region3: #{tpu_custom_call.1} parent=1 // pred_check_branch
      %20 = sbr.rel (0) target = $region5
    $region4: #{tpu_custom_call.1} parent=1 // pred_region
      %22 = vsyncadd [#allocation3], 0
      %s24 = sshll.u32 %s0, 4
      %s25 = int_to_ptr.hbm [resolvable:$true] %s24
      %s26 = sshll.u32 [#allocation2], 4
      %s27 = int_to_ptr.vmem [resolvable:$true] %s26
      %29 = dma.hbm_to_vmem [thread:$0]  %s25, 256, %s27, [#allocation3]
    $region5: #{tpu_custom_call.1} parent=1 // pred_fallthru
      _
    // Predicated region
    $region6: #{tpu_custom_call.1} parent=1 // pred_check
      _
    $region7: #{tpu_custom_call.1} parent=1 // pred_check_branch
      %31 = sbr.rel (0) target = $region9
    $region8: #{tpu_custom_call.1} parent=1 // pred_region
      %33 = vsyncadd [#allocation6], 0
      %s34 = sshll.u32 %s1, 4
      %s35 = int_to_ptr.hbm [resolvable:$true] %s34
      %s36 = sshll.u32 [#allocation5], 4
      %s37 = int_to_ptr.vmem [resolvable:$true] %s36
      %42 = dma.hbm_to_vmem [thread:$0]  %s35, 32768, %s37, [#allocation6], 512, 512, 32
    $region9: #{tpu_custom_call.1} parent=1 // pred_fallthru
      _
    // Predicated region
    $region10: #{tpu_custom_call.1} parent=1 // pred_check
      _
    $region11: #{tpu_custom_call.1} parent=1 // pred_check_branch
      %44 = sbr.rel (0) target = $region13
    $region12: #{tpu_custom_call.1} parent=1 // pred_region
      %46 = vsyncadd [#allocation6], 0
      %s48 = sshll.u32 %s2, 4
      %s49 = int_to_ptr.hbm [resolvable:$true] %s48
      %s50 = sshll.u32 [#allocation7], 4
      %s51 = int_to_ptr.vmem [resolvable:$true] %s50
      %53 = dma.hbm_to_vmem [thread:$0]  %s49, 128, %s51, [#allocation6]
    $region13: #{tpu_custom_call.1} parent=1 // pred_fallthru
      _
    // Predicated region
    $region14: #{tpu_custom_call.1} parent=1 // pred_check
      _
    $region15: #{tpu_custom_call.1} parent=1 // pred_check_branch
      %55 = sbr.rel (0) target = $region17
    $region16: #{tpu_custom_call.1} parent=1 // pred_region
      %57 = vsyncadd [#allocation9], 0
      %s58 = sshll.u32 %s3, 4
      %s59 = int_to_ptr.hbm [resolvable:$true] %s58
      %s60 = sshll.u32 [#allocation8], 4
      %s61 = int_to_ptr.vmem [resolvable:$true] %s60
      %66 = dma.hbm_to_vmem [thread:$0]  %s59, 32768, %s61, [#allocation9], 256, 256, 16
    $region17: #{tpu_custom_call.1} parent=1 // pred_fallthru
      _
    // Predicated region
    $region18: #{tpu_custom_call.1} parent=1 // pred_check
      _
    $region19: #{tpu_custom_call.1} parent=1 // pred_check_branch
      %68 = sbr.rel (0) target = $region21
    $region20: #{tpu_custom_call.1} parent=1 // pred_region
      %70 = vsyncadd [#allocation9], 0
      %s72 = sshll.u32 %s4, 4
      %s73 = int_to_ptr.hbm [resolvable:$true] %s72
      %s74 = sshll.u32 [#allocation10], 4
      %s75 = int_to_ptr.vmem [resolvable:$true] %s74
      %77 = dma.hbm_to_vmem [thread:$0]  %s73, 64, %s75, [#allocation9]
    $region21: #{tpu_custom_call.1} parent=1 // pred_fallthru
      _
    // Predicated region
    $region22: #{tpu_custom_call.1} parent=1 // pred_check
      _
    $region23: #{tpu_custom_call.1} parent=1 // pred_check_branch
      %79 = sbr.rel (0) target = $region25
    $region24: #{tpu_custom_call.1} parent=1 // pred_region
      %81 = vsyncadd [#allocation12], 0
      %s82 = sshll.u32 %s5, 4
      %s83 = int_to_ptr.hbm [resolvable:$true] %s82
      %s84 = sshll.u32 [#allocation11], 4
      %s85 = int_to_ptr.vmem [resolvable:$true] %s84
      %90 = dma.hbm_to_vmem [thread:$0]  %s83, 8192, %s85, [#allocation12], 128, 128, 8
    $region25: #{tpu_custom_call.1} parent=1 // pred_fallthru
      _
    // Predicated region
    $region26: #{tpu_custom_call.1} parent=1 // pred_check
      _
    $region27: #{tpu_custom_call.1} parent=1 // pred_check_branch
      %92 = sbr.rel (0) target = $region29
    $region28: #{tpu_custom_call.1} parent=1 // pred_region
      _
    $region29: #{tpu_custom_call.1} parent=1 // pred_fallthru
      _
    // Predicated region
    $region30: #{tpu_custom_call.1} parent=1 // pred_check
      _
    $region31: #{tpu_custom_call.1} parent=1 // pred_check_branch
      %94 = sbr.rel (0) target = $region33
    $region32: #{tpu_custom_call.1} parent=1 // pred_region
      %96 = vsyncadd [#allocation12], 0
      %s97 = sshll.u32 %s7, 4
      %s98 = int_to_ptr.hbm [resolvable:$true] %s97
      %s99 = sshll.u32 [#allocation13], 4
      %s100 = int_to_ptr.vmem [resolvable:$true] %s99
      %105 = dma.hbm_to_vmem [thread:$0]  %s98, 2048, %s100, [#allocation12], 64, 64, 4
    $region33: #{tpu_custom_call.1} parent=1 // pred_fallthru
      _
    // Predicated region
    $region34: #{tpu_custom_call.1} parent=1 // pred_check
      _
    $region35: #{tpu_custom_call.1} parent=1 // pred_check_branch
      %107 = sbr.rel (0) target = $region37
    $region36: #{tpu_custom_call.1} parent=1 // pred_region
      _
    $region37: #{tpu_custom_call.1} parent=1 // pred_fallthru
      _
    // Predicated region
    $region38: #{tpu_custom_call.1} parent=1 // pred_check
      _
    $region39: #{tpu_custom_call.1} parent=1 // pred_check_branch
      %109 = sbr.rel (0) target = $region41
    $region40: #{tpu_custom_call.1} parent=1 // pred_region
      %111 = dma.done [#allocation3], 256
    $region41: #{tpu_custom_call.1} parent=1 // pred_fallthru
      _
    // Predicated region
    $region42: #{tpu_custom_call.1} parent=1 // pred_check
      _
    $region43: #{tpu_custom_call.1} parent=1 // pred_check_branch
      %113 = sbr.rel (0) target = $region45
    $region44: #{tpu_custom_call.1} parent=1 // pred_region
      %115 = dma.done [#allocation6], 32768
    $region45: #{tpu_custom_call.1} parent=1 // pred_fallthru
      _
    // Predicated region
    $region46: #{tpu_custom_call.1} parent=1 // pred_check
      _
    $region47: #{tpu_custom_call.1} parent=1 // pred_check_branch
      %117 = sbr.rel (0) target = $region49
    $region48: #{tpu_custom_call.1} parent=1 // pred_region
      %119 = dma.done [#allocation6], 128
    $region49: #{tpu_custom_call.1} parent=1 // pred_fallthru
      _
    // Predicated region
    $region50: #{tpu_custom_call.1} parent=1 // pred_check
      _
    $region51: #{tpu_custom_call.1} parent=1 // pred_check_branch
      %121 = sbr.rel (0) target = $region53
    $region52: #{tpu_custom_call.1} parent=1 // pred_region
      %123 = dma.done [#allocation9], 32768
    $region53: #{tpu_custom_call.1} parent=1 // pred_fallthru
      _
    // Predicated region
    $region54: #{tpu_custom_call.1} parent=1 // pred_check
      _
    $region55: #{tpu_custom_call.1} parent=1 // pred_check_branch
      %125 = sbr.rel (0) target = $region57
    $region56: #{tpu_custom_call.1} parent=1 // pred_region
      %127 = dma.done [#allocation9], 64
    $region57: #{tpu_custom_call.1} parent=1 // pred_fallthru
      _
    // Predicated region
    $region58: #{tpu_custom_call.1} parent=1 // pred_check
      _
    $region59: #{tpu_custom_call.1} parent=1 // pred_check_branch
      %129 = sbr.rel (0) target = $region61
    $region60: #{tpu_custom_call.1} parent=1 // pred_region
      %131 = dma.done [#allocation12], 8192
    $region61: #{tpu_custom_call.1} parent=1 // pred_fallthru
      _
    // Predicated region
    $region62: #{tpu_custom_call.1} parent=1 // pred_check
      _
    $region63: #{tpu_custom_call.1} parent=1 // pred_check_branch
      %133 = sbr.rel (0) target = $region65
    $region64: #{tpu_custom_call.1} parent=1 // pred_region
      %135 = dma.done [#allocation12], 2048
    $region65: #{tpu_custom_call.1} parent=1 // pred_fallthru
      _
    %v136 = vld [vmem:[#allocation2] sm:$0xff]
    %v137 = vld [vmem:[#allocation2 + $0x8] sm:$0xff]
    %v138 = vld [vmem:[#allocation5] sm:$0xff]
    %v139 = vld [vmem:[#allocation5 + $0x8] sm:$0xff]
    %v140 = vld [vmem:[#allocation5 + $0x10] sm:$0xff]
    %v141 = vld [vmem:[#allocation5 + $0x18] sm:$0xff]
    %v142 = vld [vmem:[#allocation5 + $0x20] sm:$0xff]
    %v143 = vld [vmem:[#allocation5 + $0x28] sm:$0xff]
    %v144 = vld [vmem:[#allocation5 + $0x30] sm:$0xff]
    %v145 = vld [vmem:[#allocation5 + $0x38] sm:$0xff]
    %v146 = vld [vmem:[#allocation5 + $0x40] sm:$0xff]
    %v147 = vld [vmem:[#allocation5 + $0x48] sm:$0xff]
    %v148 = vld [vmem:[#allocation5 + $0x50] sm:$0xff]
    %v149 = vld [vmem:[#allocation5 + $0x58] sm:$0xff]
    %v150 = vld [vmem:[#allocation5 + $0x60] sm:$0xff]
    %v151 = vld [vmem:[#allocation5 + $0x68] sm:$0xff]
    %v152 = vld [vmem:[#allocation5 + $0x70] sm:$0xff]
    %v153 = vld [vmem:[#allocation5 + $0x78] sm:$0xff]
    %v154 = vld [vmem:[#allocation5 + $0x80] sm:$0xff]
    %v155 = vld [vmem:[#allocation5 + $0x88] sm:$0xff]
    %v156 = vld [vmem:[#allocation5 + $0x90] sm:$0xff]
    %v157 = vld [vmem:[#allocation5 + $0x98] sm:$0xff]
    %v158 = vld [vmem:[#allocation5 + $0xa0] sm:$0xff]
    %v159 = vld [vmem:[#allocation5 + $0xa8] sm:$0xff]
    %v160 = vld [vmem:[#allocation5 + $0xb0] sm:$0xff]
    %v161 = vld [vmem:[#allocation5 + $0xb8] sm:$0xff]
    %v162 = vld [vmem:[#allocation5 + $0xc0] sm:$0xff]
    %v163 = vld [vmem:[#allocation5 + $0xc8] sm:$0xff]
    %v164 = vld [vmem:[#allocation5 + $0xd0] sm:$0xff]
    %v165 = vld [vmem:[#allocation5 + $0xd8] sm:$0xff]
    %v166 = vld [vmem:[#allocation5 + $0xe0] sm:$0xff]
    %v167 = vld [vmem:[#allocation5 + $0xe8] sm:$0xff]
    %v168 = vld [vmem:[#allocation5 + $0xf0] sm:$0xff]
    %v169 = vld [vmem:[#allocation5 + $0xf8] sm:$0xff]
    %v170 = vld [vmem:[#allocation5 + $0x100] sm:$0xff]
    %v171 = vld [vmem:[#allocation5 + $0x108] sm:$0xff]
    %v172 = vld [vmem:[#allocation5 + $0x110] sm:$0xff]
    %v173 = vld [vmem:[#allocation5 + $0x118] sm:$0xff]
    %v174 = vld [vmem:[#allocation5 + $0x120] sm:$0xff]
    %v175 = vld [vmem:[#allocation5 + $0x128] sm:$0xff]
    %v176 = vld [vmem:[#allocation5 + $0x130] sm:$0xff]
    %v177 = vld [vmem:[#allocation5 + $0x138] sm:$0xff]
    %v178 = vld [vmem:[#allocation5 + $0x140] sm:$0xff]
    %v179 = vld [vmem:[#allocation5 + $0x148] sm:$0xff]
    %v180 = vld [vmem:[#allocation5 + $0x150] sm:$0xff]
    %v181 = vld [vmem:[#allocation5 + $0x158] sm:$0xff]
    %v182 = vld [vmem:[#allocation5 + $0x160] sm:$0xff]
    %v183 = vld [vmem:[#allocation5 + $0x168] sm:$0xff]
    %v184 = vld [vmem:[#allocation5 + $0x170] sm:$0xff]
    %v185 = vld [vmem:[#allocation5 + $0x178] sm:$0xff]
    %v186 = vld [vmem:[#allocation5 + $0x180] sm:$0xff]
    %v187 = vld [vmem:[#allocation5 + $0x188] sm:$0xff]
    %v188 = vld [vmem:[#allocation5 + $0x190] sm:$0xff]
    %v189 = vld [vmem:[#allocation5 + $0x198] sm:$0xff]
    %v190 = vld [vmem:[#allocation5 + $0x1a0] sm:$0xff]
    %v191 = vld [vmem:[#allocation5 + $0x1a8] sm:$0xff]
    %v192 = vld [vmem:[#allocation5 + $0x1b0] sm:$0xff]
    %v193 = vld [vmem:[#allocation5 + $0x1b8] sm:$0xff]
    %v194 = vld [vmem:[#allocation5 + $0x1c0] sm:$0xff]
    %v195 = vld [vmem:[#allocation5 + $0x1c8] sm:$0xff]
    %v196 = vld [vmem:[#allocation5 + $0x1d0] sm:$0xff]
    %v197 = vld [vmem:[#allocation5 + $0x1d8] sm:$0xff]
    %v198 = vld [vmem:[#allocation5 + $0x1e0] sm:$0xff]
    %v199 = vld [vmem:[#allocation5 + $0x1e8] sm:$0xff]
    %v200 = vld [vmem:[#allocation5 + $0x1f0] sm:$0xff]
    %v201 = vld [vmem:[#allocation5 + $0x1f8] sm:$0xff]
    %v202 = vld [vmem:[#allocation5 + $0x200] sm:$0xff]
    %v203 = vld [vmem:[#allocation5 + $0x208] sm:$0xff]
    %v204 = vld [vmem:[#allocation5 + $0x210] sm:$0xff]
    %v205 = vld [vmem:[#allocation5 + $0x218] sm:$0xff]
    %v206 = vld [vmem:[#allocation5 + $0x220] sm:$0xff]
    %v207 = vld [vmem:[#allocation5 + $0x228] sm:$0xff]
    %v208 = vld [vmem:[#allocation5 + $0x230] sm:$0xff]
    %v209 = vld [vmem:[#allocation5 + $0x238] sm:$0xff]
    %v210 = vld [vmem:[#allocation5 + $0x240] sm:$0xff]
    %v211 = vld [vmem:[#allocation5 + $0x248] sm:$0xff]
    %v212 = vld [vmem:[#allocation5 + $0x250] sm:$0xff]
    %v213 = vld [vmem:[#allocation5 + $0x258] sm:$0xff]
    %v214 = vld [vmem:[#allocation5 + $0x260] sm:$0xff]
    %v215 = vld [vmem:[#allocation5 + $0x268] sm:$0xff]
    %v216 = vld [vmem:[#allocation5 + $0x270] sm:$0xff]
    %v217 = vld [vmem:[#allocation5 + $0x278] sm:$0xff]
    %v218 = vld [vmem:[#allocation5 + $0x280] sm:$0xff]
    %v219 = vld [vmem:[#allocation5 + $0x288] sm:$0xff]
    %v220 = vld [vmem:[#allocation5 + $0x290] sm:$0xff]
    %v221 = vld [vmem:[#allocation5 + $0x298] sm:$0xff]
    %v222 = vld [vmem:[#allocation5 + $0x2a0] sm:$0xff]
    %v223 = vld [vmem:[#allocation5 + $0x2a8] sm:$0xff]
    %v224 = vld [vmem:[#allocation5 + $0x2b0] sm:$0xff]
    %v225 = vld [vmem:[#allocation5 + $0x2b8] sm:$0xff]
    %v226 = vld [vmem:[#allocation5 + $0x2c0] sm:$0xff]
    %v227 = vld [vmem:[#allocation5 + $0x2c8] sm:$0xff]
    %v228 = vld [vmem:[#allocation5 + $0x2d0] sm:$0xff]
    %v229 = vld [vmem:[#allocation5 + $0x2d8] sm:$0xff]
    %v230 = vld [vmem:[#allocation5 + $0x2e0] sm:$0xff]
    %v231 = vld [vmem:[#allocation5 + $0x2e8] sm:$0xff]
    %v232 = vld [vmem:[#allocation5 + $0x2f0] sm:$0xff]
    %v233 = vld [vmem:[#allocation5 + $0x2f8] sm:$0xff]
    %v234 = vld [vmem:[#allocation5 + $0x300] sm:$0xff]
    %v235 = vld [vmem:[#allocation5 + $0x308] sm:$0xff]
    %v236 = vld [vmem:[#allocation5 + $0x310] sm:$0xff]
    %v237 = vld [vmem:[#allocation5 + $0x318] sm:$0xff]
    %v238 = vld [vmem:[#allocation5 + $0x320] sm:$0xff]
    %v239 = vld [vmem:[#allocation5 + $0x328] sm:$0xff]
    %v240 = vld [vmem:[#allocation5 + $0x330] sm:$0xff]
    %v241 = vld [vmem:[#allocation5 + $0x338] sm:$0xff]
    %v242 = vld [vmem:[#allocation5 + $0x340] sm:$0xff]
    %v243 = vld [vmem:[#allocation5 + $0x348] sm:$0xff]
    %v244 = vld [vmem:[#allocation5 + $0x350] sm:$0xff]
    %v245 = vld [vmem:[#allocation5 + $0x358] sm:$0xff]
    %v246 = vld [vmem:[#allocation5 + $0x360] sm:$0xff]
    %v247 = vld [vmem:[#allocation5 + $0x368] sm:$0xff]
    %v248 = vld [vmem:[#allocation5 + $0x370] sm:$0xff]
    %v249 = vld [vmem:[#allocation5 + $0x378] sm:$0xff]
    %v250 = vld [vmem:[#allocation5 + $0x380] sm:$0xff]
    %v251 = vld [vmem:[#allocation5 + $0x388] sm:$0xff]
    %v252 = vld [vmem:[#allocation5 + $0x390] sm:$0xff]
    %v253 = vld [vmem:[#allocation5 + $0x398] sm:$0xff]
    %v254 = vld [vmem:[#allocation5 + $0x3a0] sm:$0xff]
    %v255 = vld [vmem:[#allocation5 + $0x3a8] sm:$0xff]
    %v256 = vld [vmem:[#allocation5 + $0x3b0] sm:$0xff]
    %v257 = vld [vmem:[#allocation5 + $0x3b8] sm:$0xff]
    %v258 = vld [vmem:[#allocation5 + $0x3c0] sm:$0xff]
    %v259 = vld [vmem:[#allocation5 + $0x3c8] sm:$0xff]
    %v260 = vld [vmem:[#allocation5 + $0x3d0] sm:$0xff]
    %v261 = vld [vmem:[#allocation5 + $0x3d8] sm:$0xff]
    %v262 = vld [vmem:[#allocation5 + $0x3e0] sm:$0xff]
    %v263 = vld [vmem:[#allocation5 + $0x3e8] sm:$0xff]
    %v264 = vld [vmem:[#allocation5 + $0x3f0] sm:$0xff]
    %v265 = vld [vmem:[#allocation5 + $0x3f8] sm:$0xff]
    %v266 = vld [vmem:[#allocation5 + $0x400] sm:$0xff]
    %v267 = vld [vmem:[#allocation5 + $0x408] sm:$0xff]
    %v268 = vld [vmem:[#allocation5 + $0x410] sm:$0xff]
    %v269 = vld [vmem:[#allocation5 + $0x418] sm:$0xff]
    %v270 = vld [vmem:[#allocation5 + $0x420] sm:$0xff]
    %v271 = vld [vmem:[#allocation5 + $0x428] sm:$0xff]
    %v272 = vld [vmem:[#allocation5 + $0x430] sm:$0xff]
    %v273 = vld [vmem:[#allocation5 + $0x438] sm:$0xff]
    %v274 = vld [vmem:[#allocation5 + $0x440] sm:$0xff]
    %v275 = vld [vmem:[#allocation5 + $0x448] sm:$0xff]
    %v276 = vld [vmem:[#allocation5 + $0x450] sm:$0xff]
    %v277 = vld [vmem:[#allocation5 + $0x458] sm:$0xff]
    %v278 = vld [vmem:[#allocation5 + $0x460] sm:$0xff]
    %v279 = vld [vmem:[#allocation5 + $0x468] sm:$0xff]
    %v280 = vld [vmem:[#allocation5 + $0x470] sm:$0xff]
    %v281 = vld [vmem:[#allocation5 + $0x478] sm:$0xff]
    %v282 = vld [vmem:[#allocation5 + $0x480] sm:$0xff]
    %v283 = vld [vmem:[#allocation5 + $0x488] sm:$0xff]
    %v284 = vld [vmem:[#allocation5 + $0x490] sm:$0xff]
    %v285 = vld [vmem:[#allocation5 + $0x498] sm:$0xff]
    %v286 = vld [vmem:[#allocation5 + $0x4a0] sm:$0xff]
    %v287 = vld [vmem:[#allocation5 + $0x4a8] sm:$0xff]
    %v288 = vld [vmem:[#allocation5 + $0x4b0] sm:$0xff]
    %v289 = vld [vmem:[#allocation5 + $0x4b8] sm:$0xff]
    %v290 = vld [vmem:[#allocation5 + $0x4c0] sm:$0xff]
    %v291 = vld [vmem:[#allocation5 + $0x4c8] sm:$0xff]
    %v292 = vld [vmem:[#allocation5 + $0x4d0] sm:$0xff]
    %v293 = vld [vmem:[#allocation5 + $0x4d8] sm:$0xff]
    %v294 = vld [vmem:[#allocation5 + $0x4e0] sm:$0xff]
    %v295 = vld [vmem:[#allocation5 + $0x4e8] sm:$0xff]
    %v296 = vld [vmem:[#allocation5 + $0x4f0] sm:$0xff]
    %v297 = vld [vmem:[#allocation5 + $0x4f8] sm:$0xff]
    %v298 = vld [vmem:[#allocation5 + $0x500] sm:$0xff]
    %v299 = vld [vmem:[#allocation5 + $0x508] sm:$0xff]
    %v300 = vld [vmem:[#allocation5 + $0x510] sm:$0xff]
    %v301 = vld [vmem:[#allocation5 + $0x518] sm:$0xff]
    %v302 = vld [vmem:[#allocation5 + $0x520] sm:$0xff]
    %v303 = vld [vmem:[#allocation5 + $0x528] sm:$0xff]
    %v304 = vld [vmem:[#allocation5 + $0x530] sm:$0xff]
    %v305 = vld [vmem:[#allocation5 + $0x538] sm:$0xff]
    %v306 = vld [vmem:[#allocation5 + $0x540] sm:$0xff]
    %v307 = vld [vmem:[#allocation5 + $0x548] sm:$0xff]
    %v308 = vld [vmem:[#allocation5 + $0x550] sm:$0xff]
    %v309 = vld [vmem:[#allocation5 + $0x558] sm:$0xff]
    %v310 = vld [vmem:[#allocation5 + $0x560] sm:$0xff]
    %v311 = vld [vmem:[#allocation5 + $0x568] sm:$0xff]
    %v312 = vld [vmem:[#allocation5 + $0x570] sm:$0xff]
    %v313 = vld [vmem:[#allocation5 + $0x578] sm:$0xff]
    %v314 = vld [vmem:[#allocation5 + $0x580] sm:$0xff]
    %v315 = vld [vmem:[#allocation5 + $0x588] sm:$0xff]
    %v316 = vld [vmem:[#allocation5 + $0x590] sm:$0xff]
    %v317 = vld [vmem:[#allocation5 + $0x598] sm:$0xff]
    %v318 = vld [vmem:[#allocation5 + $0x5a0] sm:$0xff]
    %v319 = vld [vmem:[#allocation5 + $0x5a8] sm:$0xff]
    %v320 = vld [vmem:[#allocation5 + $0x5b0] sm:$0xff]
    %v321 = vld [vmem:[#allocation5 + $0x5b8] sm:$0xff]
    %v322 = vld [vmem:[#allocation5 + $0x5c0] sm:$0xff]
    %v323 = vld [vmem:[#allocation5 + $0x5c8] sm:$0xff]
    %v324 = vld [vmem:[#allocation5 + $0x5d0] sm:$0xff]
    %v325 = vld [vmem:[#allocation5 + $0x5d8] sm:$0xff]
    %v326 = vld [vmem:[#allocation5 + $0x5e0] sm:$0xff]
    %v327 = vld [vmem:[#allocation5 + $0x5e8] sm:$0xff]
    %v328 = vld [vmem:[#allocation5 + $0x5f0] sm:$0xff]
    %v329 = vld [vmem:[#allocation5 + $0x5f8] sm:$0xff]
    %v330 = vld [vmem:[#allocation5 + $0x600] sm:$0xff]
    %v331 = vld [vmem:[#allocation5 + $0x608] sm:$0xff]
    %v332 = vld [vmem:[#allocation5 + $0x610] sm:$0xff]
    %v333 = vld [vmem:[#allocation5 + $0x618] sm:$0xff]
    %v334 = vld [vmem:[#allocation5 + $0x620] sm:$0xff]
    %v335 = vld [vmem:[#allocation5 + $0x628] sm:$0xff]
    %v336 = vld [vmem:[#allocation5 + $0x630] sm:$0xff]
    %v337 = vld [vmem:[#allocation5 + $0x638] sm:$0xff]
    %v338 = vld [vmem:[#allocation5 + $0x640] sm:$0xff]
    %v339 = vld [vmem:[#allocation5 + $0x648] sm:$0xff]
    %v340 = vld [vmem:[#allocation5 + $0x650] sm:$0xff]
    %v341 = vld [vmem:[#allocation5 + $0x658] sm:$0xff]
    %v342 = vld [vmem:[#allocation5 + $0x660] sm:$0xff]
    %v343 = vld [vmem:[#allocation5 + $0x668] sm:$0xff]
    %v344 = vld [vmem:[#allocation5 + $0x670] sm:$0xff]
    %v345 = vld [vmem:[#allocation5 + $0x678] sm:$0xff]
    %v346 = vld [vmem:[#allocation5 + $0x680] sm:$0xff]
    %v347 = vld [vmem:[#allocation5 + $0x688] sm:$0xff]
    %v348 = vld [vmem:[#allocation5 + $0x690] sm:$0xff]
    %v349 = vld [vmem:[#allocation5 + $0x698] sm:$0xff]
    %v350 = vld [vmem:[#allocation5 + $0x6a0] sm:$0xff]
    %v351 = vld [vmem:[#allocation5 + $0x6a8] sm:$0xff]
    %v352 = vld [vmem:[#allocation5 + $0x6b0] sm:$0xff]
    %v353 = vld [vmem:[#allocation5 + $0x6b8] sm:$0xff]
    %v354 = vld [vmem:[#allocation5 + $0x6c0] sm:$0xff]
    %v355 = vld [vmem:[#allocation5 + $0x6c8] sm:$0xff]
    %v356 = vld [vmem:[#allocation5 + $0x6d0] sm:$0xff]
    %v357 = vld [vmem:[#allocation5 + $0x6d8] sm:$0xff]
    %v358 = vld [vmem:[#allocation5 + $0x6e0] sm:$0xff]
    %v359 = vld [vmem:[#allocation5 + $0x6e8] sm:$0xff]
    %v360 = vld [vmem:[#allocation5 + $0x6f0] sm:$0xff]
    %v361 = vld [vmem:[#allocation5 + $0x6f8] sm:$0xff]
    %v362 = vld [vmem:[#allocation5 + $0x700] sm:$0xff]
    %v363 = vld [vmem:[#allocation5 + $0x708] sm:$0xff]
    %v364 = vld [vmem:[#allocation5 + $0x710] sm:$0xff]
    %v365 = vld [vmem:[#allocation5 + $0x718] sm:$0xff]
    %v366 = vld [vmem:[#allocation5 + $0x720] sm:$0xff]
    %v367 = vld [vmem:[#allocation5 + $0x728] sm:$0xff]
    %v368 = vld [vmem:[#allocation5 + $0x730] sm:$0xff]
    %v369 = vld [vmem:[#allocation5 + $0x738] sm:$0xff]
    %v370 = vld [vmem:[#allocation5 + $0x740] sm:$0xff]
    %v371 = vld [vmem:[#allocation5 + $0x748] sm:$0xff]
    %v372 = vld [vmem:[#allocation5 + $0x750] sm:$0xff]
    %v373 = vld [vmem:[#allocation5 + $0x758] sm:$0xff]
    %v374 = vld [vmem:[#allocation5 + $0x760] sm:$0xff]
    %v375 = vld [vmem:[#allocation5 + $0x768] sm:$0xff]
    %v376 = vld [vmem:[#allocation5 + $0x770] sm:$0xff]
    %v377 = vld [vmem:[#allocation5 + $0x778] sm:$0xff]
    %v378 = vld [vmem:[#allocation5 + $0x780] sm:$0xff]
    %v379 = vld [vmem:[#allocation5 + $0x788] sm:$0xff]
    %v380 = vld [vmem:[#allocation5 + $0x790] sm:$0xff]
    %v381 = vld [vmem:[#allocation5 + $0x798] sm:$0xff]
    %v382 = vld [vmem:[#allocation5 + $0x7a0] sm:$0xff]
    %v383 = vld [vmem:[#allocation5 + $0x7a8] sm:$0xff]
    %v384 = vld [vmem:[#allocation5 + $0x7b0] sm:$0xff]
    %v385 = vld [vmem:[#allocation5 + $0x7b8] sm:$0xff]
    %v386 = vld [vmem:[#allocation5 + $0x7c0] sm:$0xff]
    %v387 = vld [vmem:[#allocation5 + $0x7c8] sm:$0xff]
    %v388 = vld [vmem:[#allocation5 + $0x7d0] sm:$0xff]
    %v389 = vld [vmem:[#allocation5 + $0x7d8] sm:$0xff]
    %v390 = vld [vmem:[#allocation5 + $0x7e0] sm:$0xff]
    %v391 = vld [vmem:[#allocation5 + $0x7e8] sm:$0xff]
    %v392 = vld [vmem:[#allocation5 + $0x7f0] sm:$0xff]
    %v393 = vld [vmem:[#allocation5 + $0x7f8] sm:$0xff]
    %v394 = vld [vmem:[#allocation7] sm:$0xff]
    %v396 = vperm.slane %v394, 0
    %v397 = vperm.slane %v394, 1
    %v398 = vperm.slane %v394, 2
    %v399 = vperm.slane %v394, 3
    %v400 = vperm.slane %v394, 4
    %v401 = vperm.slane %v394, 5
    %v402 = vperm.slane %v394, 6
    %v403 = vperm.slane %v394, 7
    %v414 = vunpack.c.l.b16 %v136
    %v415 = vunpack.c.h.b16 %v136
    %v416 = vunpack.c.l.b16 %v137
    %v417 = vunpack.c.h.b16 %v137
    %v418 = vpack.c.b16 %v414, %v414
    %v419 = vpack.c.b16 %v415, %v415
    %v420 = vpack.c.b16 %v416, %v416
    %v421 = vpack.c.b16 %v417, %v417
    %v682 = vunpack.c.l.b16 %v138
    %v683 = vunpack.c.h.b16 %v138
    %v684 = vunpack.c.l.b16 %v139
    %v685 = vunpack.c.h.b16 %v139
    %v686 = vunpack.c.l.b16 %v140
    %v687 = vunpack.c.h.b16 %v140
    %v688 = vunpack.c.l.b16 %v141
    %v689 = vunpack.c.h.b16 %v141
    %v690 = vunpack.c.l.b16 %v142
    %v691 = vunpack.c.h.b16 %v142
    %v692 = vunpack.c.l.b16 %v143
    %v693 = vunpack.c.h.b16 %v143
    %v694 = vunpack.c.l.b16 %v144
    %v695 = vunpack.c.h.b16 %v144
    %v696 = vunpack.c.l.b16 %v145
    %v697 = vunpack.c.h.b16 %v145
    %v698 = vunpack.c.l.b16 %v146
    %v699 = vunpack.c.h.b16 %v146
    %v700 = vunpack.c.l.b16 %v147
    %v701 = vunpack.c.h.b16 %v147
    %v702 = vunpack.c.l.b16 %v148
    %v703 = vunpack.c.h.b16 %v148
    %v704 = vunpack.c.l.b16 %v149
    %v705 = vunpack.c.h.b16 %v149
    %v706 = vunpack.c.l.b16 %v150
    %v707 = vunpack.c.h.b16 %v150
    %v708 = vunpack.c.l.b16 %v151
    %v709 = vunpack.c.h.b16 %v151
    %v710 = vunpack.c.l.b16 %v152
    %v711 = vunpack.c.h.b16 %v152
    %v712 = vunpack.c.l.b16 %v153
    %v713 = vunpack.c.h.b16 %v153
    %v714 = vunpack.c.l.b16 %v154
    %v715 = vunpack.c.h.b16 %v154
    %v716 = vunpack.c.l.b16 %v155
    %v717 = vunpack.c.h.b16 %v155
    %v718 = vunpack.c.l.b16 %v156
    %v719 = vunpack.c.h.b16 %v156
    %v720 = vunpack.c.l.b16 %v157
    %v721 = vunpack.c.h.b16 %v157
    %v722 = vunpack.c.l.b16 %v158
    %v723 = vunpack.c.h.b16 %v158
    %v724 = vunpack.c.l.b16 %v159
    %v725 = vunpack.c.h.b16 %v159
    %v726 = vunpack.c.l.b16 %v160
    %v727 = vunpack.c.h.b16 %v160
    %v728 = vunpack.c.l.b16 %v161
    %v729 = vunpack.c.h.b16 %v161
    %v730 = vunpack.c.l.b16 %v162
    %v731 = vunpack.c.h.b16 %v162
    %v732 = vunpack.c.l.b16 %v163
    %v733 = vunpack.c.h.b16 %v163
    %v734 = vunpack.c.l.b16 %v164
    %v735 = vunpack.c.h.b16 %v164
    %v736 = vunpack.c.l.b16 %v165
    %v737 = vunpack.c.h.b16 %v165
    %v738 = vunpack.c.l.b16 %v166
    %v739 = vunpack.c.h.b16 %v166
    %v740 = vunpack.c.l.b16 %v167
    %v741 = vunpack.c.h.b16 %v167
    %v742 = vunpack.c.l.b16 %v168
    %v743 = vunpack.c.h.b16 %v168
    %v744 = vunpack.c.l.b16 %v169
    %v745 = vunpack.c.h.b16 %v169
    %v746 = vunpack.c.l.b16 %v170
    %v747 = vunpack.c.h.b16 %v170
    %v748 = vunpack.c.l.b16 %v171
    %v749 = vunpack.c.h.b16 %v171
    %v750 = vunpack.c.l.b16 %v172
    %v751 = vunpack.c.h.b16 %v172
    %v752 = vunpack.c.l.b16 %v173
    %v753 = vunpack.c.h.b16 %v173
    %v754 = vunpack.c.l.b16 %v174
    %v755 = vunpack.c.h.b16 %v174
    %v756 = vunpack.c.l.b16 %v175
    %v757 = vunpack.c.h.b16 %v175
    %v758 = vunpack.c.l.b16 %v176
    %v759 = vunpack.c.h.b16 %v176
    %v760 = vunpack.c.l.b16 %v177
    %v761 = vunpack.c.h.b16 %v177
    %v762 = vunpack.c.l.b16 %v178
    %v763 = vunpack.c.h.b16 %v178
    %v764 = vunpack.c.l.b16 %v179
    %v765 = vunpack.c.h.b16 %v179
    %v766 = vunpack.c.l.b16 %v180
    %v767 = vunpack.c.h.b16 %v180
    %v768 = vunpack.c.l.b16 %v181
    %v769 = vunpack.c.h.b16 %v181
    %v770 = vunpack.c.l.b16 %v182
    %v771 = vunpack.c.h.b16 %v182
    %v772 = vunpack.c.l.b16 %v183
    %v773 = vunpack.c.h.b16 %v183
    %v774 = vunpack.c.l.b16 %v184
    %v775 = vunpack.c.h.b16 %v184
    %v776 = vunpack.c.l.b16 %v185
    %v777 = vunpack.c.h.b16 %v185
    %v778 = vunpack.c.l.b16 %v186
    %v779 = vunpack.c.h.b16 %v186
    %v780 = vunpack.c.l.b16 %v187
    %v781 = vunpack.c.h.b16 %v187
    %v782 = vunpack.c.l.b16 %v188
    %v783 = vunpack.c.h.b16 %v188
    %v784 = vunpack.c.l.b16 %v189
    %v785 = vunpack.c.h.b16 %v189
    %v786 = vunpack.c.l.b16 %v190
    %v787 = vunpack.c.h.b16 %v190
    %v788 = vunpack.c.l.b16 %v191
    %v789 = vunpack.c.h.b16 %v191
    %v790 = vunpack.c.l.b16 %v192
    %v791 = vunpack.c.h.b16 %v192
    %v792 = vunpack.c.l.b16 %v193
    %v793 = vunpack.c.h.b16 %v193
    %v794 = vunpack.c.l.b16 %v194
    %v795 = vunpack.c.h.b16 %v194
    %v796 = vunpack.c.l.b16 %v195
    %v797 = vunpack.c.h.b16 %v195
    %v798 = vunpack.c.l.b16 %v196
    %v799 = vunpack.c.h.b16 %v196
    %v800 = vunpack.c.l.b16 %v197
    %v801 = vunpack.c.h.b16 %v197
    %v802 = vunpack.c.l.b16 %v198
    %v803 = vunpack.c.h.b16 %v198
    %v804 = vunpack.c.l.b16 %v199
    %v805 = vunpack.c.h.b16 %v199
    %v806 = vunpack.c.l.b16 %v200
    %v807 = vunpack.c.h.b16 %v200
    %v808 = vunpack.c.l.b16 %v201
    %v809 = vunpack.c.h.b16 %v201
    %v810 = vunpack.c.l.b16 %v202
    %v811 = vunpack.c.h.b16 %v202
    %v812 = vunpack.c.l.b16 %v203
    %v813 = vunpack.c.h.b16 %v203
    %v814 = vunpack.c.l.b16 %v204
    %v815 = vunpack.c.h.b16 %v204
    %v816 = vunpack.c.l.b16 %v205
    %v817 = vunpack.c.h.b16 %v205
    %v818 = vunpack.c.l.b16 %v206
    %v819 = vunpack.c.h.b16 %v206
    %v820 = vunpack.c.l.b16 %v207
    %v821 = vunpack.c.h.b16 %v207
    %v822 = vunpack.c.l.b16 %v208
    %v823 = vunpack.c.h.b16 %v208
    %v824 = vunpack.c.l.b16 %v209
    %v825 = vunpack.c.h.b16 %v209
    %v826 = vunpack.c.l.b16 %v210
    %v827 = vunpack.c.h.b16 %v210
    %v828 = vunpack.c.l.b16 %v211
    %v829 = vunpack.c.h.b16 %v211
    %v830 = vunpack.c.l.b16 %v212
    %v831 = vunpack.c.h.b16 %v212
    %v832 = vunpack.c.l.b16 %v213
    %v833 = vunpack.c.h.b16 %v213
    %v834 = vunpack.c.l.b16 %v214
    %v835 = vunpack.c.h.b16 %v214
    %v836 = vunpack.c.l.b16 %v215
    %v837 = vunpack.c.h.b16 %v215
    %v838 = vunpack.c.l.b16 %v216
    %v839 = vunpack.c.h.b16 %v216
    %v840 = vunpack.c.l.b16 %v217
    %v841 = vunpack.c.h.b16 %v217
    %v842 = vunpack.c.l.b16 %v218
    %v843 = vunpack.c.h.b16 %v218
    %v844 = vunpack.c.l.b16 %v219
    %v845 = vunpack.c.h.b16 %v219
    %v846 = vunpack.c.l.b16 %v220
    %v847 = vunpack.c.h.b16 %v220
    %v848 = vunpack.c.l.b16 %v221
    %v849 = vunpack.c.h.b16 %v221
    %v850 = vunpack.c.l.b16 %v222
    %v851 = vunpack.c.h.b16 %v222
    %v852 = vunpack.c.l.b16 %v223
    %v853 = vunpack.c.h.b16 %v223
    %v854 = vunpack.c.l.b16 %v224
    %v855 = vunpack.c.h.b16 %v224
    %v856 = vunpack.c.l.b16 %v225
    %v857 = vunpack.c.h.b16 %v225
    %v858 = vunpack.c.l.b16 %v226
    %v859 = vunpack.c.h.b16 %v226
    %v860 = vunpack.c.l.b16 %v227
    %v861 = vunpack.c.h.b16 %v227
    %v862 = vunpack.c.l.b16 %v228
    %v863 = vunpack.c.h.b16 %v228
    %v864 = vunpack.c.l.b16 %v229
    %v865 = vunpack.c.h.b16 %v229
    %v866 = vunpack.c.l.b16 %v230
    %v867 = vunpack.c.h.b16 %v230
    %v868 = vunpack.c.l.b16 %v231
    %v869 = vunpack.c.h.b16 %v231
    %v870 = vunpack.c.l.b16 %v232
    %v871 = vunpack.c.h.b16 %v232
    %v872 = vunpack.c.l.b16 %v233
    %v873 = vunpack.c.h.b16 %v233
    %v874 = vunpack.c.l.b16 %v234
    %v875 = vunpack.c.h.b16 %v234
    %v876 = vunpack.c.l.b16 %v235
    %v877 = vunpack.c.h.b16 %v235
    %v878 = vunpack.c.l.b16 %v236
    %v879 = vunpack.c.h.b16 %v236
    %v880 = vunpack.c.l.b16 %v237
    %v881 = vunpack.c.h.b16 %v237
    %v882 = vunpack.c.l.b16 %v238
    %v883 = vunpack.c.h.b16 %v238
    %v884 = vunpack.c.l.b16 %v239
    %v885 = vunpack.c.h.b16 %v239
    %v886 = vunpack.c.l.b16 %v240
    %v887 = vunpack.c.h.b16 %v240
    %v888 = vunpack.c.l.b16 %v241
    %v889 = vunpack.c.h.b16 %v241
    %v890 = vunpack.c.l.b16 %v242
    %v891 = vunpack.c.h.b16 %v242
    %v892 = vunpack.c.l.b16 %v243
    %v893 = vunpack.c.h.b16 %v243
    %v894 = vunpack.c.l.b16 %v244
    %v895 = vunpack.c.h.b16 %v244
    %v896 = vunpack.c.l.b16 %v245
    %v897 = vunpack.c.h.b16 %v245
    %v898 = vunpack.c.l.b16 %v246
    %v899 = vunpack.c.h.b16 %v246
    %v900 = vunpack.c.l.b16 %v247
    %v901 = vunpack.c.h.b16 %v247
    %v902 = vunpack.c.l.b16 %v248
    %v903 = vunpack.c.h.b16 %v248
    %v904 = vunpack.c.l.b16 %v249
    %v905 = vunpack.c.h.b16 %v249
    %v906 = vunpack.c.l.b16 %v250
    %v907 = vunpack.c.h.b16 %v250
    %v908 = vunpack.c.l.b16 %v251
    %v909 = vunpack.c.h.b16 %v251
    %v910 = vunpack.c.l.b16 %v252
    %v911 = vunpack.c.h.b16 %v252
    %v912 = vunpack.c.l.b16 %v253
    %v913 = vunpack.c.h.b16 %v253
    %v914 = vunpack.c.l.b16 %v254
    %v915 = vunpack.c.h.b16 %v254
    %v916 = vunpack.c.l.b16 %v255
    %v917 = vunpack.c.h.b16 %v255
    %v918 = vunpack.c.l.b16 %v256
    %v919 = vunpack.c.h.b16 %v256
    %v920 = vunpack.c.l.b16 %v257
    %v921 = vunpack.c.h.b16 %v257
    %v922 = vunpack.c.l.b16 %v258
    %v923 = vunpack.c.h.b16 %v258
    %v924 = vunpack.c.l.b16 %v259
    %v925 = vunpack.c.h.b16 %v259
    %v926 = vunpack.c.l.b16 %v260
    %v927 = vunpack.c.h.b16 %v260
    %v928 = vunpack.c.l.b16 %v261
    %v929 = vunpack.c.h.b16 %v261
    %v930 = vunpack.c.l.b16 %v262
    %v931 = vunpack.c.h.b16 %v262
    %v932 = vunpack.c.l.b16 %v263
    %v933 = vunpack.c.h.b16 %v263
    %v934 = vunpack.c.l.b16 %v264
    %v935 = vunpack.c.h.b16 %v264
    %v936 = vunpack.c.l.b16 %v265
    %v937 = vunpack.c.h.b16 %v265
    %v938 = vunpack.c.l.b16 %v266
    %v939 = vunpack.c.h.b16 %v266
    %v940 = vunpack.c.l.b16 %v267
    %v941 = vunpack.c.h.b16 %v267
    %v942 = vunpack.c.l.b16 %v268
    %v943 = vunpack.c.h.b16 %v268
    %v944 = vunpack.c.l.b16 %v269
    %v945 = vunpack.c.h.b16 %v269
    %v946 = vunpack.c.l.b16 %v270
    %v947 = vunpack.c.h.b16 %v270
    %v948 = vunpack.c.l.b16 %v271
    %v949 = vunpack.c.h.b16 %v271
    %v950 = vunpack.c.l.b16 %v272
    %v951 = vunpack.c.h.b16 %v272
    %v952 = vunpack.c.l.b16 %v273
    %v953 = vunpack.c.h.b16 %v273
    %v954 = vunpack.c.l.b16 %v274
    %v955 = vunpack.c.h.b16 %v274
    %v956 = vunpack.c.l.b16 %v275
    %v957 = vunpack.c.h.b16 %v275
    %v958 = vunpack.c.l.b16 %v276
    %v959 = vunpack.c.h.b16 %v276
    %v960 = vunpack.c.l.b16 %v277
    %v961 = vunpack.c.h.b16 %v277
    %v962 = vunpack.c.l.b16 %v278
    %v963 = vunpack.c.h.b16 %v278
    %v964 = vunpack.c.l.b16 %v279
    %v965 = vunpack.c.h.b16 %v279
    %v966 = vunpack.c.l.b16 %v280
    %v967 = vunpack.c.h.b16 %v280
    %v968 = vunpack.c.l.b16 %v281
    %v969 = vunpack.c.h.b16 %v281
    %v970 = vunpack.c.l.b16 %v282
    %v971 = vunpack.c.h.b16 %v282
    %v972 = vunpack.c.l.b16 %v283
    %v973 = vunpack.c.h.b16 %v283
    %v974 = vunpack.c.l.b16 %v284
    %v975 = vunpack.c.h.b16 %v284
    %v976 = vunpack.c.l.b16 %v285
    %v977 = vunpack.c.h.b16 %v285
    %v978 = vunpack.c.l.b16 %v286
    %v979 = vunpack.c.h.b16 %v286
    %v980 = vunpack.c.l.b16 %v287
    %v981 = vunpack.c.h.b16 %v287
    %v982 = vunpack.c.l.b16 %v288
    %v983 = vunpack.c.h.b16 %v288
    %v984 = vunpack.c.l.b16 %v289
    %v985 = vunpack.c.h.b16 %v289
    %v986 = vunpack.c.l.b16 %v290
    %v987 = vunpack.c.h.b16 %v290
    %v988 = vunpack.c.l.b16 %v291
    %v989 = vunpack.c.h.b16 %v291
    %v990 = vunpack.c.l.b16 %v292
    %v991 = vunpack.c.h.b16 %v292
    %v992 = vunpack.c.l.b16 %v293
    %v993 = vunpack.c.h.b16 %v293
    %v994 = vunpack.c.l.b16 %v294
    %v995 = vunpack.c.h.b16 %v294
    %v996 = vunpack.c.l.b16 %v295
    %v997 = vunpack.c.h.b16 %v295
    %v998 = vunpack.c.l.b16 %v296
    %v999 = vunpack.c.h.b16 %v296
    %v1000 = vunpack.c.l.b16 %v297
    %v1001 = vunpack.c.h.b16 %v297
    %v1002 = vunpack.c.l.b16 %v298
    %v1003 = vunpack.c.h.b16 %v298
    %v1004 = vunpack.c.l.b16 %v299
    %v1005 = vunpack.c.h.b16 %v299
    %v1006 = vunpack.c.l.b16 %v300
    %v1007 = vunpack.c.h.b16 %v300
    %v1008 = vunpack.c.l.b16 %v301
    %v1009 = vunpack.c.h.b16 %v301
    %v1010 = vunpack.c.l.b16 %v302
    %v1011 = vunpack.c.h.b16 %v302
    %v1012 = vunpack.c.l.b16 %v303
    %v1013 = vunpack.c.h.b16 %v303
    %v1014 = vunpack.c.l.b16 %v304
    %v1015 = vunpack.c.h.b16 %v304
    %v1016 = vunpack.c.l.b16 %v305
    %v1017 = vunpack.c.h.b16 %v305
    %v1018 = vunpack.c.l.b16 %v306
    %v1019 = vunpack.c.h.b16 %v306
    %v1020 = vunpack.c.l.b16 %v307
    %v1021 = vunpack.c.h.b16 %v307
    %v1022 = vunpack.c.l.b16 %v308
    %v1023 = vunpack.c.h.b16 %v308
    %v1024 = vunpack.c.l.b16 %v309
    %v1025 = vunpack.c.h.b16 %v309
    %v1026 = vunpack.c.l.b16 %v310
    %v1027 = vunpack.c.h.b16 %v310
    %v1028 = vunpack.c.l.b16 %v311
    %v1029 = vunpack.c.h.b16 %v311
    %v1030 = vunpack.c.l.b16 %v312
    %v1031 = vunpack.c.h.b16 %v312
    %v1032 = vunpack.c.l.b16 %v313
    %v1033 = vunpack.c.h.b16 %v313
    %v1034 = vunpack.c.l.b16 %v314
    %v1035 = vunpack.c.h.b16 %v314
    %v1036 = vunpack.c.l.b16 %v315
    %v1037 = vunpack.c.h.b16 %v315
    %v1038 = vunpack.c.l.b16 %v316
    %v1039 = vunpack.c.h.b16 %v316
    %v1040 = vunpack.c.l.b16 %v317
    %v1041 = vunpack.c.h.b16 %v317
    %v1042 = vunpack.c.l.b16 %v318
    %v1043 = vunpack.c.h.b16 %v318
    %v1044 = vunpack.c.l.b16 %v319
    %v1045 = vunpack.c.h.b16 %v319
    %v1046 = vunpack.c.l.b16 %v320
    %v1047 = vunpack.c.h.b16 %v320
    %v1048 = vunpack.c.l.b16 %v321
    %v1049 = vunpack.c.h.b16 %v321
    %v1050 = vunpack.c.l.b16 %v322
    %v1051 = vunpack.c.h.b16 %v322
    %v1052 = vunpack.c.l.b16 %v323
    %v1053 = vunpack.c.h.b16 %v323
    %v1054 = vunpack.c.l.b16 %v324
    %v1055 = vunpack.c.h.b16 %v324
    %v1056 = vunpack.c.l.b16 %v325
    %v1057 = vunpack.c.h.b16 %v325
    %v1058 = vunpack.c.l.b16 %v326
    %v1059 = vunpack.c.h.b16 %v326
    %v1060 = vunpack.c.l.b16 %v327
    %v1061 = vunpack.c.h.b16 %v327
    %v1062 = vunpack.c.l.b16 %v328
    %v1063 = vunpack.c.h.b16 %v328
    %v1064 = vunpack.c.l.b16 %v329
    %v1065 = vunpack.c.h.b16 %v329
    %v1066 = vunpack.c.l.b16 %v330
    %v1067 = vunpack.c.h.b16 %v330
    %v1068 = vunpack.c.l.b16 %v331
    %v1069 = vunpack.c.h.b16 %v331
    %v1070 = vunpack.c.l.b16 %v332
    %v1071 = vunpack.c.h.b16 %v332
    %v1072 = vunpack.c.l.b16 %v333
    %v1073 = vunpack.c.h.b16 %v333
    %v1074 = vunpack.c.l.b16 %v334
    %v1075 = vunpack.c.h.b16 %v334
    %v1076 = vunpack.c.l.b16 %v335
    %v1077 = vunpack.c.h.b16 %v335
    %v1078 = vunpack.c.l.b16 %v336
    %v1079 = vunpack.c.h.b16 %v336
    %v1080 = vunpack.c.l.b16 %v337
    %v1081 = vunpack.c.h.b16 %v337
    %v1082 = vunpack.c.l.b16 %v338
    %v1083 = vunpack.c.h.b16 %v338
    %v1084 = vunpack.c.l.b16 %v339
    %v1085 = vunpack.c.h.b16 %v339
    %v1086 = vunpack.c.l.b16 %v340
    %v1087 = vunpack.c.h.b16 %v340
    %v1088 = vunpack.c.l.b16 %v341
    %v1089 = vunpack.c.h.b16 %v341
    %v1090 = vunpack.c.l.b16 %v342
    %v1091 = vunpack.c.h.b16 %v342
    %v1092 = vunpack.c.l.b16 %v343
    %v1093 = vunpack.c.h.b16 %v343
    %v1094 = vunpack.c.l.b16 %v344
    %v1095 = vunpack.c.h.b16 %v344
    %v1096 = vunpack.c.l.b16 %v345
    %v1097 = vunpack.c.h.b16 %v345
    %v1098 = vunpack.c.l.b16 %v346
    %v1099 = vunpack.c.h.b16 %v346
    %v1100 = vunpack.c.l.b16 %v347
    %v1101 = vunpack.c.h.b16 %v347
    %v1102 = vunpack.c.l.b16 %v348
    %v1103 = vunpack.c.h.b16 %v348
    %v1104 = vunpack.c.l.b16 %v349
    %v1105 = vunpack.c.h.b16 %v349
    %v1106 = vunpack.c.l.b16 %v350
    %v1107 = vunpack.c.h.b16 %v350
    %v1108 = vunpack.c.l.b16 %v351
    %v1109 = vunpack.c.h.b16 %v351
    %v1110 = vunpack.c.l.b16 %v352
    %v1111 = vunpack.c.h.b16 %v352
    %v1112 = vunpack.c.l.b16 %v353
    %v1113 = vunpack.c.h.b16 %v353
    %v1114 = vunpack.c.l.b16 %v354
    %v1115 = vunpack.c.h.b16 %v354
    %v1116 = vunpack.c.l.b16 %v355
    %v1117 = vunpack.c.h.b16 %v355
    %v1118 = vunpack.c.l.b16 %v356
    %v1119 = vunpack.c.h.b16 %v356
    %v1120 = vunpack.c.l.b16 %v357
    %v1121 = vunpack.c.h.b16 %v357
    %v1122 = vunpack.c.l.b16 %v358
    %v1123 = vunpack.c.h.b16 %v358
    %v1124 = vunpack.c.l.b16 %v359
    %v1125 = vunpack.c.h.b16 %v359
    %v1126 = vunpack.c.l.b16 %v360
    %v1127 = vunpack.c.h.b16 %v360
    %v1128 = vunpack.c.l.b16 %v361
    %v1129 = vunpack.c.h.b16 %v361
    %v1130 = vunpack.c.l.b16 %v362
    %v1131 = vunpack.c.h.b16 %v362
    %v1132 = vunpack.c.l.b16 %v363
    %v1133 = vunpack.c.h.b16 %v363
    %v1134 = vunpack.c.l.b16 %v364
    %v1135 = vunpack.c.h.b16 %v364
    %v1136 = vunpack.c.l.b16 %v365
    %v1137 = vunpack.c.h.b16 %v365
    %v1138 = vunpack.c.l.b16 %v366
    %v1139 = vunpack.c.h.b16 %v366
    %v1140 = vunpack.c.l.b16 %v367
    %v1141 = vunpack.c.h.b16 %v367
    %v1142 = vunpack.c.l.b16 %v368
    %v1143 = vunpack.c.h.b16 %v368
    %v1144 = vunpack.c.l.b16 %v369
    %v1145 = vunpack.c.h.b16 %v369
    %v1146 = vunpack.c.l.b16 %v370
    %v1147 = vunpack.c.h.b16 %v370
    %v1148 = vunpack.c.l.b16 %v371
    %v1149 = vunpack.c.h.b16 %v371
    %v1150 = vunpack.c.l.b16 %v372
    %v1151 = vunpack.c.h.b16 %v372
    %v1152 = vunpack.c.l.b16 %v373
    %v1153 = vunpack.c.h.b16 %v373
    %v1154 = vunpack.c.l.b16 %v374
    %v1155 = vunpack.c.h.b16 %v374
    %v1156 = vunpack.c.l.b16 %v375
    %v1157 = vunpack.c.h.b16 %v375
    %v1158 = vunpack.c.l.b16 %v376
    %v1159 = vunpack.c.h.b16 %v376
    %v1160 = vunpack.c.l.b16 %v377
    %v1161 = vunpack.c.h.b16 %v377
    %v1162 = vunpack.c.l.b16 %v378
    %v1163 = vunpack.c.h.b16 %v378
    %v1164 = vunpack.c.l.b16 %v379
    %v1165 = vunpack.c.h.b16 %v379
    %v1166 = vunpack.c.l.b16 %v380
    %v1167 = vunpack.c.h.b16 %v380
    %v1168 = vunpack.c.l.b16 %v381
    %v1169 = vunpack.c.h.b16 %v381
    %v1170 = vunpack.c.l.b16 %v382
    %v1171 = vunpack.c.h.b16 %v382
    %v1172 = vunpack.c.l.b16 %v383
    %v1173 = vunpack.c.h.b16 %v383
    %v1174 = vunpack.c.l.b16 %v384
    %v1175 = vunpack.c.h.b16 %v384
    %v1176 = vunpack.c.l.b16 %v385
    %v1177 = vunpack.c.h.b16 %v385
    %v1178 = vunpack.c.l.b16 %v386
    %v1179 = vunpack.c.h.b16 %v386
    %v1180 = vunpack.c.l.b16 %v387
    %v1181 = vunpack.c.h.b16 %v387
    %v1182 = vunpack.c.l.b16 %v388
    %v1183 = vunpack.c.h.b16 %v388
    %v1184 = vunpack.c.l.b16 %v389
    %v1185 = vunpack.c.h.b16 %v389
    %v1186 = vunpack.c.l.b16 %v390
    %v1187 = vunpack.c.h.b16 %v390
    %v1188 = vunpack.c.l.b16 %v391
    %v1189 = vunpack.c.h.b16 %v391
    %v1190 = vunpack.c.l.b16 %v392
    %v1191 = vunpack.c.h.b16 %v392
    %v1192 = vunpack.c.l.b16 %v393
    %v1193 = vunpack.c.h.b16 %v393
    %v1194 = vpack.c.b16 %v690, %v682
    %v1195 = vpack.c.b16 %v691, %v683
    %v1196 = vpack.c.b16 %v692, %v684
    %v1197 = vpack.c.b16 %v693, %v685
    %v1198 = vpack.c.b16 %v694, %v686
    %v1199 = vpack.c.b16 %v695, %v687
    %v1200 = vpack.c.b16 %v696, %v688
    %v1201 = vpack.c.b16 %v697, %v689
    %v1202 = vpack.c.b16 %v706, %v698
    %v1203 = vpack.c.b16 %v707, %v699
    %v1204 = vpack.c.b16 %v708, %v700
    %v1205 = vpack.c.b16 %v709, %v701
    %v1206 = vpack.c.b16 %v710, %v702
    %v1207 = vpack.c.b16 %v711, %v703
    %v1208 = vpack.c.b16 %v712, %v704
    %v1209 = vpack.c.b16 %v713, %v705
    %v1210 = vpack.c.b16 %v722, %v714
    %v1211 = vpack.c.b16 %v723, %v715
    %v1212 = vpack.c.b16 %v724, %v716
    %v1213 = vpack.c.b16 %v725, %v717
    %v1214 = vpack.c.b16 %v726, %v718
    %v1215 = vpack.c.b16 %v727, %v719
    %v1216 = vpack.c.b16 %v728, %v720
    %v1217 = vpack.c.b16 %v729, %v721
    %v1218 = vpack.c.b16 %v738, %v730
    %v1219 = vpack.c.b16 %v739, %v731
    %v1220 = vpack.c.b16 %v740, %v732
    %v1221 = vpack.c.b16 %v741, %v733
    %v1222 = vpack.c.b16 %v742, %v734
    %v1223 = vpack.c.b16 %v743, %v735
    %v1224 = vpack.c.b16 %v744, %v736
    %v1225 = vpack.c.b16 %v745, %v737
    %v1226 = vpack.c.b16 %v754, %v746
    %v1227 = vpack.c.b16 %v755, %v747
    %v1228 = vpack.c.b16 %v756, %v748
    %v1229 = vpack.c.b16 %v757, %v749
    %v1230 = vpack.c.b16 %v758, %v750
    %v1231 = vpack.c.b16 %v759, %v751
    %v1232 = vpack.c.b16 %v760, %v752
    %v1233 = vpack.c.b16 %v761, %v753
    %v1234 = vpack.c.b16 %v770, %v762
    %v1235 = vpack.c.b16 %v771, %v763
    %v1236 = vpack.c.b16 %v772, %v764
    %v1237 = vpack.c.b16 %v773, %v765
    %v1238 = vpack.c.b16 %v774, %v766
    %v1239 = vpack.c.b16 %v775, %v767
    %v1240 = vpack.c.b16 %v776, %v768
    %v1241 = vpack.c.b16 %v777, %v769
    %v1242 = vpack.c.b16 %v786, %v778
    %v1243 = vpack.c.b16 %v787, %v779
    %v1244 = vpack.c.b16 %v788, %v780
    %v1245 = vpack.c.b16 %v789, %v781
    %v1246 = vpack.c.b16 %v790, %v782
    %v1247 = vpack.c.b16 %v791, %v783
    %v1248 = vpack.c.b16 %v792, %v784
    %v1249 = vpack.c.b16 %v793, %v785
    %v1250 = vpack.c.b16 %v802, %v794
    %v1251 = vpack.c.b16 %v803, %v795
    %v1252 = vpack.c.b16 %v804, %v796
    %v1253 = vpack.c.b16 %v805, %v797
    %v1254 = vpack.c.b16 %v806, %v798
    %v1255 = vpack.c.b16 %v807, %v799
    %v1256 = vpack.c.b16 %v808, %v800
    %v1257 = vpack.c.b16 %v809, %v801
    %v1258 = vpack.c.b16 %v818, %v810
    %v1259 = vpack.c.b16 %v819, %v811
    %v1260 = vpack.c.b16 %v820, %v812
    %v1261 = vpack.c.b16 %v821, %v813
    %v1262 = vpack.c.b16 %v822, %v814
    %v1263 = vpack.c.b16 %v823, %v815
    %v1264 = vpack.c.b16 %v824, %v816
    %v1265 = vpack.c.b16 %v825, %v817
    %v1266 = vpack.c.b16 %v834, %v826
    %v1267 = vpack.c.b16 %v835, %v827
    %v1268 = vpack.c.b16 %v836, %v828
    %v1269 = vpack.c.b16 %v837, %v829
    %v1270 = vpack.c.b16 %v838, %v830
    %v1271 = vpack.c.b16 %v839, %v831
    %v1272 = vpack.c.b16 %v840, %v832
    %v1273 = vpack.c.b16 %v841, %v833
    %v1274 = vpack.c.b16 %v850, %v842
    %v1275 = vpack.c.b16 %v851, %v843
    %v1276 = vpack.c.b16 %v852, %v844
    %v1277 = vpack.c.b16 %v853, %v845
    %v1278 = vpack.c.b16 %v854, %v846
    %v1279 = vpack.c.b16 %v855, %v847
    %v1280 = vpack.c.b16 %v856, %v848
    %v1281 = vpack.c.b16 %v857, %v849
    %v1282 = vpack.c.b16 %v866, %v858
    %v1283 = vpack.c.b16 %v867, %v859
    %v1284 = vpack.c.b16 %v868, %v860
    %v1285 = vpack.c.b16 %v869, %v861
    %v1286 = vpack.c.b16 %v870, %v862
    %v1287 = vpack.c.b16 %v871, %v863
    %v1288 = vpack.c.b16 %v872, %v864
    %v1289 = vpack.c.b16 %v873, %v865
    %v1290 = vpack.c.b16 %v882, %v874
    %v1291 = vpack.c.b16 %v883, %v875
    %v1292 = vpack.c.b16 %v884, %v876
    %v1293 = vpack.c.b16 %v885, %v877
    %v1294 = vpack.c.b16 %v886, %v878
    %v1295 = vpack.c.b16 %v887, %v879
    %v1296 = vpack.c.b16 %v888, %v880
    %v1297 = vpack.c.b16 %v889, %v881
    %v1298 = vpack.c.b16 %v898, %v890
    %v1299 = vpack.c.b16 %v899, %v891
    %v1300 = vpack.c.b16 %v900, %v892
    %v1301 = vpack.c.b16 %v901, %v893
    %v1302 = vpack.c.b16 %v902, %v894
    %v1303 = vpack.c.b16 %v903, %v895
    %v1304 = vpack.c.b16 %v904, %v896
    %v1305 = vpack.c.b16 %v905, %v897
    %v1306 = vpack.c.b16 %v914, %v906
    %v1307 = vpack.c.b16 %v915, %v907
    %v1308 = vpack.c.b16 %v916, %v908
    %v1309 = vpack.c.b16 %v917, %v909
    %v1310 = vpack.c.b16 %v918, %v910
    %v1311 = vpack.c.b16 %v919, %v911
    %v1312 = vpack.c.b16 %v920, %v912
    %v1313 = vpack.c.b16 %v921, %v913
    %v1314 = vpack.c.b16 %v930, %v922
    %v1315 = vpack.c.b16 %v931, %v923
    %v1316 = vpack.c.b16 %v932, %v924
    %v1317 = vpack.c.b16 %v933, %v925
    %v1318 = vpack.c.b16 %v934, %v926
    %v1319 = vpack.c.b16 %v935, %v927
    %v1320 = vpack.c.b16 %v936, %v928
    %v1321 = vpack.c.b16 %v937, %v929
    %v1322 = vpack.c.b16 %v946, %v938
    %v1323 = vpack.c.b16 %v947, %v939
    %v1324 = vpack.c.b16 %v948, %v940
    %v1325 = vpack.c.b16 %v949, %v941
    %v1326 = vpack.c.b16 %v950, %v942
    %v1327 = vpack.c.b16 %v951, %v943
    %v1328 = vpack.c.b16 %v952, %v944
    %v1329 = vpack.c.b16 %v953, %v945
    %v1330 = vpack.c.b16 %v962, %v954
    %v1331 = vpack.c.b16 %v963, %v955
    %v1332 = vpack.c.b16 %v964, %v956
    %v1333 = vpack.c.b16 %v965, %v957
    %v1334 = vpack.c.b16 %v966, %v958
    %v1335 = vpack.c.b16 %v967, %v959
    %v1336 = vpack.c.b16 %v968, %v960
    %v1337 = vpack.c.b16 %v969, %v961
    %v1338 = vpack.c.b16 %v978, %v970
    %v1339 = vpack.c.b16 %v979, %v971
    %v1340 = vpack.c.b16 %v980, %v972
    %v1341 = vpack.c.b16 %v981, %v973
    %v1342 = vpack.c.b16 %v982, %v974
    %v1343 = vpack.c.b16 %v983, %v975
    %v1344 = vpack.c.b16 %v984, %v976
    %v1345 = vpack.c.b16 %v985, %v977
    %v1346 = vpack.c.b16 %v994, %v986
    %v1347 = vpack.c.b16 %v995, %v987
    %v1348 = vpack.c.b16 %v996, %v988
    %v1349 = vpack.c.b16 %v997, %v989
    %v1350 = vpack.c.b16 %v998, %v990
    %v1351 = vpack.c.b16 %v999, %v991
    %v1352 = vpack.c.b16 %v1000, %v992
    %v1353 = vpack.c.b16 %v1001, %v993
    %v1354 = vpack.c.b16 %v1010, %v1002
    %v1355 = vpack.c.b16 %v1011, %v1003
    %v1356 = vpack.c.b16 %v1012, %v1004
    %v1357 = vpack.c.b16 %v1013, %v1005
    %v1358 = vpack.c.b16 %v1014, %v1006
    %v1359 = vpack.c.b16 %v1015, %v1007
    %v1360 = vpack.c.b16 %v1016, %v1008
    %v1361 = vpack.c.b16 %v1017, %v1009
    %v1362 = vpack.c.b16 %v1026, %v1018
    %v1363 = vpack.c.b16 %v1027, %v1019
    %v1364 = vpack.c.b16 %v1028, %v1020
    %v1365 = vpack.c.b16 %v1029, %v1021
    %v1366 = vpack.c.b16 %v1030, %v1022
    %v1367 = vpack.c.b16 %v1031, %v1023
    %v1368 = vpack.c.b16 %v1032, %v1024
    %v1369 = vpack.c.b16 %v1033, %v1025
    %v1370 = vpack.c.b16 %v1042, %v1034
    %v1371 = vpack.c.b16 %v1043, %v1035
    %v1372 = vpack.c.b16 %v1044, %v1036
    %v1373 = vpack.c.b16 %v1045, %v1037
    %v1374 = vpack.c.b16 %v1046, %v1038
    %v1375 = vpack.c.b16 %v1047, %v1039
    %v1376 = vpack.c.b16 %v1048, %v1040
    %v1377 = vpack.c.b16 %v1049, %v1041
    %v1378 = vpack.c.b16 %v1058, %v1050
    %v1379 = vpack.c.b16 %v1059, %v1051
    %v1380 = vpack.c.b16 %v1060, %v1052
    %v1381 = vpack.c.b16 %v1061, %v1053
    %v1382 = vpack.c.b16 %v1062, %v1054
    %v1383 = vpack.c.b16 %v1063, %v1055
    %v1384 = vpack.c.b16 %v1064, %v1056
    %v1385 = vpack.c.b16 %v1065, %v1057
    %v1386 = vpack.c.b16 %v1074, %v1066
    %v1387 = vpack.c.b16 %v1075, %v1067
    %v1388 = vpack.c.b16 %v1076, %v1068
    %v1389 = vpack.c.b16 %v1077, %v1069
    %v1390 = vpack.c.b16 %v1078, %v1070
    %v1391 = vpack.c.b16 %v1079, %v1071
    %v1392 = vpack.c.b16 %v1080, %v1072
    %v1393 = vpack.c.b16 %v1081, %v1073
    %v1394 = vpack.c.b16 %v1090, %v1082
    %v1395 = vpack.c.b16 %v1091, %v1083
    %v1396 = vpack.c.b16 %v1092, %v1084
    %v1397 = vpack.c.b16 %v1093, %v1085
    %v1398 = vpack.c.b16 %v1094, %v1086
    %v1399 = vpack.c.b16 %v1095, %v1087
    %v1400 = vpack.c.b16 %v1096, %v1088
    %v1401 = vpack.c.b16 %v1097, %v1089
    %v1402 = vpack.c.b16 %v1106, %v1098
    %v1403 = vpack.c.b16 %v1107, %v1099
    %v1404 = vpack.c.b16 %v1108, %v1100
    %v1405 = vpack.c.b16 %v1109, %v1101
    %v1406 = vpack.c.b16 %v1110, %v1102
    %v1407 = vpack.c.b16 %v1111, %v1103
    %v1408 = vpack.c.b16 %v1112, %v1104
    %v1409 = vpack.c.b16 %v1113, %v1105
    %v1410 = vpack.c.b16 %v1122, %v1114
    %v1411 = vpack.c.b16 %v1123, %v1115
    %v1412 = vpack.c.b16 %v1124, %v1116
    %v1413 = vpack.c.b16 %v1125, %v1117
    %v1414 = vpack.c.b16 %v1126, %v1118
    %v1415 = vpack.c.b16 %v1127, %v1119
    %v1416 = vpack.c.b16 %v1128, %v1120
    %v1417 = vpack.c.b16 %v1129, %v1121
    %v1418 = vpack.c.b16 %v1138, %v1130
    %v1419 = vpack.c.b16 %v1139, %v1131
    %v1420 = vpack.c.b16 %v1140, %v1132
    %v1421 = vpack.c.b16 %v1141, %v1133
    %v1422 = vpack.c.b16 %v1142, %v1134
    %v1423 = vpack.c.b16 %v1143, %v1135
    %v1424 = vpack.c.b16 %v1144, %v1136
    %v1425 = vpack.c.b16 %v1145, %v1137
    %v1426 = vpack.c.b16 %v1154, %v1146
    %v1427 = vpack.c.b16 %v1155, %v1147
    %v1428 = vpack.c.b16 %v1156, %v1148
    %v1429 = vpack.c.b16 %v1157, %v1149
    %v1430 = vpack.c.b16 %v1158, %v1150
    %v1431 = vpack.c.b16 %v1159, %v1151
    %v1432 = vpack.c.b16 %v1160, %v1152
    %v1433 = vpack.c.b16 %v1161, %v1153
    %v1434 = vpack.c.b16 %v1170, %v1162
    %v1435 = vpack.c.b16 %v1171, %v1163
    %v1436 = vpack.c.b16 %v1172, %v1164
    %v1437 = vpack.c.b16 %v1173, %v1165
    %v1438 = vpack.c.b16 %v1174, %v1166
    %v1439 = vpack.c.b16 %v1175, %v1167
    %v1440 = vpack.c.b16 %v1176, %v1168
    %v1441 = vpack.c.b16 %v1177, %v1169
    %v1442 = vpack.c.b16 %v1186, %v1178
    %v1443 = vpack.c.b16 %v1187, %v1179
    %v1444 = vpack.c.b16 %v1188, %v1180
    %v1445 = vpack.c.b16 %v1189, %v1181
    %v1446 = vpack.c.b16 %v1190, %v1182
    %v1447 = vpack.c.b16 %v1191, %v1183
    %v1448 = vpack.c.b16 %v1192, %v1184
    %v1449 = vpack.c.b16 %v1193, %v1185
    %1706 = vmatpush.bf16.msra.mxu0 %v1250
    %1707 = vmatpush.bf16.msra.mxu0 %v1242
    %1708 = vmatpush.bf16.msra.mxu0 %v1234
    %1709 = vmatpush.bf16.msra.mxu0 %v1226
    %1710 = vmatpush.bf16.msra.mxu0 %v1218
    %1711 = vmatpush.bf16.msra.mxu0 %v1210
    %1712 = vmatpush.bf16.msra.mxu0 %v1202
    %1713 = vmatpush.bf16.msra.mxu0 %v1194
    %1714 = vmatmul.bf16.gmra.mxu0 %v418
    %v1715 = vpop.f32.mrf.mxu0
    %v1716 = vadd.f32 %v396, %v1715
    %v1717 = vpop.f32.mrf.mxu0
    %1718 = vdwg.mxu0
    %1719 = vmatpush.bf16.msra.mxu0 %v1314
    %1720 = vmatpush.bf16.msra.mxu0 %v1306
    %1721 = vmatpush.bf16.msra.mxu0 %v1298
    %1722 = vmatpush.bf16.msra.mxu0 %v1290
    %1723 = vmatpush.bf16.msra.mxu0 %v1282
    %1724 = vmatpush.bf16.msra.mxu0 %v1274
    %1725 = vmatpush.bf16.msra.mxu0 %v1266
    %1726 = vmatpush.bf16.msra.mxu0 %v1258
    %1727 = vmatmul.bf16.gmra.mxu0 %v419
    %v1728 = vpop.f32.mrf.mxu0
    %v1729 = vadd.f32 %v1716, %v1728
    %v1730 = vpop.f32.mrf.mxu0
    %1731 = vdwg.mxu0
    %1732 = vmatpush.bf16.msra.mxu0 %v1378
    %1733 = vmatpush.bf16.msra.mxu0 %v1370
    %1734 = vmatpush.bf16.msra.mxu0 %v1362
    %1735 = vmatpush.bf16.msra.mxu0 %v1354
    %1736 = vmatpush.bf16.msra.mxu0 %v1346
    %1737 = vmatpush.bf16.msra.mxu0 %v1338
    %1738 = vmatpush.bf16.msra.mxu0 %v1330
    %1739 = vmatpush.bf16.msra.mxu0 %v1322
    %1740 = vmatmul.bf16.gmra.mxu0 %v420
    %v1741 = vpop.f32.mrf.mxu0
    %v1742 = vadd.f32 %v1729, %v1741
    %v1743 = vpop.f32.mrf.mxu0
    %1744 = vdwg.mxu0
    %1745 = vmatpush.bf16.msra.mxu0 %v1442
    %1746 = vmatpush.bf16.msra.mxu0 %v1434
    %1747 = vmatpush.bf16.msra.mxu0 %v1426
    %1748 = vmatpush.bf16.msra.mxu0 %v1418
    %1749 = vmatpush.bf16.msra.mxu0 %v1410
    %1750 = vmatpush.bf16.msra.mxu0 %v1402
    %1751 = vmatpush.bf16.msra.mxu0 %v1394
    %1752 = vmatpush.bf16.msra.mxu0 %v1386
    %1753 = vmatmul.bf16.gmra.mxu0 %v421
    %v1754 = vpop.f32.mrf.mxu0
    %v1755 = vadd.f32 %v1742, %v1754
    %v1756 = vpop.f32.mrf.mxu0
    %1757 = vdwg.mxu0
    %1758 = vmatpush.bf16.msra.mxu0 %v1251
    %1759 = vmatpush.bf16.msra.mxu0 %v1243
    %1760 = vmatpush.bf16.msra.mxu0 %v1235
    %1761 = vmatpush.bf16.msra.mxu0 %v1227
    %1762 = vmatpush.bf16.msra.mxu0 %v1219
    %1763 = vmatpush.bf16.msra.mxu0 %v1211
    %1764 = vmatpush.bf16.msra.mxu0 %v1203
    %1765 = vmatpush.bf16.msra.mxu0 %v1195
    %1766 = vmatmul.bf16.gmra.mxu0 %v418
    %v1767 = vpop.f32.mrf.mxu0
    %v1768 = vadd.f32 %v397, %v1767
    %v1769 = vpop.f32.mrf.mxu0
    %1770 = vdwg.mxu0
    %1771 = vmatpush.bf16.msra.mxu0 %v1315
    %1772 = vmatpush.bf16.msra.mxu0 %v1307
    %1773 = vmatpush.bf16.msra.mxu0 %v1299
    %1774 = vmatpush.bf16.msra.mxu0 %v1291
    %1775 = vmatpush.bf16.msra.mxu0 %v1283
    %1776 = vmatpush.bf16.msra.mxu0 %v1275
    %1777 = vmatpush.bf16.msra.mxu0 %v1267
    %1778 = vmatpush.bf16.msra.mxu0 %v1259
    %1779 = vmatmul.bf16.gmra.mxu0 %v419
    %v1780 = vpop.f32.mrf.mxu0
    %v1781 = vadd.f32 %v1768, %v1780
    %v1782 = vpop.f32.mrf.mxu0
    %1783 = vdwg.mxu0
    %1784 = vmatpush.bf16.msra.mxu0 %v1379
    %1785 = vmatpush.bf16.msra.mxu0 %v1371
    %1786 = vmatpush.bf16.msra.mxu0 %v1363
    %1787 = vmatpush.bf16.msra.mxu0 %v1355
    %1788 = vmatpush.bf16.msra.mxu0 %v1347
    %1789 = vmatpush.bf16.msra.mxu0 %v1339
    %1790 = vmatpush.bf16.msra.mxu0 %v1331
    %1791 = vmatpush.bf16.msra.mxu0 %v1323
    %1792 = vmatmul.bf16.gmra.mxu0 %v420
    %v1793 = vpop.f32.mrf.mxu0
    %v1794 = vadd.f32 %v1781, %v1793
    %v1795 = vpop.f32.mrf.mxu0
    %1796 = vdwg.mxu0
    %1797 = vmatpush.bf16.msra.mxu0 %v1443
    %1798 = vmatpush.bf16.msra.mxu0 %v1435
    %1799 = vmatpush.bf16.msra.mxu0 %v1427
    %1800 = vmatpush.bf16.msra.mxu0 %v1419
    %1801 = vmatpush.bf16.msra.mxu0 %v1411
    %1802 = vmatpush.bf16.msra.mxu0 %v1403
    %1803 = vmatpush.bf16.msra.mxu0 %v1395
    %1804 = vmatpush.bf16.msra.mxu0 %v1387
    %1805 = vmatmul.bf16.gmra.mxu0 %v421
    %v1806 = vpop.f32.mrf.mxu0
    %v1807 = vadd.f32 %v1794, %v1806
    %v1808 = vpop.f32.mrf.mxu0
    %1809 = vdwg.mxu0
    %1810 = vmatpush.bf16.msra.mxu0 %v1252
    %1811 = vmatpush.bf16.msra.mxu0 %v1244
    %1812 = vmatpush.bf16.msra.mxu0 %v1236
    %1813 = vmatpush.bf16.msra.mxu0 %v1228
    %1814 = vmatpush.bf16.msra.mxu0 %v1220
    %1815 = vmatpush.bf16.msra.mxu0 %v1212
    %1816 = vmatpush.bf16.msra.mxu0 %v1204
    %1817 = vmatpush.bf16.msra.mxu0 %v1196
    %1818 = vmatmul.bf16.gmra.mxu0 %v418
    %v1819 = vpop.f32.mrf.mxu0
    %v1820 = vadd.f32 %v398, %v1819
    %v1821 = vpop.f32.mrf.mxu0
    %1822 = vdwg.mxu0
    %1823 = vmatpush.bf16.msra.mxu0 %v1316
    %1824 = vmatpush.bf16.msra.mxu0 %v1308
    %1825 = vmatpush.bf16.msra.mxu0 %v1300
    %1826 = vmatpush.bf16.msra.mxu0 %v1292
    %1827 = vmatpush.bf16.msra.mxu0 %v1284
    %1828 = vmatpush.bf16.msra.mxu0 %v1276
    %1829 = vmatpush.bf16.msra.mxu0 %v1268
    %1830 = vmatpush.bf16.msra.mxu0 %v1260
    %1831 = vmatmul.bf16.gmra.mxu0 %v419
    %v1832 = vpop.f32.mrf.mxu0
    %v1833 = vadd.f32 %v1820, %v1832
    %v1834 = vpop.f32.mrf.mxu0
    %1835 = vdwg.mxu0
    %1836 = vmatpush.bf16.msra.mxu0 %v1380
    %1837 = vmatpush.bf16.msra.mxu0 %v1372
    %1838 = vmatpush.bf16.msra.mxu0 %v1364
    %1839 = vmatpush.bf16.msra.mxu0 %v1356
    %1840 = vmatpush.bf16.msra.mxu0 %v1348
    %1841 = vmatpush.bf16.msra.mxu0 %v1340
    %1842 = vmatpush.bf16.msra.mxu0 %v1332
    %1843 = vmatpush.bf16.msra.mxu0 %v1324
    %1844 = vmatmul.bf16.gmra.mxu0 %v420
    %v1845 = vpop.f32.mrf.mxu0
    %v1846 = vadd.f32 %v1833, %v1845
    %v1847 = vpop.f32.mrf.mxu0
    %1848 = vdwg.mxu0
    %1849 = vmatpush.bf16.msra.mxu0 %v1444
    %1850 = vmatpush.bf16.msra.mxu0 %v1436
    %1851 = vmatpush.bf16.msra.mxu0 %v1428
    %1852 = vmatpush.bf16.msra.mxu0 %v1420
    %1853 = vmatpush.bf16.msra.mxu0 %v1412
    %1854 = vmatpush.bf16.msra.mxu0 %v1404
    %1855 = vmatpush.bf16.msra.mxu0 %v1396
    %1856 = vmatpush.bf16.msra.mxu0 %v1388
    %1857 = vmatmul.bf16.gmra.mxu0 %v421
    %v1858 = vpop.f32.mrf.mxu0
    %v1859 = vadd.f32 %v1846, %v1858
    %v1860 = vpop.f32.mrf.mxu0
    %1861 = vdwg.mxu0
    %1862 = vmatpush.bf16.msra.mxu0 %v1253
    %1863 = vmatpush.bf16.msra.mxu0 %v1245
    %1864 = vmatpush.bf16.msra.mxu0 %v1237
    %1865 = vmatpush.bf16.msra.mxu0 %v1229
    %1866 = vmatpush.bf16.msra.mxu0 %v1221
    %1867 = vmatpush.bf16.msra.mxu0 %v1213
    %1868 = vmatpush.bf16.msra.mxu0 %v1205
    %1869 = vmatpush.bf16.msra.mxu0 %v1197
    %1870 = vmatmul.bf16.gmra.mxu0 %v418
    %v1871 = vpop.f32.mrf.mxu0
    %v1872 = vadd.f32 %v399, %v1871
    %v1873 = vpop.f32.mrf.mxu0
    %1874 = vdwg.mxu0
    %1875 = vmatpush.bf16.msra.mxu0 %v1317
    %1876 = vmatpush.bf16.msra.mxu0 %v1309
    %1877 = vmatpush.bf16.msra.mxu0 %v1301
    %1878 = vmatpush.bf16.msra.mxu0 %v1293
    %1879 = vmatpush.bf16.msra.mxu0 %v1285
    %1880 = vmatpush.bf16.msra.mxu0 %v1277
    %1881 = vmatpush.bf16.msra.mxu0 %v1269
    %1882 = vmatpush.bf16.msra.mxu0 %v1261
    %1883 = vmatmul.bf16.gmra.mxu0 %v419
    %v1884 = vpop.f32.mrf.mxu0
    %v1885 = vadd.f32 %v1872, %v1884
    %v1886 = vpop.f32.mrf.mxu0
    %1887 = vdwg.mxu0
    %1888 = vmatpush.bf16.msra.mxu0 %v1381
    %1889 = vmatpush.bf16.msra.mxu0 %v1373
    %1890 = vmatpush.bf16.msra.mxu0 %v1365
    %1891 = vmatpush.bf16.msra.mxu0 %v1357
    %1892 = vmatpush.bf16.msra.mxu0 %v1349
    %1893 = vmatpush.bf16.msra.mxu0 %v1341
    %1894 = vmatpush.bf16.msra.mxu0 %v1333
    %1895 = vmatpush.bf16.msra.mxu0 %v1325
    %1896 = vmatmul.bf16.gmra.mxu0 %v420
    %v1897 = vpop.f32.mrf.mxu0
    %v1898 = vadd.f32 %v1885, %v1897
    %v1899 = vpop.f32.mrf.mxu0
    %1900 = vdwg.mxu0
    %1901 = vmatpush.bf16.msra.mxu0 %v1445
    %1902 = vmatpush.bf16.msra.mxu0 %v1437
    %1903 = vmatpush.bf16.msra.mxu0 %v1429
    %1904 = vmatpush.bf16.msra.mxu0 %v1421
    %1905 = vmatpush.bf16.msra.mxu0 %v1413
    %1906 = vmatpush.bf16.msra.mxu0 %v1405
    %1907 = vmatpush.bf16.msra.mxu0 %v1397
    %1908 = vmatpush.bf16.msra.mxu0 %v1389
    %1909 = vmatmul.bf16.gmra.mxu0 %v421
    %v1910 = vpop.f32.mrf.mxu0
    %v1911 = vadd.f32 %v1898, %v1910
    %v1912 = vpop.f32.mrf.mxu0
    %1913 = vdwg.mxu0
    %1914 = vmatpush.bf16.msra.mxu0 %v1254
    %1915 = vmatpush.bf16.msra.mxu0 %v1246
    %1916 = vmatpush.bf16.msra.mxu0 %v1238
    %1917 = vmatpush.bf16.msra.mxu0 %v1230
    %1918 = vmatpush.bf16.msra.mxu0 %v1222
    %1919 = vmatpush.bf16.msra.mxu0 %v1214
    %1920 = vmatpush.bf16.msra.mxu0 %v1206
    %1921 = vmatpush.bf16.msra.mxu0 %v1198
    %1922 = vmatmul.bf16.gmra.mxu0 %v418
    %v1923 = vpop.f32.mrf.mxu0
    %v1924 = vadd.f32 %v400, %v1923
    %v1925 = vpop.f32.mrf.mxu0
    %1926 = vdwg.mxu0
    %1927 = vmatpush.bf16.msra.mxu0 %v1318
    %1928 = vmatpush.bf16.msra.mxu0 %v1310
    %1929 = vmatpush.bf16.msra.mxu0 %v1302
    %1930 = vmatpush.bf16.msra.mxu0 %v1294
    %1931 = vmatpush.bf16.msra.mxu0 %v1286
    %1932 = vmatpush.bf16.msra.mxu0 %v1278
    %1933 = vmatpush.bf16.msra.mxu0 %v1270
    %1934 = vmatpush.bf16.msra.mxu0 %v1262
    %1935 = vmatmul.bf16.gmra.mxu0 %v419
    %v1936 = vpop.f32.mrf.mxu0
    %v1937 = vadd.f32 %v1924, %v1936
    %v1938 = vpop.f32.mrf.mxu0
    %1939 = vdwg.mxu0
    %1940 = vmatpush.bf16.msra.mxu0 %v1382
    %1941 = vmatpush.bf16.msra.mxu0 %v1374
    %1942 = vmatpush.bf16.msra.mxu0 %v1366
    %1943 = vmatpush.bf16.msra.mxu0 %v1358
    %1944 = vmatpush.bf16.msra.mxu0 %v1350
    %1945 = vmatpush.bf16.msra.mxu0 %v1342
    %1946 = vmatpush.bf16.msra.mxu0 %v1334
    %1947 = vmatpush.bf16.msra.mxu0 %v1326
    %1948 = vmatmul.bf16.gmra.mxu0 %v420
    %v1949 = vpop.f32.mrf.mxu0
    %v1950 = vadd.f32 %v1937, %v1949
    %v1951 = vpop.f32.mrf.mxu0
    %1952 = vdwg.mxu0
    %1953 = vmatpush.bf16.msra.mxu0 %v1446
    %1954 = vmatpush.bf16.msra.mxu0 %v1438
    %1955 = vmatpush.bf16.msra.mxu0 %v1430
    %1956 = vmatpush.bf16.msra.mxu0 %v1422
    %1957 = vmatpush.bf16.msra.mxu0 %v1414
    %1958 = vmatpush.bf16.msra.mxu0 %v1406
    %1959 = vmatpush.bf16.msra.mxu0 %v1398
    %1960 = vmatpush.bf16.msra.mxu0 %v1390
    %1961 = vmatmul.bf16.gmra.mxu0 %v421
    %v1962 = vpop.f32.mrf.mxu0
    %v1963 = vadd.f32 %v1950, %v1962
    %v1964 = vpop.f32.mrf.mxu0
    %1965 = vdwg.mxu0
    %1966 = vmatpush.bf16.msra.mxu0 %v1255
    %1967 = vmatpush.bf16.msra.mxu0 %v1247
    %1968 = vmatpush.bf16.msra.mxu0 %v1239
    %1969 = vmatpush.bf16.msra.mxu0 %v1231
    %1970 = vmatpush.bf16.msra.mxu0 %v1223
    %1971 = vmatpush.bf16.msra.mxu0 %v1215
    %1972 = vmatpush.bf16.msra.mxu0 %v1207
    %1973 = vmatpush.bf16.msra.mxu0 %v1199
    %1974 = vmatmul.bf16.gmra.mxu0 %v418
    %v1975 = vpop.f32.mrf.mxu0
    %v1976 = vadd.f32 %v401, %v1975
    %v1977 = vpop.f32.mrf.mxu0
    %1978 = vdwg.mxu0
    %1979 = vmatpush.bf16.msra.mxu0 %v1319
    %1980 = vmatpush.bf16.msra.mxu0 %v1311
    %1981 = vmatpush.bf16.msra.mxu0 %v1303
    %1982 = vmatpush.bf16.msra.mxu0 %v1295
    %1983 = vmatpush.bf16.msra.mxu0 %v1287
    %1984 = vmatpush.bf16.msra.mxu0 %v1279
    %1985 = vmatpush.bf16.msra.mxu0 %v1271
    %1986 = vmatpush.bf16.msra.mxu0 %v1263
    %1987 = vmatmul.bf16.gmra.mxu0 %v419
    %v1988 = vpop.f32.mrf.mxu0
    %v1989 = vadd.f32 %v1976, %v1988
    %v1990 = vpop.f32.mrf.mxu0
    %1991 = vdwg.mxu0
    %1992 = vmatpush.bf16.msra.mxu0 %v1383
    %1993 = vmatpush.bf16.msra.mxu0 %v1375
    %1994 = vmatpush.bf16.msra.mxu0 %v1367
    %1995 = vmatpush.bf16.msra.mxu0 %v1359
    %1996 = vmatpush.bf16.msra.mxu0 %v1351
    %1997 = vmatpush.bf16.msra.mxu0 %v1343
    %1998 = vmatpush.bf16.msra.mxu0 %v1335
    %1999 = vmatpush.bf16.msra.mxu0 %v1327
    %2000 = vmatmul.bf16.gmra.mxu0 %v420
    %v2001 = vpop.f32.mrf.mxu0
    %v2002 = vadd.f32 %v1989, %v2001
    %v2003 = vpop.f32.mrf.mxu0
    %2004 = vdwg.mxu0
    %2005 = vmatpush.bf16.msra.mxu0 %v1447
    %2006 = vmatpush.bf16.msra.mxu0 %v1439
    %2007 = vmatpush.bf16.msra.mxu0 %v1431
    %2008 = vmatpush.bf16.msra.mxu0 %v1423
    %2009 = vmatpush.bf16.msra.mxu0 %v1415
    %2010 = vmatpush.bf16.msra.mxu0 %v1407
    %2011 = vmatpush.bf16.msra.mxu0 %v1399
    %2012 = vmatpush.bf16.msra.mxu0 %v1391
    %2013 = vmatmul.bf16.gmra.mxu0 %v421
    %v2014 = vpop.f32.mrf.mxu0
    %v2015 = vadd.f32 %v2002, %v2014
    %v2016 = vpop.f32.mrf.mxu0
    %2017 = vdwg.mxu0
    %2018 = vmatpush.bf16.msra.mxu0 %v1256
    %2019 = vmatpush.bf16.msra.mxu0 %v1248
    %2020 = vmatpush.bf16.msra.mxu0 %v1240
    %2021 = vmatpush.bf16.msra.mxu0 %v1232
    %2022 = vmatpush.bf16.msra.mxu0 %v1224
    %2023 = vmatpush.bf16.msra.mxu0 %v1216
    %2024 = vmatpush.bf16.msra.mxu0 %v1208
    %2025 = vmatpush.bf16.msra.mxu0 %v1200
    %2026 = vmatmul.bf16.gmra.mxu0 %v418
    %v2027 = vpop.f32.mrf.mxu0
    %v2028 = vadd.f32 %v402, %v2027
    %v2029 = vpop.f32.mrf.mxu0
    %2030 = vdwg.mxu0
    %2031 = vmatpush.bf16.msra.mxu0 %v1320
    %2032 = vmatpush.bf16.msra.mxu0 %v1312
    %2033 = vmatpush.bf16.msra.mxu0 %v1304
    %2034 = vmatpush.bf16.msra.mxu0 %v1296
    %2035 = vmatpush.bf16.msra.mxu0 %v1288
    %2036 = vmatpush.bf16.msra.mxu0 %v1280
    %2037 = vmatpush.bf16.msra.mxu0 %v1272
    %2038 = vmatpush.bf16.msra.mxu0 %v1264
    %2039 = vmatmul.bf16.gmra.mxu0 %v419
    %v2040 = vpop.f32.mrf.mxu0
    %v2041 = vadd.f32 %v2028, %v2040
    %v2042 = vpop.f32.mrf.mxu0
    %2043 = vdwg.mxu0
    %2044 = vmatpush.bf16.msra.mxu0 %v1384
    %2045 = vmatpush.bf16.msra.mxu0 %v1376
    %2046 = vmatpush.bf16.msra.mxu0 %v1368
    %2047 = vmatpush.bf16.msra.mxu0 %v1360
    %2048 = vmatpush.bf16.msra.mxu0 %v1352
    %2049 = vmatpush.bf16.msra.mxu0 %v1344
    %2050 = vmatpush.bf16.msra.mxu0 %v1336
    %2051 = vmatpush.bf16.msra.mxu0 %v1328
    %2052 = vmatmul.bf16.gmra.mxu0 %v420
    %v2053 = vpop.f32.mrf.mxu0
    %v2054 = vadd.f32 %v2041, %v2053
    %v2055 = vpop.f32.mrf.mxu0
    %2056 = vdwg.mxu0
    %2057 = vmatpush.bf16.msra.mxu0 %v1448
    %2058 = vmatpush.bf16.msra.mxu0 %v1440
    %2059 = vmatpush.bf16.msra.mxu0 %v1432
    %2060 = vmatpush.bf16.msra.mxu0 %v1424
    %2061 = vmatpush.bf16.msra.mxu0 %v1416
    %2062 = vmatpush.bf16.msra.mxu0 %v1408
    %2063 = vmatpush.bf16.msra.mxu0 %v1400
    %2064 = vmatpush.bf16.msra.mxu0 %v1392
    %2065 = vmatmul.bf16.gmra.mxu0 %v421
    %v2066 = vpop.f32.mrf.mxu0
    %v2067 = vadd.f32 %v2054, %v2066
    %v2068 = vpop.f32.mrf.mxu0
    %2069 = vdwg.mxu0
    %2070 = vmatpush.bf16.msra.mxu0 %v1257
    %2071 = vmatpush.bf16.msra.mxu0 %v1249
    %2072 = vmatpush.bf16.msra.mxu0 %v1241
    %2073 = vmatpush.bf16.msra.mxu0 %v1233
    %2074 = vmatpush.bf16.msra.mxu0 %v1225
    %2075 = vmatpush.bf16.msra.mxu0 %v1217
    %2076 = vmatpush.bf16.msra.mxu0 %v1209
    %2077 = vmatpush.bf16.msra.mxu0 %v1201
    %2078 = vmatmul.bf16.gmra.mxu0 %v418
    %v2079 = vpop.f32.mrf.mxu0
    %v2080 = vadd.f32 %v403, %v2079
    %v2081 = vpop.f32.mrf.mxu0
    %2082 = vdwg.mxu0
    %2083 = vmatpush.bf16.msra.mxu0 %v1321
    %2084 = vmatpush.bf16.msra.mxu0 %v1313
    %2085 = vmatpush.bf16.msra.mxu0 %v1305
    %2086 = vmatpush.bf16.msra.mxu0 %v1297
    %2087 = vmatpush.bf16.msra.mxu0 %v1289
    %2088 = vmatpush.bf16.msra.mxu0 %v1281
    %2089 = vmatpush.bf16.msra.mxu0 %v1273
    %2090 = vmatpush.bf16.msra.mxu0 %v1265
    %2091 = vmatmul.bf16.gmra.mxu0 %v419
    %v2092 = vpop.f32.mrf.mxu0
    %v2093 = vadd.f32 %v2080, %v2092
    %v2094 = vpop.f32.mrf.mxu0
    %2095 = vdwg.mxu0
    %2096 = vmatpush.bf16.msra.mxu0 %v1385
    %2097 = vmatpush.bf16.msra.mxu0 %v1377
    %2098 = vmatpush.bf16.msra.mxu0 %v1369
    %2099 = vmatpush.bf16.msra.mxu0 %v1361
    %2100 = vmatpush.bf16.msra.mxu0 %v1353
    %2101 = vmatpush.bf16.msra.mxu0 %v1345
    %2102 = vmatpush.bf16.msra.mxu0 %v1337
    %2103 = vmatpush.bf16.msra.mxu0 %v1329
    %2104 = vmatmul.bf16.gmra.mxu0 %v420
    %v2105 = vpop.f32.mrf.mxu0
    %v2106 = vadd.f32 %v2093, %v2105
    %v2107 = vpop.f32.mrf.mxu0
    %2108 = vdwg.mxu0
    %2109 = vmatpush.bf16.msra.mxu0 %v1449
    %2110 = vmatpush.bf16.msra.mxu0 %v1441
    %2111 = vmatpush.bf16.msra.mxu0 %v1433
    %2112 = vmatpush.bf16.msra.mxu0 %v1425
    %2113 = vmatpush.bf16.msra.mxu0 %v1417
    %2114 = vmatpush.bf16.msra.mxu0 %v1409
    %2115 = vmatpush.bf16.msra.mxu0 %v1401
    %2116 = vmatpush.bf16.msra.mxu0 %v1393
    %2117 = vmatmul.bf16.gmra.mxu0 %v421
    %v2118 = vpop.f32.mrf.mxu0
    %v2119 = vadd.f32 %v2106, %v2118
    %v2120 = vpop.f32.mrf.mxu0
    %2121 = vdwg.mxu0
    %v2122 = vpack.c.bf16 %v1807, %v1755
    %v2123 = vpack.c.bf16 %v1911, %v1859
    %v2124 = vpack.c.bf16 %v2015, %v1963
    %v2125 = vpack.c.bf16 %v2119, %v2067
    %v2126 = vunpack.c.l.bf16 %v2122
    %v2127 = vunpack.c.h.bf16 %v2122
    %v2128 = vunpack.c.l.bf16 %v2123
    %v2129 = vunpack.c.h.bf16 %v2123
    %v2130 = vunpack.c.l.bf16 %v2124
    %v2131 = vunpack.c.h.bf16 %v2124
    %v2132 = vunpack.c.l.bf16 %v2125
    %v2133 = vunpack.c.h.bf16 %v2125
    %v2134 = vmax.f32 %v2126, 0.0
    %v2135 = vmax.f32 %v2127, 0.0
    %v2136 = vmax.f32 %v2128, 0.0
    %v2137 = vmax.f32 %v2129, 0.0
    %v2138 = vmax.f32 %v2130, 0.0
    %v2139 = vmax.f32 %v2131, 0.0
    %v2140 = vmax.f32 %v2132, 0.0
    %v2141 = vmax.f32 %v2133, 0.0
    %v2142 = vpack.c.bf16 %v2134, %v2134
    %v2143 = vpack.c.bf16 %v2135, %v2135
    %v2144 = vpack.c.bf16 %v2136, %v2136
    %v2145 = vpack.c.bf16 %v2137, %v2137
    %v2146 = vpack.c.bf16 %v2138, %v2138
    %v2147 = vpack.c.bf16 %v2139, %v2139
    %v2148 = vpack.c.bf16 %v2140, %v2140
    %v2149 = vpack.c.bf16 %v2141, %v2141
    %v2150 = vld [vmem:[#allocation8] sm:$0xff]
    %v2151 = vld [vmem:[#allocation8 + $0x8] sm:$0xff]
    %v2152 = vld [vmem:[#allocation8 + $0x10] sm:$0xff]
    %v2153 = vld [vmem:[#allocation8 + $0x18] sm:$0xff]
    %v2154 = vld [vmem:[#allocation8 + $0x20] sm:$0xff]
    %v2155 = vld [vmem:[#allocation8 + $0x28] sm:$0xff]
    %v2156 = vld [vmem:[#allocation8 + $0x30] sm:$0xff]
    %v2157 = vld [vmem:[#allocation8 + $0x38] sm:$0xff]
    %v2158 = vld [vmem:[#allocation8 + $0x40] sm:$0xff]
    %v2159 = vld [vmem:[#allocation8 + $0x48] sm:$0xff]
    %v2160 = vld [vmem:[#allocation8 + $0x50] sm:$0xff]
    %v2161 = vld [vmem:[#allocation8 + $0x58] sm:$0xff]
    %v2162 = vld [vmem:[#allocation8 + $0x60] sm:$0xff]
    %v2163 = vld [vmem:[#allocation8 + $0x68] sm:$0xff]
    %v2164 = vld [vmem:[#allocation8 + $0x70] sm:$0xff]
    %v2165 = vld [vmem:[#allocation8 + $0x78] sm:$0xff]
    %v2166 = vld [vmem:[#allocation8 + $0x80] sm:$0xff]
    %v2167 = vld [vmem:[#allocation8 + $0x88] sm:$0xff]
    %v2168 = vld [vmem:[#allocation8 + $0x90] sm:$0xff]
    %v2169 = vld [vmem:[#allocation8 + $0x98] sm:$0xff]
    %v2170 = vld [vmem:[#allocation8 + $0xa0] sm:$0xff]
    %v2171 = vld [vmem:[#allocation8 + $0xa8] sm:$0xff]
    %v2172 = vld [vmem:[#allocation8 + $0xb0] sm:$0xff]
    %v2173 = vld [vmem:[#allocation8 + $0xb8] sm:$0xff]
    %v2174 = vld [vmem:[#allocation8 + $0xc0] sm:$0xff]
    %v2175 = vld [vmem:[#allocation8 + $0xc8] sm:$0xff]
    %v2176 = vld [vmem:[#allocation8 + $0xd0] sm:$0xff]
    %v2177 = vld [vmem:[#allocation8 + $0xd8] sm:$0xff]
    %v2178 = vld [vmem:[#allocation8 + $0xe0] sm:$0xff]
    %v2179 = vld [vmem:[#allocation8 + $0xe8] sm:$0xff]
    %v2180 = vld [vmem:[#allocation8 + $0xf0] sm:$0xff]
    %v2181 = vld [vmem:[#allocation8 + $0xf8] sm:$0xff]
    %v2182 = vld [vmem:[#allocation8 + $0x100] sm:$0xff]
    %v2183 = vld [vmem:[#allocation8 + $0x108] sm:$0xff]
    %v2184 = vld [vmem:[#allocation8 + $0x110] sm:$0xff]
    %v2185 = vld [vmem:[#allocation8 + $0x118] sm:$0xff]
    %v2186 = vld [vmem:[#allocation8 + $0x120] sm:$0xff]
    %v2187 = vld [vmem:[#allocation8 + $0x128] sm:$0xff]
    %v2188 = vld [vmem:[#allocation8 + $0x130] sm:$0xff]
    %v2189 = vld [vmem:[#allocation8 + $0x138] sm:$0xff]
    %v2190 = vld [vmem:[#allocation8 + $0x140] sm:$0xff]
    %v2191 = vld [vmem:[#allocation8 + $0x148] sm:$0xff]
    %v2192 = vld [vmem:[#allocation8 + $0x150] sm:$0xff]
    %v2193 = vld [vmem:[#allocation8 + $0x158] sm:$0xff]
    %v2194 = vld [vmem:[#allocation8 + $0x160] sm:$0xff]
    %v2195 = vld [vmem:[#allocation8 + $0x168] sm:$0xff]
    %v2196 = vld [vmem:[#allocation8 + $0x170] sm:$0xff]
    %v2197 = vld [vmem:[#allocation8 + $0x178] sm:$0xff]
    %v2198 = vld [vmem:[#allocation8 + $0x180] sm:$0xff]
    %v2199 = vld [vmem:[#allocation8 + $0x188] sm:$0xff]
    %v2200 = vld [vmem:[#allocation8 + $0x190] sm:$0xff]
    %v2201 = vld [vmem:[#allocation8 + $0x198] sm:$0xff]
    %v2202 = vld [vmem:[#allocation8 + $0x1a0] sm:$0xff]
    %v2203 = vld [vmem:[#allocation8 + $0x1a8] sm:$0xff]
    %v2204 = vld [vmem:[#allocation8 + $0x1b0] sm:$0xff]
    %v2205 = vld [vmem:[#allocation8 + $0x1b8] sm:$0xff]
    %v2206 = vld [vmem:[#allocation8 + $0x1c0] sm:$0xff]
    %v2207 = vld [vmem:[#allocation8 + $0x1c8] sm:$0xff]
    %v2208 = vld [vmem:[#allocation8 + $0x1d0] sm:$0xff]
    %v2209 = vld [vmem:[#allocation8 + $0x1d8] sm:$0xff]
    %v2210 = vld [vmem:[#allocation8 + $0x1e0] sm:$0xff]
    %v2211 = vld [vmem:[#allocation8 + $0x1e8] sm:$0xff]
    %v2212 = vld [vmem:[#allocation8 + $0x1f0] sm:$0xff]
    %v2213 = vld [vmem:[#allocation8 + $0x1f8] sm:$0xff]
    %v2214 = vld [vmem:[#allocation8 + $0x200] sm:$0xff]
    %v2215 = vld [vmem:[#allocation8 + $0x208] sm:$0xff]
    %v2216 = vld [vmem:[#allocation8 + $0x210] sm:$0xff]
    %v2217 = vld [vmem:[#allocation8 + $0x218] sm:$0xff]
    %v2218 = vld [vmem:[#allocation8 + $0x220] sm:$0xff]
    %v2219 = vld [vmem:[#allocation8 + $0x228] sm:$0xff]
    %v2220 = vld [vmem:[#allocation8 + $0x230] sm:$0xff]
    %v2221 = vld [vmem:[#allocation8 + $0x238] sm:$0xff]
    %v2222 = vld [vmem:[#allocation8 + $0x240] sm:$0xff]
    %v2223 = vld [vmem:[#allocation8 + $0x248] sm:$0xff]
    %v2224 = vld [vmem:[#allocation8 + $0x250] sm:$0xff]
    %v2225 = vld [vmem:[#allocation8 + $0x258] sm:$0xff]
    %v2226 = vld [vmem:[#allocation8 + $0x260] sm:$0xff]
    %v2227 = vld [vmem:[#allocation8 + $0x268] sm:$0xff]
    %v2228 = vld [vmem:[#allocation8 + $0x270] sm:$0xff]
    %v2229 = vld [vmem:[#allocation8 + $0x278] sm:$0xff]
    %v2230 = vld [vmem:[#allocation8 + $0x280] sm:$0xff]
    %v2231 = vld [vmem:[#allocation8 + $0x288] sm:$0xff]
    %v2232 = vld [vmem:[#allocation8 + $0x290] sm:$0xff]
    %v2233 = vld [vmem:[#allocation8 + $0x298] sm:$0xff]
    %v2234 = vld [vmem:[#allocation8 + $0x2a0] sm:$0xff]
    %v2235 = vld [vmem:[#allocation8 + $0x2a8] sm:$0xff]
    %v2236 = vld [vmem:[#allocation8 + $0x2b0] sm:$0xff]
    %v2237 = vld [vmem:[#allocation8 + $0x2b8] sm:$0xff]
    %v2238 = vld [vmem:[#allocation8 + $0x2c0] sm:$0xff]
    %v2239 = vld [vmem:[#allocation8 + $0x2c8] sm:$0xff]
    %v2240 = vld [vmem:[#allocation8 + $0x2d0] sm:$0xff]
    %v2241 = vld [vmem:[#allocation8 + $0x2d8] sm:$0xff]
    %v2242 = vld [vmem:[#allocation8 + $0x2e0] sm:$0xff]
    %v2243 = vld [vmem:[#allocation8 + $0x2e8] sm:$0xff]
    %v2244 = vld [vmem:[#allocation8 + $0x2f0] sm:$0xff]
    %v2245 = vld [vmem:[#allocation8 + $0x2f8] sm:$0xff]
    %v2246 = vld [vmem:[#allocation8 + $0x300] sm:$0xff]
    %v2247 = vld [vmem:[#allocation8 + $0x308] sm:$0xff]
    %v2248 = vld [vmem:[#allocation8 + $0x310] sm:$0xff]
    %v2249 = vld [vmem:[#allocation8 + $0x318] sm:$0xff]
    %v2250 = vld [vmem:[#allocation8 + $0x320] sm:$0xff]
    %v2251 = vld [vmem:[#allocation8 + $0x328] sm:$0xff]
    %v2252 = vld [vmem:[#allocation8 + $0x330] sm:$0xff]
    %v2253 = vld [vmem:[#allocation8 + $0x338] sm:$0xff]
    %v2254 = vld [vmem:[#allocation8 + $0x340] sm:$0xff]
    %v2255 = vld [vmem:[#allocation8 + $0x348] sm:$0xff]
    %v2256 = vld [vmem:[#allocation8 + $0x350] sm:$0xff]
    %v2257 = vld [vmem:[#allocation8 + $0x358] sm:$0xff]
    %v2258 = vld [vmem:[#allocation8 + $0x360] sm:$0xff]
    %v2259 = vld [vmem:[#allocation8 + $0x368] sm:$0xff]
    %v2260 = vld [vmem:[#allocation8 + $0x370] sm:$0xff]
    %v2261 = vld [vmem:[#allocation8 + $0x378] sm:$0xff]
    %v2262 = vld [vmem:[#allocation8 + $0x380] sm:$0xff]
    %v2263 = vld [vmem:[#allocation8 + $0x388] sm:$0xff]
    %v2264 = vld [vmem:[#allocation8 + $0x390] sm:$0xff]
    %v2265 = vld [vmem:[#allocation8 + $0x398] sm:$0xff]
    %v2266 = vld [vmem:[#allocation8 + $0x3a0] sm:$0xff]
    %v2267 = vld [vmem:[#allocation8 + $0x3a8] sm:$0xff]
    %v2268 = vld [vmem:[#allocation8 + $0x3b0] sm:$0xff]
    %v2269 = vld [vmem:[#allocation8 + $0x3b8] sm:$0xff]
    %v2270 = vld [vmem:[#allocation8 + $0x3c0] sm:$0xff]
    %v2271 = vld [vmem:[#allocation8 + $0x3c8] sm:$0xff]
    %v2272 = vld [vmem:[#allocation8 + $0x3d0] sm:$0xff]
    %v2273 = vld [vmem:[#allocation8 + $0x3d8] sm:$0xff]
    %v2274 = vld [vmem:[#allocation8 + $0x3e0] sm:$0xff]
    %v2275 = vld [vmem:[#allocation8 + $0x3e8] sm:$0xff]
    %v2276 = vld [vmem:[#allocation8 + $0x3f0] sm:$0xff]
    %v2277 = vld [vmem:[#allocation8 + $0x3f8] sm:$0xff]
    %v2278 = vld [vmem:[#allocation8 + $0x400] sm:$0xff]
    %v2279 = vld [vmem:[#allocation8 + $0x408] sm:$0xff]
    %v2280 = vld [vmem:[#allocation8 + $0x410] sm:$0xff]
    %v2281 = vld [vmem:[#allocation8 + $0x418] sm:$0xff]
    %v2282 = vld [vmem:[#allocation8 + $0x420] sm:$0xff]
    %v2283 = vld [vmem:[#allocation8 + $0x428] sm:$0xff]
    %v2284 = vld [vmem:[#allocation8 + $0x430] sm:$0xff]
    %v2285 = vld [vmem:[#allocation8 + $0x438] sm:$0xff]
    %v2286 = vld [vmem:[#allocation8 + $0x440] sm:$0xff]
    %v2287 = vld [vmem:[#allocation8 + $0x448] sm:$0xff]
    %v2288 = vld [vmem:[#allocation8 + $0x450] sm:$0xff]
    %v2289 = vld [vmem:[#allocation8 + $0x458] sm:$0xff]
    %v2290 = vld [vmem:[#allocation8 + $0x460] sm:$0xff]
    %v2291 = vld [vmem:[#allocation8 + $0x468] sm:$0xff]
    %v2292 = vld [vmem:[#allocation8 + $0x470] sm:$0xff]
    %v2293 = vld [vmem:[#allocation8 + $0x478] sm:$0xff]
    %v2294 = vld [vmem:[#allocation8 + $0x480] sm:$0xff]
    %v2295 = vld [vmem:[#allocation8 + $0x488] sm:$0xff]
    %v2296 = vld [vmem:[#allocation8 + $0x490] sm:$0xff]
    %v2297 = vld [vmem:[#allocation8 + $0x498] sm:$0xff]
    %v2298 = vld [vmem:[#allocation8 + $0x4a0] sm:$0xff]
    %v2299 = vld [vmem:[#allocation8 + $0x4a8] sm:$0xff]
    %v2300 = vld [vmem:[#allocation8 + $0x4b0] sm:$0xff]
    %v2301 = vld [vmem:[#allocation8 + $0x4b8] sm:$0xff]
    %v2302 = vld [vmem:[#allocation8 + $0x4c0] sm:$0xff]
    %v2303 = vld [vmem:[#allocation8 + $0x4c8] sm:$0xff]
    %v2304 = vld [vmem:[#allocation8 + $0x4d0] sm:$0xff]
    %v2305 = vld [vmem:[#allocation8 + $0x4d8] sm:$0xff]
    %v2306 = vld [vmem:[#allocation8 + $0x4e0] sm:$0xff]
    %v2307 = vld [vmem:[#allocation8 + $0x4e8] sm:$0xff]
    %v2308 = vld [vmem:[#allocation8 + $0x4f0] sm:$0xff]
    %v2309 = vld [vmem:[#allocation8 + $0x4f8] sm:$0xff]
    %v2310 = vld [vmem:[#allocation8 + $0x500] sm:$0xff]
    %v2311 = vld [vmem:[#allocation8 + $0x508] sm:$0xff]
    %v2312 = vld [vmem:[#allocation8 + $0x510] sm:$0xff]
    %v2313 = vld [vmem:[#allocation8 + $0x518] sm:$0xff]
    %v2314 = vld [vmem:[#allocation8 + $0x520] sm:$0xff]
    %v2315 = vld [vmem:[#allocation8 + $0x528] sm:$0xff]
    %v2316 = vld [vmem:[#allocation8 + $0x530] sm:$0xff]
    %v2317 = vld [vmem:[#allocation8 + $0x538] sm:$0xff]
    %v2318 = vld [vmem:[#allocation8 + $0x540] sm:$0xff]
    %v2319 = vld [vmem:[#allocation8 + $0x548] sm:$0xff]
    %v2320 = vld [vmem:[#allocation8 + $0x550] sm:$0xff]
    %v2321 = vld [vmem:[#allocation8 + $0x558] sm:$0xff]
    %v2322 = vld [vmem:[#allocation8 + $0x560] sm:$0xff]
    %v2323 = vld [vmem:[#allocation8 + $0x568] sm:$0xff]
    %v2324 = vld [vmem:[#allocation8 + $0x570] sm:$0xff]
    %v2325 = vld [vmem:[#allocation8 + $0x578] sm:$0xff]
    %v2326 = vld [vmem:[#allocation8 + $0x580] sm:$0xff]
    %v2327 = vld [vmem:[#allocation8 + $0x588] sm:$0xff]
    %v2328 = vld [vmem:[#allocation8 + $0x590] sm:$0xff]
    %v2329 = vld [vmem:[#allocation8 + $0x598] sm:$0xff]
    %v2330 = vld [vmem:[#allocation8 + $0x5a0] sm:$0xff]
    %v2331 = vld [vmem:[#allocation8 + $0x5a8] sm:$0xff]
    %v2332 = vld [vmem:[#allocation8 + $0x5b0] sm:$0xff]
    %v2333 = vld [vmem:[#allocation8 + $0x5b8] sm:$0xff]
    %v2334 = vld [vmem:[#allocation8 + $0x5c0] sm:$0xff]
    %v2335 = vld [vmem:[#allocation8 + $0x5c8] sm:$0xff]
    %v2336 = vld [vmem:[#allocation8 + $0x5d0] sm:$0xff]
    %v2337 = vld [vmem:[#allocation8 + $0x5d8] sm:$0xff]
    %v2338 = vld [vmem:[#allocation8 + $0x5e0] sm:$0xff]
    %v2339 = vld [vmem:[#allocation8 + $0x5e8] sm:$0xff]
    %v2340 = vld [vmem:[#allocation8 + $0x5f0] sm:$0xff]
    %v2341 = vld [vmem:[#allocation8 + $0x5f8] sm:$0xff]
    %v2342 = vld [vmem:[#allocation8 + $0x600] sm:$0xff]
    %v2343 = vld [vmem:[#allocation8 + $0x608] sm:$0xff]
    %v2344 = vld [vmem:[#allocation8 + $0x610] sm:$0xff]
    %v2345 = vld [vmem:[#allocation8 + $0x618] sm:$0xff]
    %v2346 = vld [vmem:[#allocation8 + $0x620] sm:$0xff]
    %v2347 = vld [vmem:[#allocation8 + $0x628] sm:$0xff]
    %v2348 = vld [vmem:[#allocation8 + $0x630] sm:$0xff]
    %v2349 = vld [vmem:[#allocation8 + $0x638] sm:$0xff]
    %v2350 = vld [vmem:[#allocation8 + $0x640] sm:$0xff]
    %v2351 = vld [vmem:[#allocation8 + $0x648] sm:$0xff]
    %v2352 = vld [vmem:[#allocation8 + $0x650] sm:$0xff]
    %v2353 = vld [vmem:[#allocation8 + $0x658] sm:$0xff]
    %v2354 = vld [vmem:[#allocation8 + $0x660] sm:$0xff]
    %v2355 = vld [vmem:[#allocation8 + $0x668] sm:$0xff]
    %v2356 = vld [vmem:[#allocation8 + $0x670] sm:$0xff]
    %v2357 = vld [vmem:[#allocation8 + $0x678] sm:$0xff]
    %v2358 = vld [vmem:[#allocation8 + $0x680] sm:$0xff]
    %v2359 = vld [vmem:[#allocation8 + $0x688] sm:$0xff]
    %v2360 = vld [vmem:[#allocation8 + $0x690] sm:$0xff]
    %v2361 = vld [vmem:[#allocation8 + $0x698] sm:$0xff]
    %v2362 = vld [vmem:[#allocation8 + $0x6a0] sm:$0xff]
    %v2363 = vld [vmem:[#allocation8 + $0x6a8] sm:$0xff]
    %v2364 = vld [vmem:[#allocation8 + $0x6b0] sm:$0xff]
    %v2365 = vld [vmem:[#allocation8 + $0x6b8] sm:$0xff]
    %v2366 = vld [vmem:[#allocation8 + $0x6c0] sm:$0xff]
    %v2367 = vld [vmem:[#allocation8 + $0x6c8] sm:$0xff]
    %v2368 = vld [vmem:[#allocation8 + $0x6d0] sm:$0xff]
    %v2369 = vld [vmem:[#allocation8 + $0x6d8] sm:$0xff]
    %v2370 = vld [vmem:[#allocation8 + $0x6e0] sm:$0xff]
    %v2371 = vld [vmem:[#allocation8 + $0x6e8] sm:$0xff]
    %v2372 = vld [vmem:[#allocation8 + $0x6f0] sm:$0xff]
    %v2373 = vld [vmem:[#allocation8 + $0x6f8] sm:$0xff]
    %v2374 = vld [vmem:[#allocation8 + $0x700] sm:$0xff]
    %v2375 = vld [vmem:[#allocation8 + $0x708] sm:$0xff]
    %v2376 = vld [vmem:[#allocation8 + $0x710] sm:$0xff]
    %v2377 = vld [vmem:[#allocation8 + $0x718] sm:$0xff]
    %v2378 = vld [vmem:[#allocation8 + $0x720] sm:$0xff]
    %v2379 = vld [vmem:[#allocation8 + $0x728] sm:$0xff]
    %v2380 = vld [vmem:[#allocation8 + $0x730] sm:$0xff]
    %v2381 = vld [vmem:[#allocation8 + $0x738] sm:$0xff]
    %v2382 = vld [vmem:[#allocation8 + $0x740] sm:$0xff]
    %v2383 = vld [vmem:[#allocation8 + $0x748] sm:$0xff]
    %v2384 = vld [vmem:[#allocation8 + $0x750] sm:$0xff]
    %v2385 = vld [vmem:[#allocation8 + $0x758] sm:$0xff]
    %v2386 = vld [vmem:[#allocation8 + $0x760] sm:$0xff]
    %v2387 = vld [vmem:[#allocation8 + $0x768] sm:$0xff]
    %v2388 = vld [vmem:[#allocation8 + $0x770] sm:$0xff]
    %v2389 = vld [vmem:[#allocation8 + $0x778] sm:$0xff]
    %v2390 = vld [vmem:[#allocation8 + $0x780] sm:$0xff]
    %v2391 = vld [vmem:[#allocation8 + $0x788] sm:$0xff]
    %v2392 = vld [vmem:[#allocation8 + $0x790] sm:$0xff]
    %v2393 = vld [vmem:[#allocation8 + $0x798] sm:$0xff]
    %v2394 = vld [vmem:[#allocation8 + $0x7a0] sm:$0xff]
    %v2395 = vld [vmem:[#allocation8 + $0x7a8] sm:$0xff]
    %v2396 = vld [vmem:[#allocation8 + $0x7b0] sm:$0xff]
    %v2397 = vld [vmem:[#allocation8 + $0x7b8] sm:$0xff]
    %v2398 = vld [vmem:[#allocation8 + $0x7c0] sm:$0xff]
    %v2399 = vld [vmem:[#allocation8 + $0x7c8] sm:$0xff]
    %v2400 = vld [vmem:[#allocation8 + $0x7d0] sm:$0xff]
    %v2401 = vld [vmem:[#allocation8 + $0x7d8] sm:$0xff]
    %v2402 = vld [vmem:[#allocation8 + $0x7e0] sm:$0xff]
    %v2403 = vld [vmem:[#allocation8 + $0x7e8] sm:$0xff]
    %v2404 = vld [vmem:[#allocation8 + $0x7f0] sm:$0xff]
    %v2405 = vld [vmem:[#allocation8 + $0x7f8] sm:$0xff]
    %v2406 = vld [vmem:[#allocation10] sm:$0xf]
    %v2408 = vperm.slane %v2406, 0
    %v2409 = vperm.slane %v2406, 1
    %v2410 = vperm.slane %v2406, 2
    %v2411 = vperm.slane %v2406, 3
    %v2672 = vunpack.c.l.b16 %v2150
    %v2673 = vunpack.c.h.b16 %v2150
    %v2674 = vunpack.c.l.b16 %v2151
    %v2675 = vunpack.c.h.b16 %v2151
    %v2676 = vunpack.c.l.b16 %v2152
    %v2677 = vunpack.c.h.b16 %v2152
    %v2678 = vunpack.c.l.b16 %v2153
    %v2679 = vunpack.c.h.b16 %v2153
    %v2680 = vunpack.c.l.b16 %v2154
    %v2681 = vunpack.c.h.b16 %v2154
    %v2682 = vunpack.c.l.b16 %v2155
    %v2683 = vunpack.c.h.b16 %v2155
    %v2684 = vunpack.c.l.b16 %v2156
    %v2685 = vunpack.c.h.b16 %v2156
    %v2686 = vunpack.c.l.b16 %v2157
    %v2687 = vunpack.c.h.b16 %v2157
    %v2688 = vunpack.c.l.b16 %v2158
    %v2689 = vunpack.c.h.b16 %v2158
    %v2690 = vunpack.c.l.b16 %v2159
    %v2691 = vunpack.c.h.b16 %v2159
    %v2692 = vunpack.c.l.b16 %v2160
    %v2693 = vunpack.c.h.b16 %v2160
    %v2694 = vunpack.c.l.b16 %v2161
    %v2695 = vunpack.c.h.b16 %v2161
    %v2696 = vunpack.c.l.b16 %v2162
    %v2697 = vunpack.c.h.b16 %v2162
    %v2698 = vunpack.c.l.b16 %v2163
    %v2699 = vunpack.c.h.b16 %v2163
    %v2700 = vunpack.c.l.b16 %v2164
    %v2701 = vunpack.c.h.b16 %v2164
    %v2702 = vunpack.c.l.b16 %v2165
    %v2703 = vunpack.c.h.b16 %v2165
    %v2704 = vunpack.c.l.b16 %v2166
    %v2705 = vunpack.c.h.b16 %v2166
    %v2706 = vunpack.c.l.b16 %v2167
    %v2707 = vunpack.c.h.b16 %v2167
    %v2708 = vunpack.c.l.b16 %v2168
    %v2709 = vunpack.c.h.b16 %v2168
    %v2710 = vunpack.c.l.b16 %v2169
    %v2711 = vunpack.c.h.b16 %v2169
    %v2712 = vunpack.c.l.b16 %v2170
    %v2713 = vunpack.c.h.b16 %v2170
    %v2714 = vunpack.c.l.b16 %v2171
    %v2715 = vunpack.c.h.b16 %v2171
    %v2716 = vunpack.c.l.b16 %v2172
    %v2717 = vunpack.c.h.b16 %v2172
    %v2718 = vunpack.c.l.b16 %v2173
    %v2719 = vunpack.c.h.b16 %v2173
    %v2720 = vunpack.c.l.b16 %v2174
    %v2721 = vunpack.c.h.b16 %v2174
    %v2722 = vunpack.c.l.b16 %v2175
    %v2723 = vunpack.c.h.b16 %v2175
    %v2724 = vunpack.c.l.b16 %v2176
    %v2725 = vunpack.c.h.b16 %v2176
    %v2726 = vunpack.c.l.b16 %v2177
    %v2727 = vunpack.c.h.b16 %v2177
    %v2728 = vunpack.c.l.b16 %v2178
    %v2729 = vunpack.c.h.b16 %v2178
    %v2730 = vunpack.c.l.b16 %v2179
    %v2731 = vunpack.c.h.b16 %v2179
    %v2732 = vunpack.c.l.b16 %v2180
    %v2733 = vunpack.c.h.b16 %v2180
    %v2734 = vunpack.c.l.b16 %v2181
    %v2735 = vunpack.c.h.b16 %v2181
    %v2736 = vunpack.c.l.b16 %v2182
    %v2737 = vunpack.c.h.b16 %v2182
    %v2738 = vunpack.c.l.b16 %v2183
    %v2739 = vunpack.c.h.b16 %v2183
    %v2740 = vunpack.c.l.b16 %v2184
    %v2741 = vunpack.c.h.b16 %v2184
    %v2742 = vunpack.c.l.b16 %v2185
    %v2743 = vunpack.c.h.b16 %v2185
    %v2744 = vunpack.c.l.b16 %v2186
    %v2745 = vunpack.c.h.b16 %v2186
    %v2746 = vunpack.c.l.b16 %v2187
    %v2747 = vunpack.c.h.b16 %v2187
    %v2748 = vunpack.c.l.b16 %v2188
    %v2749 = vunpack.c.h.b16 %v2188
    %v2750 = vunpack.c.l.b16 %v2189
    %v2751 = vunpack.c.h.b16 %v2189
    %v2752 = vunpack.c.l.b16 %v2190
    %v2753 = vunpack.c.h.b16 %v2190
    %v2754 = vunpack.c.l.b16 %v2191
    %v2755 = vunpack.c.h.b16 %v2191
    %v2756 = vunpack.c.l.b16 %v2192
    %v2757 = vunpack.c.h.b16 %v2192
    %v2758 = vunpack.c.l.b16 %v2193
    %v2759 = vunpack.c.h.b16 %v2193
    %v2760 = vunpack.c.l.b16 %v2194
    %v2761 = vunpack.c.h.b16 %v2194
    %v2762 = vunpack.c.l.b16 %v2195
    %v2763 = vunpack.c.h.b16 %v2195
    %v2764 = vunpack.c.l.b16 %v2196
    %v2765 = vunpack.c.h.b16 %v2196
    %v2766 = vunpack.c.l.b16 %v2197
    %v2767 = vunpack.c.h.b16 %v2197
    %v2768 = vunpack.c.l.b16 %v2198
    %v2769 = vunpack.c.h.b16 %v2198
    %v2770 = vunpack.c.l.b16 %v2199
    %v2771 = vunpack.c.h.b16 %v2199
    %v2772 = vunpack.c.l.b16 %v2200
    %v2773 = vunpack.c.h.b16 %v2200
    %v2774 = vunpack.c.l.b16 %v2201
    %v2775 = vunpack.c.h.b16 %v2201
    %v2776 = vunpack.c.l.b16 %v2202
    %v2777 = vunpack.c.h.b16 %v2202
    %v2778 = vunpack.c.l.b16 %v2203
    %v2779 = vunpack.c.h.b16 %v2203
    %v2780 = vunpack.c.l.b16 %v2204
    %v2781 = vunpack.c.h.b16 %v2204
    %v2782 = vunpack.c.l.b16 %v2205
    %v2783 = vunpack.c.h.b16 %v2205
    %v2784 = vunpack.c.l.b16 %v2206
    %v2785 = vunpack.c.h.b16 %v2206
    %v2786 = vunpack.c.l.b16 %v2207
    %v2787 = vunpack.c.h.b16 %v2207
    %v2788 = vunpack.c.l.b16 %v2208
    %v2789 = vunpack.c.h.b16 %v2208
    %v2790 = vunpack.c.l.b16 %v2209
    %v2791 = vunpack.c.h.b16 %v2209
    %v2792 = vunpack.c.l.b16 %v2210
    %v2793 = vunpack.c.h.b16 %v2210
    %v2794 = vunpack.c.l.b16 %v2211
    %v2795 = vunpack.c.h.b16 %v2211
    %v2796 = vunpack.c.l.b16 %v2212
    %v2797 = vunpack.c.h.b16 %v2212
    %v2798 = vunpack.c.l.b16 %v2213
    %v2799 = vunpack.c.h.b16 %v2213
    %v2800 = vunpack.c.l.b16 %v2214
    %v2801 = vunpack.c.h.b16 %v2214
    %v2802 = vunpack.c.l.b16 %v2215
    %v2803 = vunpack.c.h.b16 %v2215
    %v2804 = vunpack.c.l.b16 %v2216
    %v2805 = vunpack.c.h.b16 %v2216
    %v2806 = vunpack.c.l.b16 %v2217
    %v2807 = vunpack.c.h.b16 %v2217
    %v2808 = vunpack.c.l.b16 %v2218
    %v2809 = vunpack.c.h.b16 %v2218
    %v2810 = vunpack.c.l.b16 %v2219
    %v2811 = vunpack.c.h.b16 %v2219
    %v2812 = vunpack.c.l.b16 %v2220
    %v2813 = vunpack.c.h.b16 %v2220
    %v2814 = vunpack.c.l.b16 %v2221
    %v2815 = vunpack.c.h.b16 %v2221
    %v2816 = vunpack.c.l.b16 %v2222
    %v2817 = vunpack.c.h.b16 %v2222
    %v2818 = vunpack.c.l.b16 %v2223
    %v2819 = vunpack.c.h.b16 %v2223
    %v2820 = vunpack.c.l.b16 %v2224
    %v2821 = vunpack.c.h.b16 %v2224
    %v2822 = vunpack.c.l.b16 %v2225
    %v2823 = vunpack.c.h.b16 %v2225
    %v2824 = vunpack.c.l.b16 %v2226
    %v2825 = vunpack.c.h.b16 %v2226
    %v2826 = vunpack.c.l.b16 %v2227
    %v2827 = vunpack.c.h.b16 %v2227
    %v2828 = vunpack.c.l.b16 %v2228
    %v2829 = vunpack.c.h.b16 %v2228
    %v2830 = vunpack.c.l.b16 %v2229
    %v2831 = vunpack.c.h.b16 %v2229
    %v2832 = vunpack.c.l.b16 %v2230
    %v2833 = vunpack.c.h.b16 %v2230
    %v2834 = vunpack.c.l.b16 %v2231
    %v2835 = vunpack.c.h.b16 %v2231
    %v2836 = vunpack.c.l.b16 %v2232
    %v2837 = vunpack.c.h.b16 %v2232
    %v2838 = vunpack.c.l.b16 %v2233
    %v2839 = vunpack.c.h.b16 %v2233
    %v2840 = vunpack.c.l.b16 %v2234
    %v2841 = vunpack.c.h.b16 %v2234
    %v2842 = vunpack.c.l.b16 %v2235
    %v2843 = vunpack.c.h.b16 %v2235
    %v2844 = vunpack.c.l.b16 %v2236
    %v2845 = vunpack.c.h.b16 %v2236
    %v2846 = vunpack.c.l.b16 %v2237
    %v2847 = vunpack.c.h.b16 %v2237
    %v2848 = vunpack.c.l.b16 %v2238
    %v2849 = vunpack.c.h.b16 %v2238
    %v2850 = vunpack.c.l.b16 %v2239
    %v2851 = vunpack.c.h.b16 %v2239
    %v2852 = vunpack.c.l.b16 %v2240
    %v2853 = vunpack.c.h.b16 %v2240
    %v2854 = vunpack.c.l.b16 %v2241
    %v2855 = vunpack.c.h.b16 %v2241
    %v2856 = vunpack.c.l.b16 %v2242
    %v2857 = vunpack.c.h.b16 %v2242
    %v2858 = vunpack.c.l.b16 %v2243
    %v2859 = vunpack.c.h.b16 %v2243
    %v2860 = vunpack.c.l.b16 %v2244
    %v2861 = vunpack.c.h.b16 %v2244
    %v2862 = vunpack.c.l.b16 %v2245
    %v2863 = vunpack.c.h.b16 %v2245
    %v2864 = vunpack.c.l.b16 %v2246
    %v2865 = vunpack.c.h.b16 %v2246
    %v2866 = vunpack.c.l.b16 %v2247
    %v2867 = vunpack.c.h.b16 %v2247
    %v2868 = vunpack.c.l.b16 %v2248
    %v2869 = vunpack.c.h.b16 %v2248
    %v2870 = vunpack.c.l.b16 %v2249
    %v2871 = vunpack.c.h.b16 %v2249
    %v2872 = vunpack.c.l.b16 %v2250
    %v2873 = vunpack.c.h.b16 %v2250
    %v2874 = vunpack.c.l.b16 %v2251
    %v2875 = vunpack.c.h.b16 %v2251
    %v2876 = vunpack.c.l.b16 %v2252
    %v2877 = vunpack.c.h.b16 %v2252
    %v2878 = vunpack.c.l.b16 %v2253
    %v2879 = vunpack.c.h.b16 %v2253
    %v2880 = vunpack.c.l.b16 %v2254
    %v2881 = vunpack.c.h.b16 %v2254
    %v2882 = vunpack.c.l.b16 %v2255
    %v2883 = vunpack.c.h.b16 %v2255
    %v2884 = vunpack.c.l.b16 %v2256
    %v2885 = vunpack.c.h.b16 %v2256
    %v2886 = vunpack.c.l.b16 %v2257
    %v2887 = vunpack.c.h.b16 %v2257
    %v2888 = vunpack.c.l.b16 %v2258
    %v2889 = vunpack.c.h.b16 %v2258
    %v2890 = vunpack.c.l.b16 %v2259
    %v2891 = vunpack.c.h.b16 %v2259
    %v2892 = vunpack.c.l.b16 %v2260
    %v2893 = vunpack.c.h.b16 %v2260
    %v2894 = vunpack.c.l.b16 %v2261
    %v2895 = vunpack.c.h.b16 %v2261
    %v2896 = vunpack.c.l.b16 %v2262
    %v2897 = vunpack.c.h.b16 %v2262
    %v2898 = vunpack.c.l.b16 %v2263
    %v2899 = vunpack.c.h.b16 %v2263
    %v2900 = vunpack.c.l.b16 %v2264
    %v2901 = vunpack.c.h.b16 %v2264
    %v2902 = vunpack.c.l.b16 %v2265
    %v2903 = vunpack.c.h.b16 %v2265
    %v2904 = vunpack.c.l.b16 %v2266
    %v2905 = vunpack.c.h.b16 %v2266
    %v2906 = vunpack.c.l.b16 %v2267
    %v2907 = vunpack.c.h.b16 %v2267
    %v2908 = vunpack.c.l.b16 %v2268
    %v2909 = vunpack.c.h.b16 %v2268
    %v2910 = vunpack.c.l.b16 %v2269
    %v2911 = vunpack.c.h.b16 %v2269
    %v2912 = vunpack.c.l.b16 %v2270
    %v2913 = vunpack.c.h.b16 %v2270
    %v2914 = vunpack.c.l.b16 %v2271
    %v2915 = vunpack.c.h.b16 %v2271
    %v2916 = vunpack.c.l.b16 %v2272
    %v2917 = vunpack.c.h.b16 %v2272
    %v2918 = vunpack.c.l.b16 %v2273
    %v2919 = vunpack.c.h.b16 %v2273
    %v2920 = vunpack.c.l.b16 %v2274
    %v2921 = vunpack.c.h.b16 %v2274
    %v2922 = vunpack.c.l.b16 %v2275
    %v2923 = vunpack.c.h.b16 %v2275
    %v2924 = vunpack.c.l.b16 %v2276
    %v2925 = vunpack.c.h.b16 %v2276
    %v2926 = vunpack.c.l.b16 %v2277
    %v2927 = vunpack.c.h.b16 %v2277
    %v2928 = vunpack.c.l.b16 %v2278
    %v2929 = vunpack.c.h.b16 %v2278
    %v2930 = vunpack.c.l.b16 %v2279
    %v2931 = vunpack.c.h.b16 %v2279
    %v2932 = vunpack.c.l.b16 %v2280
    %v2933 = vunpack.c.h.b16 %v2280
    %v2934 = vunpack.c.l.b16 %v2281
    %v2935 = vunpack.c.h.b16 %v2281
    %v2936 = vunpack.c.l.b16 %v2282
    %v2937 = vunpack.c.h.b16 %v2282
    %v2938 = vunpack.c.l.b16 %v2283
    %v2939 = vunpack.c.h.b16 %v2283
    %v2940 = vunpack.c.l.b16 %v2284
    %v2941 = vunpack.c.h.b16 %v2284
    %v2942 = vunpack.c.l.b16 %v2285
    %v2943 = vunpack.c.h.b16 %v2285
    %v2944 = vunpack.c.l.b16 %v2286
    %v2945 = vunpack.c.h.b16 %v2286
    %v2946 = vunpack.c.l.b16 %v2287
    %v2947 = vunpack.c.h.b16 %v2287
    %v2948 = vunpack.c.l.b16 %v2288
    %v2949 = vunpack.c.h.b16 %v2288
    %v2950 = vunpack.c.l.b16 %v2289
    %v2951 = vunpack.c.h.b16 %v2289
    %v2952 = vunpack.c.l.b16 %v2290
    %v2953 = vunpack.c.h.b16 %v2290
    %v2954 = vunpack.c.l.b16 %v2291
    %v2955 = vunpack.c.h.b16 %v2291
    %v2956 = vunpack.c.l.b16 %v2292
    %v2957 = vunpack.c.h.b16 %v2292
    %v2958 = vunpack.c.l.b16 %v2293
    %v2959 = vunpack.c.h.b16 %v2293
    %v2960 = vunpack.c.l.b16 %v2294
    %v2961 = vunpack.c.h.b16 %v2294
    %v2962 = vunpack.c.l.b16 %v2295
    %v2963 = vunpack.c.h.b16 %v2295
    %v2964 = vunpack.c.l.b16 %v2296
    %v2965 = vunpack.c.h.b16 %v2296
    %v2966 = vunpack.c.l.b16 %v2297
    %v2967 = vunpack.c.h.b16 %v2297
    %v2968 = vunpack.c.l.b16 %v2298
    %v2969 = vunpack.c.h.b16 %v2298
    %v2970 = vunpack.c.l.b16 %v2299
    %v2971 = vunpack.c.h.b16 %v2299
    %v2972 = vunpack.c.l.b16 %v2300
    %v2973 = vunpack.c.h.b16 %v2300
    %v2974 = vunpack.c.l.b16 %v2301
    %v2975 = vunpack.c.h.b16 %v2301
    %v2976 = vunpack.c.l.b16 %v2302
    %v2977 = vunpack.c.h.b16 %v2302
    %v2978 = vunpack.c.l.b16 %v2303
    %v2979 = vunpack.c.h.b16 %v2303
    %v2980 = vunpack.c.l.b16 %v2304
    %v2981 = vunpack.c.h.b16 %v2304
    %v2982 = vunpack.c.l.b16 %v2305
    %v2983 = vunpack.c.h.b16 %v2305
    %v2984 = vunpack.c.l.b16 %v2306
    %v2985 = vunpack.c.h.b16 %v2306
    %v2986 = vunpack.c.l.b16 %v2307
    %v2987 = vunpack.c.h.b16 %v2307
    %v2988 = vunpack.c.l.b16 %v2308
    %v2989 = vunpack.c.h.b16 %v2308
    %v2990 = vunpack.c.l.b16 %v2309
    %v2991 = vunpack.c.h.b16 %v2309
    %v2992 = vunpack.c.l.b16 %v2310
    %v2993 = vunpack.c.h.b16 %v2310
    %v2994 = vunpack.c.l.b16 %v2311
    %v2995 = vunpack.c.h.b16 %v2311
    %v2996 = vunpack.c.l.b16 %v2312
    %v2997 = vunpack.c.h.b16 %v2312
    %v2998 = vunpack.c.l.b16 %v2313
    %v2999 = vunpack.c.h.b16 %v2313
    %v3000 = vunpack.c.l.b16 %v2314
    %v3001 = vunpack.c.h.b16 %v2314
    %v3002 = vunpack.c.l.b16 %v2315
    %v3003 = vunpack.c.h.b16 %v2315
    %v3004 = vunpack.c.l.b16 %v2316
    %v3005 = vunpack.c.h.b16 %v2316
    %v3006 = vunpack.c.l.b16 %v2317
    %v3007 = vunpack.c.h.b16 %v2317
    %v3008 = vunpack.c.l.b16 %v2318
    %v3009 = vunpack.c.h.b16 %v2318
    %v3010 = vunpack.c.l.b16 %v2319
    %v3011 = vunpack.c.h.b16 %v2319
    %v3012 = vunpack.c.l.b16 %v2320
    %v3013 = vunpack.c.h.b16 %v2320
    %v3014 = vunpack.c.l.b16 %v2321
    %v3015 = vunpack.c.h.b16 %v2321
    %v3016 = vunpack.c.l.b16 %v2322
    %v3017 = vunpack.c.h.b16 %v2322
    %v3018 = vunpack.c.l.b16 %v2323
    %v3019 = vunpack.c.h.b16 %v2323
    %v3020 = vunpack.c.l.b16 %v2324
    %v3021 = vunpack.c.h.b16 %v2324
    %v3022 = vunpack.c.l.b16 %v2325
    %v3023 = vunpack.c.h.b16 %v2325
    %v3024 = vunpack.c.l.b16 %v2326
    %v3025 = vunpack.c.h.b16 %v2326
    %v3026 = vunpack.c.l.b16 %v2327
    %v3027 = vunpack.c.h.b16 %v2327
    %v3028 = vunpack.c.l.b16 %v2328
    %v3029 = vunpack.c.h.b16 %v2328
    %v3030 = vunpack.c.l.b16 %v2329
    %v3031 = vunpack.c.h.b16 %v2329
    %v3032 = vunpack.c.l.b16 %v2330
    %v3033 = vunpack.c.h.b16 %v2330
    %v3034 = vunpack.c.l.b16 %v2331
    %v3035 = vunpack.c.h.b16 %v2331
    %v3036 = vunpack.c.l.b16 %v2332
    %v3037 = vunpack.c.h.b16 %v2332
    %v3038 = vunpack.c.l.b16 %v2333
    %v3039 = vunpack.c.h.b16 %v2333
    %v3040 = vunpack.c.l.b16 %v2334
    %v3041 = vunpack.c.h.b16 %v2334
    %v3042 = vunpack.c.l.b16 %v2335
    %v3043 = vunpack.c.h.b16 %v2335
    %v3044 = vunpack.c.l.b16 %v2336
    %v3045 = vunpack.c.h.b16 %v2336
    %v3046 = vunpack.c.l.b16 %v2337
    %v3047 = vunpack.c.h.b16 %v2337
    %v3048 = vunpack.c.l.b16 %v2338
    %v3049 = vunpack.c.h.b16 %v2338
    %v3050 = vunpack.c.l.b16 %v2339
    %v3051 = vunpack.c.h.b16 %v2339
    %v3052 = vunpack.c.l.b16 %v2340
    %v3053 = vunpack.c.h.b16 %v2340
    %v3054 = vunpack.c.l.b16 %v2341
    %v3055 = vunpack.c.h.b16 %v2341
    %v3056 = vunpack.c.l.b16 %v2342
    %v3057 = vunpack.c.h.b16 %v2342
    %v3058 = vunpack.c.l.b16 %v2343
    %v3059 = vunpack.c.h.b16 %v2343
    %v3060 = vunpack.c.l.b16 %v2344
    %v3061 = vunpack.c.h.b16 %v2344
    %v3062 = vunpack.c.l.b16 %v2345
    %v3063 = vunpack.c.h.b16 %v2345
    %v3064 = vunpack.c.l.b16 %v2346
    %v3065 = vunpack.c.h.b16 %v2346
    %v3066 = vunpack.c.l.b16 %v2347
    %v3067 = vunpack.c.h.b16 %v2347
    %v3068 = vunpack.c.l.b16 %v2348
    %v3069 = vunpack.c.h.b16 %v2348
    %v3070 = vunpack.c.l.b16 %v2349
    %v3071 = vunpack.c.h.b16 %v2349
    %v3072 = vunpack.c.l.b16 %v2350
    %v3073 = vunpack.c.h.b16 %v2350
    %v3074 = vunpack.c.l.b16 %v2351
    %v3075 = vunpack.c.h.b16 %v2351
    %v3076 = vunpack.c.l.b16 %v2352
    %v3077 = vunpack.c.h.b16 %v2352
    %v3078 = vunpack.c.l.b16 %v2353
    %v3079 = vunpack.c.h.b16 %v2353
    %v3080 = vunpack.c.l.b16 %v2354
    %v3081 = vunpack.c.h.b16 %v2354
    %v3082 = vunpack.c.l.b16 %v2355
    %v3083 = vunpack.c.h.b16 %v2355
    %v3084 = vunpack.c.l.b16 %v2356
    %v3085 = vunpack.c.h.b16 %v2356
    %v3086 = vunpack.c.l.b16 %v2357
    %v3087 = vunpack.c.h.b16 %v2357
    %v3088 = vunpack.c.l.b16 %v2358
    %v3089 = vunpack.c.h.b16 %v2358
    %v3090 = vunpack.c.l.b16 %v2359
    %v3091 = vunpack.c.h.b16 %v2359
    %v3092 = vunpack.c.l.b16 %v2360
    %v3093 = vunpack.c.h.b16 %v2360
    %v3094 = vunpack.c.l.b16 %v2361
    %v3095 = vunpack.c.h.b16 %v2361
    %v3096 = vunpack.c.l.b16 %v2362
    %v3097 = vunpack.c.h.b16 %v2362
    %v3098 = vunpack.c.l.b16 %v2363
    %v3099 = vunpack.c.h.b16 %v2363
    %v3100 = vunpack.c.l.b16 %v2364
    %v3101 = vunpack.c.h.b16 %v2364
    %v3102 = vunpack.c.l.b16 %v2365
    %v3103 = vunpack.c.h.b16 %v2365
    %v3104 = vunpack.c.l.b16 %v2366
    %v3105 = vunpack.c.h.b16 %v2366
    %v3106 = vunpack.c.l.b16 %v2367
    %v3107 = vunpack.c.h.b16 %v2367
    %v3108 = vunpack.c.l.b16 %v2368
    %v3109 = vunpack.c.h.b16 %v2368
    %v3110 = vunpack.c.l.b16 %v2369
    %v3111 = vunpack.c.h.b16 %v2369
    %v3112 = vunpack.c.l.b16 %v2370
    %v3113 = vunpack.c.h.b16 %v2370
    %v3114 = vunpack.c.l.b16 %v2371
    %v3115 = vunpack.c.h.b16 %v2371
    %v3116 = vunpack.c.l.b16 %v2372
    %v3117 = vunpack.c.h.b16 %v2372
    %v3118 = vunpack.c.l.b16 %v2373
    %v3119 = vunpack.c.h.b16 %v2373
    %v3120 = vunpack.c.l.b16 %v2374
    %v3121 = vunpack.c.h.b16 %v2374
    %v3122 = vunpack.c.l.b16 %v2375
    %v3123 = vunpack.c.h.b16 %v2375
    %v3124 = vunpack.c.l.b16 %v2376
    %v3125 = vunpack.c.h.b16 %v2376
    %v3126 = vunpack.c.l.b16 %v2377
    %v3127 = vunpack.c.h.b16 %v2377
    %v3128 = vunpack.c.l.b16 %v2378
    %v3129 = vunpack.c.h.b16 %v2378
    %v3130 = vunpack.c.l.b16 %v2379
    %v3131 = vunpack.c.h.b16 %v2379
    %v3132 = vunpack.c.l.b16 %v2380
    %v3133 = vunpack.c.h.b16 %v2380
    %v3134 = vunpack.c.l.b16 %v2381
    %v3135 = vunpack.c.h.b16 %v2381
    %v3136 = vunpack.c.l.b16 %v2382
    %v3137 = vunpack.c.h.b16 %v2382
    %v3138 = vunpack.c.l.b16 %v2383
    %v3139 = vunpack.c.h.b16 %v2383
    %v3140 = vunpack.c.l.b16 %v2384
    %v3141 = vunpack.c.h.b16 %v2384
    %v3142 = vunpack.c.l.b16 %v2385
    %v3143 = vunpack.c.h.b16 %v2385
    %v3144 = vunpack.c.l.b16 %v2386
    %v3145 = vunpack.c.h.b16 %v2386
    %v3146 = vunpack.c.l.b16 %v2387
    %v3147 = vunpack.c.h.b16 %v2387
    %v3148 = vunpack.c.l.b16 %v2388
    %v3149 = vunpack.c.h.b16 %v2388
    %v3150 = vunpack.c.l.b16 %v2389
    %v3151 = vunpack.c.h.b16 %v2389
    %v3152 = vunpack.c.l.b16 %v2390
    %v3153 = vunpack.c.h.b16 %v2390
    %v3154 = vunpack.c.l.b16 %v2391
    %v3155 = vunpack.c.h.b16 %v2391
    %v3156 = vunpack.c.l.b16 %v2392
    %v3157 = vunpack.c.h.b16 %v2392
    %v3158 = vunpack.c.l.b16 %v2393
    %v3159 = vunpack.c.h.b16 %v2393
    %v3160 = vunpack.c.l.b16 %v2394
    %v3161 = vunpack.c.h.b16 %v2394
    %v3162 = vunpack.c.l.b16 %v2395
    %v3163 = vunpack.c.h.b16 %v2395
    %v3164 = vunpack.c.l.b16 %v2396
    %v3165 = vunpack.c.h.b16 %v2396
    %v3166 = vunpack.c.l.b16 %v2397
    %v3167 = vunpack.c.h.b16 %v2397
    %v3168 = vunpack.c.l.b16 %v2398
    %v3169 = vunpack.c.h.b16 %v2398
    %v3170 = vunpack.c.l.b16 %v2399
    %v3171 = vunpack.c.h.b16 %v2399
    %v3172 = vunpack.c.l.b16 %v2400
    %v3173 = vunpack.c.h.b16 %v2400
    %v3174 = vunpack.c.l.b16 %v2401
    %v3175 = vunpack.c.h.b16 %v2401
    %v3176 = vunpack.c.l.b16 %v2402
    %v3177 = vunpack.c.h.b16 %v2402
    %v3178 = vunpack.c.l.b16 %v2403
    %v3179 = vunpack.c.h.b16 %v2403
    %v3180 = vunpack.c.l.b16 %v2404
    %v3181 = vunpack.c.h.b16 %v2404
    %v3182 = vunpack.c.l.b16 %v2405
    %v3183 = vunpack.c.h.b16 %v2405
    %v3184 = vpack.c.b16 %v2676, %v2672
    %v3185 = vpack.c.b16 %v2677, %v2673
    %v3186 = vpack.c.b16 %v2678, %v2674
    %v3187 = vpack.c.b16 %v2679, %v2675
    %v3188 = vpack.c.b16 %v2684, %v2680
    %v3189 = vpack.c.b16 %v2685, %v2681
    %v3190 = vpack.c.b16 %v2686, %v2682
    %v3191 = vpack.c.b16 %v2687, %v2683
    %v3192 = vpack.c.b16 %v2692, %v2688
    %v3193 = vpack.c.b16 %v2693, %v2689
    %v3194 = vpack.c.b16 %v2694, %v2690
    %v3195 = vpack.c.b16 %v2695, %v2691
    %v3196 = vpack.c.b16 %v2700, %v2696
    %v3197 = vpack.c.b16 %v2701, %v2697
    %v3198 = vpack.c.b16 %v2702, %v2698
    %v3199 = vpack.c.b16 %v2703, %v2699
    %v3200 = vpack.c.b16 %v2708, %v2704
    %v3201 = vpack.c.b16 %v2709, %v2705
    %v3202 = vpack.c.b16 %v2710, %v2706
    %v3203 = vpack.c.b16 %v2711, %v2707
    %v3204 = vpack.c.b16 %v2716, %v2712
    %v3205 = vpack.c.b16 %v2717, %v2713
    %v3206 = vpack.c.b16 %v2718, %v2714
    %v3207 = vpack.c.b16 %v2719, %v2715
    %v3208 = vpack.c.b16 %v2724, %v2720
    %v3209 = vpack.c.b16 %v2725, %v2721
    %v3210 = vpack.c.b16 %v2726, %v2722
    %v3211 = vpack.c.b16 %v2727, %v2723
    %v3212 = vpack.c.b16 %v2732, %v2728
    %v3213 = vpack.c.b16 %v2733, %v2729
    %v3214 = vpack.c.b16 %v2734, %v2730
    %v3215 = vpack.c.b16 %v2735, %v2731
    %v3216 = vpack.c.b16 %v2740, %v2736
    %v3217 = vpack.c.b16 %v2741, %v2737
    %v3218 = vpack.c.b16 %v2742, %v2738
    %v3219 = vpack.c.b16 %v2743, %v2739
    %v3220 = vpack.c.b16 %v2748, %v2744
    %v3221 = vpack.c.b16 %v2749, %v2745
    %v3222 = vpack.c.b16 %v2750, %v2746
    %v3223 = vpack.c.b16 %v2751, %v2747
    %v3224 = vpack.c.b16 %v2756, %v2752
    %v3225 = vpack.c.b16 %v2757, %v2753
    %v3226 = vpack.c.b16 %v2758, %v2754
    %v3227 = vpack.c.b16 %v2759, %v2755
    %v3228 = vpack.c.b16 %v2764, %v2760
    %v3229 = vpack.c.b16 %v2765, %v2761
    %v3230 = vpack.c.b16 %v2766, %v2762
    %v3231 = vpack.c.b16 %v2767, %v2763
    %v3232 = vpack.c.b16 %v2772, %v2768
    %v3233 = vpack.c.b16 %v2773, %v2769
    %v3234 = vpack.c.b16 %v2774, %v2770
    %v3235 = vpack.c.b16 %v2775, %v2771
    %v3236 = vpack.c.b16 %v2780, %v2776
    %v3237 = vpack.c.b16 %v2781, %v2777
    %v3238 = vpack.c.b16 %v2782, %v2778
    %v3239 = vpack.c.b16 %v2783, %v2779
    %v3240 = vpack.c.b16 %v2788, %v2784
    %v3241 = vpack.c.b16 %v2789, %v2785
    %v3242 = vpack.c.b16 %v2790, %v2786
    %v3243 = vpack.c.b16 %v2791, %v2787
    %v3244 = vpack.c.b16 %v2796, %v2792
    %v3245 = vpack.c.b16 %v2797, %v2793
    %v3246 = vpack.c.b16 %v2798, %v2794
    %v3247 = vpack.c.b16 %v2799, %v2795
    %v3248 = vpack.c.b16 %v2804, %v2800
    %v3249 = vpack.c.b16 %v2805, %v2801
    %v3250 = vpack.c.b16 %v2806, %v2802
    %v3251 = vpack.c.b16 %v2807, %v2803
    %v3252 = vpack.c.b16 %v2812, %v2808
    %v3253 = vpack.c.b16 %v2813, %v2809
    %v3254 = vpack.c.b16 %v2814, %v2810
    %v3255 = vpack.c.b16 %v2815, %v2811
    %v3256 = vpack.c.b16 %v2820, %v2816
    %v3257 = vpack.c.b16 %v2821, %v2817
    %v3258 = vpack.c.b16 %v2822, %v2818
    %v3259 = vpack.c.b16 %v2823, %v2819
    %v3260 = vpack.c.b16 %v2828, %v2824
    %v3261 = vpack.c.b16 %v2829, %v2825
    %v3262 = vpack.c.b16 %v2830, %v2826
    %v3263 = vpack.c.b16 %v2831, %v2827
    %v3264 = vpack.c.b16 %v2836, %v2832
    %v3265 = vpack.c.b16 %v2837, %v2833
    %v3266 = vpack.c.b16 %v2838, %v2834
    %v3267 = vpack.c.b16 %v2839, %v2835
    %v3268 = vpack.c.b16 %v2844, %v2840
    %v3269 = vpack.c.b16 %v2845, %v2841
    %v3270 = vpack.c.b16 %v2846, %v2842
    %v3271 = vpack.c.b16 %v2847, %v2843
    %v3272 = vpack.c.b16 %v2852, %v2848
    %v3273 = vpack.c.b16 %v2853, %v2849
    %v3274 = vpack.c.b16 %v2854, %v2850
    %v3275 = vpack.c.b16 %v2855, %v2851
    %v3276 = vpack.c.b16 %v2860, %v2856
    %v3277 = vpack.c.b16 %v2861, %v2857
    %v3278 = vpack.c.b16 %v2862, %v2858
    %v3279 = vpack.c.b16 %v2863, %v2859
    %v3280 = vpack.c.b16 %v2868, %v2864
    %v3281 = vpack.c.b16 %v2869, %v2865
    %v3282 = vpack.c.b16 %v2870, %v2866
    %v3283 = vpack.c.b16 %v2871, %v2867
    %v3284 = vpack.c.b16 %v2876, %v2872
    %v3285 = vpack.c.b16 %v2877, %v2873
    %v3286 = vpack.c.b16 %v2878, %v2874
    %v3287 = vpack.c.b16 %v2879, %v2875
    %v3288 = vpack.c.b16 %v2884, %v2880
    %v3289 = vpack.c.b16 %v2885, %v2881
    %v3290 = vpack.c.b16 %v2886, %v2882
    %v3291 = vpack.c.b16 %v2887, %v2883
    %v3292 = vpack.c.b16 %v2892, %v2888
    %v3293 = vpack.c.b16 %v2893, %v2889
    %v3294 = vpack.c.b16 %v2894, %v2890
    %v3295 = vpack.c.b16 %v2895, %v2891
    %v3296 = vpack.c.b16 %v2900, %v2896
    %v3297 = vpack.c.b16 %v2901, %v2897
    %v3298 = vpack.c.b16 %v2902, %v2898
    %v3299 = vpack.c.b16 %v2903, %v2899
    %v3300 = vpack.c.b16 %v2908, %v2904
    %v3301 = vpack.c.b16 %v2909, %v2905
    %v3302 = vpack.c.b16 %v2910, %v2906
    %v3303 = vpack.c.b16 %v2911, %v2907
    %v3304 = vpack.c.b16 %v2916, %v2912
    %v3305 = vpack.c.b16 %v2917, %v2913
    %v3306 = vpack.c.b16 %v2918, %v2914
    %v3307 = vpack.c.b16 %v2919, %v2915
    %v3308 = vpack.c.b16 %v2924, %v2920
    %v3309 = vpack.c.b16 %v2925, %v2921
    %v3310 = vpack.c.b16 %v2926, %v2922
    %v3311 = vpack.c.b16 %v2927, %v2923
    %v3312 = vpack.c.b16 %v2932, %v2928
    %v3313 = vpack.c.b16 %v2933, %v2929
    %v3314 = vpack.c.b16 %v2934, %v2930
    %v3315 = vpack.c.b16 %v2935, %v2931
    %v3316 = vpack.c.b16 %v2940, %v2936
    %v3317 = vpack.c.b16 %v2941, %v2937
    %v3318 = vpack.c.b16 %v2942, %v2938
    %v3319 = vpack.c.b16 %v2943, %v2939
    %v3320 = vpack.c.b16 %v2948, %v2944
    %v3321 = vpack.c.b16 %v2949, %v2945
    %v3322 = vpack.c.b16 %v2950, %v2946
    %v3323 = vpack.c.b16 %v2951, %v2947
    %v3324 = vpack.c.b16 %v2956, %v2952
    %v3325 = vpack.c.b16 %v2957, %v2953
    %v3326 = vpack.c.b16 %v2958, %v2954
    %v3327 = vpack.c.b16 %v2959, %v2955
    %v3328 = vpack.c.b16 %v2964, %v2960
    %v3329 = vpack.c.b16 %v2965, %v2961
    %v3330 = vpack.c.b16 %v2966, %v2962
    %v3331 = vpack.c.b16 %v2967, %v2963
    %v3332 = vpack.c.b16 %v2972, %v2968
    %v3333 = vpack.c.b16 %v2973, %v2969
    %v3334 = vpack.c.b16 %v2974, %v2970
    %v3335 = vpack.c.b16 %v2975, %v2971
    %v3336 = vpack.c.b16 %v2980, %v2976
    %v3337 = vpack.c.b16 %v2981, %v2977
    %v3338 = vpack.c.b16 %v2982, %v2978
    %v3339 = vpack.c.b16 %v2983, %v2979
    %v3340 = vpack.c.b16 %v2988, %v2984
    %v3341 = vpack.c.b16 %v2989, %v2985
    %v3342 = vpack.c.b16 %v2990, %v2986
    %v3343 = vpack.c.b16 %v2991, %v2987
    %v3344 = vpack.c.b16 %v2996, %v2992
    %v3345 = vpack.c.b16 %v2997, %v2993
    %v3346 = vpack.c.b16 %v2998, %v2994
    %v3347 = vpack.c.b16 %v2999, %v2995
    %v3348 = vpack.c.b16 %v3004, %v3000
    %v3349 = vpack.c.b16 %v3005, %v3001
    %v3350 = vpack.c.b16 %v3006, %v3002
    %v3351 = vpack.c.b16 %v3007, %v3003
    %v3352 = vpack.c.b16 %v3012, %v3008
    %v3353 = vpack.c.b16 %v3013, %v3009
    %v3354 = vpack.c.b16 %v3014, %v3010
    %v3355 = vpack.c.b16 %v3015, %v3011
    %v3356 = vpack.c.b16 %v3020, %v3016
    %v3357 = vpack.c.b16 %v3021, %v3017
    %v3358 = vpack.c.b16 %v3022, %v3018
    %v3359 = vpack.c.b16 %v3023, %v3019
    %v3360 = vpack.c.b16 %v3028, %v3024
    %v3361 = vpack.c.b16 %v3029, %v3025
    %v3362 = vpack.c.b16 %v3030, %v3026
    %v3363 = vpack.c.b16 %v3031, %v3027
    %v3364 = vpack.c.b16 %v3036, %v3032
    %v3365 = vpack.c.b16 %v3037, %v3033
    %v3366 = vpack.c.b16 %v3038, %v3034
    %v3367 = vpack.c.b16 %v3039, %v3035
    %v3368 = vpack.c.b16 %v3044, %v3040
    %v3369 = vpack.c.b16 %v3045, %v3041
    %v3370 = vpack.c.b16 %v3046, %v3042
    %v3371 = vpack.c.b16 %v3047, %v3043
    %v3372 = vpack.c.b16 %v3052, %v3048
    %v3373 = vpack.c.b16 %v3053, %v3049
    %v3374 = vpack.c.b16 %v3054, %v3050
    %v3375 = vpack.c.b16 %v3055, %v3051
    %v3376 = vpack.c.b16 %v3060, %v3056
    %v3377 = vpack.c.b16 %v3061, %v3057
    %v3378 = vpack.c.b16 %v3062, %v3058
    %v3379 = vpack.c.b16 %v3063, %v3059
    %v3380 = vpack.c.b16 %v3068, %v3064
    %v3381 = vpack.c.b16 %v3069, %v3065
    %v3382 = vpack.c.b16 %v3070, %v3066
    %v3383 = vpack.c.b16 %v3071, %v3067
    %v3384 = vpack.c.b16 %v3076, %v3072
    %v3385 = vpack.c.b16 %v3077, %v3073
    %v3386 = vpack.c.b16 %v3078, %v3074
    %v3387 = vpack.c.b16 %v3079, %v3075
    %v3388 = vpack.c.b16 %v3084, %v3080
    %v3389 = vpack.c.b16 %v3085, %v3081
    %v3390 = vpack.c.b16 %v3086, %v3082
    %v3391 = vpack.c.b16 %v3087, %v3083
    %v3392 = vpack.c.b16 %v3092, %v3088
    %v3393 = vpack.c.b16 %v3093, %v3089
    %v3394 = vpack.c.b16 %v3094, %v3090
    %v3395 = vpack.c.b16 %v3095, %v3091
    %v3396 = vpack.c.b16 %v3100, %v3096
    %v3397 = vpack.c.b16 %v3101, %v3097
    %v3398 = vpack.c.b16 %v3102, %v3098
    %v3399 = vpack.c.b16 %v3103, %v3099
    %v3400 = vpack.c.b16 %v3108, %v3104
    %v3401 = vpack.c.b16 %v3109, %v3105
    %v3402 = vpack.c.b16 %v3110, %v3106
    %v3403 = vpack.c.b16 %v3111, %v3107
    %v3404 = vpack.c.b16 %v3116, %v3112
    %v3405 = vpack.c.b16 %v3117, %v3113
    %v3406 = vpack.c.b16 %v3118, %v3114
    %v3407 = vpack.c.b16 %v3119, %v3115
    %v3408 = vpack.c.b16 %v3124, %v3120
    %v3409 = vpack.c.b16 %v3125, %v3121
    %v3410 = vpack.c.b16 %v3126, %v3122
    %v3411 = vpack.c.b16 %v3127, %v3123
    %v3412 = vpack.c.b16 %v3132, %v3128
    %v3413 = vpack.c.b16 %v3133, %v3129
    %v3414 = vpack.c.b16 %v3134, %v3130
    %v3415 = vpack.c.b16 %v3135, %v3131
    %v3416 = vpack.c.b16 %v3140, %v3136
    %v3417 = vpack.c.b16 %v3141, %v3137
    %v3418 = vpack.c.b16 %v3142, %v3138
    %v3419 = vpack.c.b16 %v3143, %v3139
    %v3420 = vpack.c.b16 %v3148, %v3144
    %v3421 = vpack.c.b16 %v3149, %v3145
    %v3422 = vpack.c.b16 %v3150, %v3146
    %v3423 = vpack.c.b16 %v3151, %v3147
    %v3424 = vpack.c.b16 %v3156, %v3152
    %v3425 = vpack.c.b16 %v3157, %v3153
    %v3426 = vpack.c.b16 %v3158, %v3154
    %v3427 = vpack.c.b16 %v3159, %v3155
    %v3428 = vpack.c.b16 %v3164, %v3160
    %v3429 = vpack.c.b16 %v3165, %v3161
    %v3430 = vpack.c.b16 %v3166, %v3162
    %v3431 = vpack.c.b16 %v3167, %v3163
    %v3432 = vpack.c.b16 %v3172, %v3168
    %v3433 = vpack.c.b16 %v3173, %v3169
    %v3434 = vpack.c.b16 %v3174, %v3170
    %v3435 = vpack.c.b16 %v3175, %v3171
    %v3436 = vpack.c.b16 %v3180, %v3176
    %v3437 = vpack.c.b16 %v3181, %v3177
    %v3438 = vpack.c.b16 %v3182, %v3178
    %v3439 = vpack.c.b16 %v3183, %v3179
    %3696 = vmatpush.bf16.msra.mxu0 %v3212
    %3697 = vmatpush.bf16.msra.mxu0 %v3208
    %3698 = vmatpush.bf16.msra.mxu0 %v3204
    %3699 = vmatpush.bf16.msra.mxu0 %v3200
    %3700 = vmatpush.bf16.msra.mxu0 %v3196
    %3701 = vmatpush.bf16.msra.mxu0 %v3192
    %3702 = vmatpush.bf16.msra.mxu0 %v3188
    %3703 = vmatpush.bf16.msra.mxu0 %v3184
    %3704 = vmatmul.bf16.gmra.mxu0 %v2142
    %v3705 = vpop.f32.mrf.mxu0
    %v3706 = vadd.f32 %v2408, %v3705
    %v3707 = vpop.f32.mrf.mxu0
    %3708 = vdwg.mxu0
    %3709 = vmatpush.bf16.msra.mxu0 %v3244
    %3710 = vmatpush.bf16.msra.mxu0 %v3240
    %3711 = vmatpush.bf16.msra.mxu0 %v3236
    %3712 = vmatpush.bf16.msra.mxu0 %v3232
    %3713 = vmatpush.bf16.msra.mxu0 %v3228
    %3714 = vmatpush.bf16.msra.mxu0 %v3224
    %3715 = vmatpush.bf16.msra.mxu0 %v3220
    %3716 = vmatpush.bf16.msra.mxu0 %v3216
    %3717 = vmatmul.bf16.gmra.mxu0 %v2143
    %v3718 = vpop.f32.mrf.mxu0
    %v3719 = vadd.f32 %v3706, %v3718
    %v3720 = vpop.f32.mrf.mxu0
    %3721 = vdwg.mxu0
    %3722 = vmatpush.bf16.msra.mxu0 %v3276
    %3723 = vmatpush.bf16.msra.mxu0 %v3272
    %3724 = vmatpush.bf16.msra.mxu0 %v3268
    %3725 = vmatpush.bf16.msra.mxu0 %v3264
    %3726 = vmatpush.bf16.msra.mxu0 %v3260
    %3727 = vmatpush.bf16.msra.mxu0 %v3256
    %3728 = vmatpush.bf16.msra.mxu0 %v3252
    %3729 = vmatpush.bf16.msra.mxu0 %v3248
    %3730 = vmatmul.bf16.gmra.mxu0 %v2144
    %v3731 = vpop.f32.mrf.mxu0
    %v3732 = vadd.f32 %v3719, %v3731
    %v3733 = vpop.f32.mrf.mxu0
    %3734 = vdwg.mxu0
    %3735 = vmatpush.bf16.msra.mxu0 %v3308
    %3736 = vmatpush.bf16.msra.mxu0 %v3304
    %3737 = vmatpush.bf16.msra.mxu0 %v3300
    %3738 = vmatpush.bf16.msra.mxu0 %v3296
    %3739 = vmatpush.bf16.msra.mxu0 %v3292
    %3740 = vmatpush.bf16.msra.mxu0 %v3288
    %3741 = vmatpush.bf16.msra.mxu0 %v3284
    %3742 = vmatpush.bf16.msra.mxu0 %v3280
    %3743 = vmatmul.bf16.gmra.mxu0 %v2145
    %v3744 = vpop.f32.mrf.mxu0
    %v3745 = vadd.f32 %v3732, %v3744
    %v3746 = vpop.f32.mrf.mxu0
    %3747 = vdwg.mxu0
    %3748 = vmatpush.bf16.msra.mxu0 %v3340
    %3749 = vmatpush.bf16.msra.mxu0 %v3336
    %3750 = vmatpush.bf16.msra.mxu0 %v3332
    %3751 = vmatpush.bf16.msra.mxu0 %v3328
    %3752 = vmatpush.bf16.msra.mxu0 %v3324
    %3753 = vmatpush.bf16.msra.mxu0 %v3320
    %3754 = vmatpush.bf16.msra.mxu0 %v3316
    %3755 = vmatpush.bf16.msra.mxu0 %v3312
    %3756 = vmatmul.bf16.gmra.mxu0 %v2146
    %v3757 = vpop.f32.mrf.mxu0
    %v3758 = vadd.f32 %v3745, %v3757
    %v3759 = vpop.f32.mrf.mxu0
    %3760 = vdwg.mxu0
    %3761 = vmatpush.bf16.msra.mxu0 %v3372
    %3762 = vmatpush.bf16.msra.mxu0 %v3368
    %3763 = vmatpush.bf16.msra.mxu0 %v3364
    %3764 = vmatpush.bf16.msra.mxu0 %v3360
    %3765 = vmatpush.bf16.msra.mxu0 %v3356
    %3766 = vmatpush.bf16.msra.mxu0 %v3352
    %3767 = vmatpush.bf16.msra.mxu0 %v3348
    %3768 = vmatpush.bf16.msra.mxu0 %v3344
    %3769 = vmatmul.bf16.gmra.mxu0 %v2147
    %v3770 = vpop.f32.mrf.mxu0
    %v3771 = vadd.f32 %v3758, %v3770
    %v3772 = vpop.f32.mrf.mxu0
    %3773 = vdwg.mxu0
    %3774 = vmatpush.bf16.msra.mxu0 %v3404
    %3775 = vmatpush.bf16.msra.mxu0 %v3400
    %3776 = vmatpush.bf16.msra.mxu0 %v3396
    %3777 = vmatpush.bf16.msra.mxu0 %v3392
    %3778 = vmatpush.bf16.msra.mxu0 %v3388
    %3779 = vmatpush.bf16.msra.mxu0 %v3384
    %3780 = vmatpush.bf16.msra.mxu0 %v3380
    %3781 = vmatpush.bf16.msra.mxu0 %v3376
    %3782 = vmatmul.bf16.gmra.mxu0 %v2148
    %v3783 = vpop.f32.mrf.mxu0
    %v3784 = vadd.f32 %v3771, %v3783
    %v3785 = vpop.f32.mrf.mxu0
    %3786 = vdwg.mxu0
    %3787 = vmatpush.bf16.msra.mxu0 %v3436
    %3788 = vmatpush.bf16.msra.mxu0 %v3432
    %3789 = vmatpush.bf16.msra.mxu0 %v3428
    %3790 = vmatpush.bf16.msra.mxu0 %v3424
    %3791 = vmatpush.bf16.msra.mxu0 %v3420
    %3792 = vmatpush.bf16.msra.mxu0 %v3416
    %3793 = vmatpush.bf16.msra.mxu0 %v3412
    %3794 = vmatpush.bf16.msra.mxu0 %v3408
    %3795 = vmatmul.bf16.gmra.mxu0 %v2149
    %v3796 = vpop.f32.mrf.mxu0
    %v3797 = vadd.f32 %v3784, %v3796
    %v3798 = vpop.f32.mrf.mxu0
    %3799 = vdwg.mxu0
    %3800 = vmatpush.bf16.msra.mxu0 %v3213
    %3801 = vmatpush.bf16.msra.mxu0 %v3209
    %3802 = vmatpush.bf16.msra.mxu0 %v3205
    %3803 = vmatpush.bf16.msra.mxu0 %v3201
    %3804 = vmatpush.bf16.msra.mxu0 %v3197
    %3805 = vmatpush.bf16.msra.mxu0 %v3193
    %3806 = vmatpush.bf16.msra.mxu0 %v3189
    %3807 = vmatpush.bf16.msra.mxu0 %v3185
    %3808 = vmatmul.bf16.gmra.mxu0 %v2142
    %v3809 = vpop.f32.mrf.mxu0
    %v3810 = vadd.f32 %v2409, %v3809
    %v3811 = vpop.f32.mrf.mxu0
    %3812 = vdwg.mxu0
    %3813 = vmatpush.bf16.msra.mxu0 %v3245
    %3814 = vmatpush.bf16.msra.mxu0 %v3241
    %3815 = vmatpush.bf16.msra.mxu0 %v3237
    %3816 = vmatpush.bf16.msra.mxu0 %v3233
    %3817 = vmatpush.bf16.msra.mxu0 %v3229
    %3818 = vmatpush.bf16.msra.mxu0 %v3225
    %3819 = vmatpush.bf16.msra.mxu0 %v3221
    %3820 = vmatpush.bf16.msra.mxu0 %v3217
    %3821 = vmatmul.bf16.gmra.mxu0 %v2143
    %v3822 = vpop.f32.mrf.mxu0
    %v3823 = vadd.f32 %v3810, %v3822
    %v3824 = vpop.f32.mrf.mxu0
    %3825 = vdwg.mxu0
    %3826 = vmatpush.bf16.msra.mxu0 %v3277
    %3827 = vmatpush.bf16.msra.mxu0 %v3273
    %3828 = vmatpush.bf16.msra.mxu0 %v3269
    %3829 = vmatpush.bf16.msra.mxu0 %v3265
    %3830 = vmatpush.bf16.msra.mxu0 %v3261
    %3831 = vmatpush.bf16.msra.mxu0 %v3257
    %3832 = vmatpush.bf16.msra.mxu0 %v3253
    %3833 = vmatpush.bf16.msra.mxu0 %v3249
    %3834 = vmatmul.bf16.gmra.mxu0 %v2144
    %v3835 = vpop.f32.mrf.mxu0
    %v3836 = vadd.f32 %v3823, %v3835
    %v3837 = vpop.f32.mrf.mxu0
    %3838 = vdwg.mxu0
    %3839 = vmatpush.bf16.msra.mxu0 %v3309
    %3840 = vmatpush.bf16.msra.mxu0 %v3305
    %3841 = vmatpush.bf16.msra.mxu0 %v3301
    %3842 = vmatpush.bf16.msra.mxu0 %v3297
    %3843 = vmatpush.bf16.msra.mxu0 %v3293
    %3844 = vmatpush.bf16.msra.mxu0 %v3289
    %3845 = vmatpush.bf16.msra.mxu0 %v3285
    %3846 = vmatpush.bf16.msra.mxu0 %v3281
    %3847 = vmatmul.bf16.gmra.mxu0 %v2145
    %v3848 = vpop.f32.mrf.mxu0
    %v3849 = vadd.f32 %v3836, %v3848
    %v3850 = vpop.f32.mrf.mxu0
    %3851 = vdwg.mxu0
    %3852 = vmatpush.bf16.msra.mxu0 %v3341
    %3853 = vmatpush.bf16.msra.mxu0 %v3337
    %3854 = vmatpush.bf16.msra.mxu0 %v3333
    %3855 = vmatpush.bf16.msra.mxu0 %v3329
    %3856 = vmatpush.bf16.msra.mxu0 %v3325
    %3857 = vmatpush.bf16.msra.mxu0 %v3321
    %3858 = vmatpush.bf16.msra.mxu0 %v3317
    %3859 = vmatpush.bf16.msra.mxu0 %v3313
    %3860 = vmatmul.bf16.gmra.mxu0 %v2146
    %v3861 = vpop.f32.mrf.mxu0
    %v3862 = vadd.f32 %v3849, %v3861
    %v3863 = vpop.f32.mrf.mxu0
    %3864 = vdwg.mxu0
    %3865 = vmatpush.bf16.msra.mxu0 %v3373
    %3866 = vmatpush.bf16.msra.mxu0 %v3369
    %3867 = vmatpush.bf16.msra.mxu0 %v3365
    %3868 = vmatpush.bf16.msra.mxu0 %v3361
    %3869 = vmatpush.bf16.msra.mxu0 %v3357
    %3870 = vmatpush.bf16.msra.mxu0 %v3353
    %3871 = vmatpush.bf16.msra.mxu0 %v3349
    %3872 = vmatpush.bf16.msra.mxu0 %v3345
    %3873 = vmatmul.bf16.gmra.mxu0 %v2147
    %v3874 = vpop.f32.mrf.mxu0
    %v3875 = vadd.f32 %v3862, %v3874
    %v3876 = vpop.f32.mrf.mxu0
    %3877 = vdwg.mxu0
    %3878 = vmatpush.bf16.msra.mxu0 %v3405
    %3879 = vmatpush.bf16.msra.mxu0 %v3401
    %3880 = vmatpush.bf16.msra.mxu0 %v3397
    %3881 = vmatpush.bf16.msra.mxu0 %v3393
    %3882 = vmatpush.bf16.msra.mxu0 %v3389
    %3883 = vmatpush.bf16.msra.mxu0 %v3385
    %3884 = vmatpush.bf16.msra.mxu0 %v3381
    %3885 = vmatpush.bf16.msra.mxu0 %v3377
    %3886 = vmatmul.bf16.gmra.mxu0 %v2148
    %v3887 = vpop.f32.mrf.mxu0
    %v3888 = vadd.f32 %v3875, %v3887
    %v3889 = vpop.f32.mrf.mxu0
    %3890 = vdwg.mxu0
    %3891 = vmatpush.bf16.msra.mxu0 %v3437
    %3892 = vmatpush.bf16.msra.mxu0 %v3433
    %3893 = vmatpush.bf16.msra.mxu0 %v3429
    %3894 = vmatpush.bf16.msra.mxu0 %v3425
    %3895 = vmatpush.bf16.msra.mxu0 %v3421
    %3896 = vmatpush.bf16.msra.mxu0 %v3417
    %3897 = vmatpush.bf16.msra.mxu0 %v3413
    %3898 = vmatpush.bf16.msra.mxu0 %v3409
    %3899 = vmatmul.bf16.gmra.mxu0 %v2149
    %v3900 = vpop.f32.mrf.mxu0
    %v3901 = vadd.f32 %v3888, %v3900
    %v3902 = vpop.f32.mrf.mxu0
    %3903 = vdwg.mxu0
    %3904 = vmatpush.bf16.msra.mxu0 %v3214
    %3905 = vmatpush.bf16.msra.mxu0 %v3210
    %3906 = vmatpush.bf16.msra.mxu0 %v3206
    %3907 = vmatpush.bf16.msra.mxu0 %v3202
    %3908 = vmatpush.bf16.msra.mxu0 %v3198
    %3909 = vmatpush.bf16.msra.mxu0 %v3194
    %3910 = vmatpush.bf16.msra.mxu0 %v3190
    %3911 = vmatpush.bf16.msra.mxu0 %v3186
    %3912 = vmatmul.bf16.gmra.mxu0 %v2142
    %v3913 = vpop.f32.mrf.mxu0
    %v3914 = vadd.f32 %v2410, %v3913
    %v3915 = vpop.f32.mrf.mxu0
    %3916 = vdwg.mxu0
    %3917 = vmatpush.bf16.msra.mxu0 %v3246
    %3918 = vmatpush.bf16.msra.mxu0 %v3242
    %3919 = vmatpush.bf16.msra.mxu0 %v3238
    %3920 = vmatpush.bf16.msra.mxu0 %v3234
    %3921 = vmatpush.bf16.msra.mxu0 %v3230
    %3922 = vmatpush.bf16.msra.mxu0 %v3226
    %3923 = vmatpush.bf16.msra.mxu0 %v3222
    %3924 = vmatpush.bf16.msra.mxu0 %v3218
    %3925 = vmatmul.bf16.gmra.mxu0 %v2143
    %v3926 = vpop.f32.mrf.mxu0
    %v3927 = vadd.f32 %v3914, %v3926
    %v3928 = vpop.f32.mrf.mxu0
    %3929 = vdwg.mxu0
    %3930 = vmatpush.bf16.msra.mxu0 %v3278
    %3931 = vmatpush.bf16.msra.mxu0 %v3274
    %3932 = vmatpush.bf16.msra.mxu0 %v3270
    %3933 = vmatpush.bf16.msra.mxu0 %v3266
    %3934 = vmatpush.bf16.msra.mxu0 %v3262
    %3935 = vmatpush.bf16.msra.mxu0 %v3258
    %3936 = vmatpush.bf16.msra.mxu0 %v3254
    %3937 = vmatpush.bf16.msra.mxu0 %v3250
    %3938 = vmatmul.bf16.gmra.mxu0 %v2144
    %v3939 = vpop.f32.mrf.mxu0
    %v3940 = vadd.f32 %v3927, %v3939
    %v3941 = vpop.f32.mrf.mxu0
    %3942 = vdwg.mxu0
    %3943 = vmatpush.bf16.msra.mxu0 %v3310
    %3944 = vmatpush.bf16.msra.mxu0 %v3306
    %3945 = vmatpush.bf16.msra.mxu0 %v3302
    %3946 = vmatpush.bf16.msra.mxu0 %v3298
    %3947 = vmatpush.bf16.msra.mxu0 %v3294
    %3948 = vmatpush.bf16.msra.mxu0 %v3290
    %3949 = vmatpush.bf16.msra.mxu0 %v3286
    %3950 = vmatpush.bf16.msra.mxu0 %v3282
    %3951 = vmatmul.bf16.gmra.mxu0 %v2145
    %v3952 = vpop.f32.mrf.mxu0
    %v3953 = vadd.f32 %v3940, %v3952
    %v3954 = vpop.f32.mrf.mxu0
    %3955 = vdwg.mxu0
    %3956 = vmatpush.bf16.msra.mxu0 %v3342
    %3957 = vmatpush.bf16.msra.mxu0 %v3338
    %3958 = vmatpush.bf16.msra.mxu0 %v3334
    %3959 = vmatpush.bf16.msra.mxu0 %v3330
    %3960 = vmatpush.bf16.msra.mxu0 %v3326
    %3961 = vmatpush.bf16.msra.mxu0 %v3322
    %3962 = vmatpush.bf16.msra.mxu0 %v3318
    %3963 = vmatpush.bf16.msra.mxu0 %v3314
    %3964 = vmatmul.bf16.gmra.mxu0 %v2146
    %v3965 = vpop.f32.mrf.mxu0
    %v3966 = vadd.f32 %v3953, %v3965
    %v3967 = vpop.f32.mrf.mxu0
    %3968 = vdwg.mxu0
    %3969 = vmatpush.bf16.msra.mxu0 %v3374
    %3970 = vmatpush.bf16.msra.mxu0 %v3370
    %3971 = vmatpush.bf16.msra.mxu0 %v3366
    %3972 = vmatpush.bf16.msra.mxu0 %v3362
    %3973 = vmatpush.bf16.msra.mxu0 %v3358
    %3974 = vmatpush.bf16.msra.mxu0 %v3354
    %3975 = vmatpush.bf16.msra.mxu0 %v3350
    %3976 = vmatpush.bf16.msra.mxu0 %v3346
    %3977 = vmatmul.bf16.gmra.mxu0 %v2147
    %v3978 = vpop.f32.mrf.mxu0
    %v3979 = vadd.f32 %v3966, %v3978
    %v3980 = vpop.f32.mrf.mxu0
    %3981 = vdwg.mxu0
    %3982 = vmatpush.bf16.msra.mxu0 %v3406
    %3983 = vmatpush.bf16.msra.mxu0 %v3402
    %3984 = vmatpush.bf16.msra.mxu0 %v3398
    %3985 = vmatpush.bf16.msra.mxu0 %v3394
    %3986 = vmatpush.bf16.msra.mxu0 %v3390
    %3987 = vmatpush.bf16.msra.mxu0 %v3386
    %3988 = vmatpush.bf16.msra.mxu0 %v3382
    %3989 = vmatpush.bf16.msra.mxu0 %v3378
    %3990 = vmatmul.bf16.gmra.mxu0 %v2148
    %v3991 = vpop.f32.mrf.mxu0
    %v3992 = vadd.f32 %v3979, %v3991
    %v3993 = vpop.f32.mrf.mxu0
    %3994 = vdwg.mxu0
    %3995 = vmatpush.bf16.msra.mxu0 %v3438
    %3996 = vmatpush.bf16.msra.mxu0 %v3434
    %3997 = vmatpush.bf16.msra.mxu0 %v3430
    %3998 = vmatpush.bf16.msra.mxu0 %v3426
    %3999 = vmatpush.bf16.msra.mxu0 %v3422
    %4000 = vmatpush.bf16.msra.mxu0 %v3418
    %4001 = vmatpush.bf16.msra.mxu0 %v3414
    %4002 = vmatpush.bf16.msra.mxu0 %v3410
    %4003 = vmatmul.bf16.gmra.mxu0 %v2149
    %v4004 = vpop.f32.mrf.mxu0
    %v4005 = vadd.f32 %v3992, %v4004
    %v4006 = vpop.f32.mrf.mxu0
    %4007 = vdwg.mxu0
    %4008 = vmatpush.bf16.msra.mxu0 %v3215
    %4009 = vmatpush.bf16.msra.mxu0 %v3211
    %4010 = vmatpush.bf16.msra.mxu0 %v3207
    %4011 = vmatpush.bf16.msra.mxu0 %v3203
    %4012 = vmatpush.bf16.msra.mxu0 %v3199
    %4013 = vmatpush.bf16.msra.mxu0 %v3195
    %4014 = vmatpush.bf16.msra.mxu0 %v3191
    %4015 = vmatpush.bf16.msra.mxu0 %v3187
    %4016 = vmatmul.bf16.gmra.mxu0 %v2142
    %v4017 = vpop.f32.mrf.mxu0
    %v4018 = vadd.f32 %v2411, %v4017
    %v4019 = vpop.f32.mrf.mxu0
    %4020 = vdwg.mxu0
    %4021 = vmatpush.bf16.msra.mxu0 %v3247
    %4022 = vmatpush.bf16.msra.mxu0 %v3243
    %4023 = vmatpush.bf16.msra.mxu0 %v3239
    %4024 = vmatpush.bf16.msra.mxu0 %v3235
    %4025 = vmatpush.bf16.msra.mxu0 %v3231
    %4026 = vmatpush.bf16.msra.mxu0 %v3227
    %4027 = vmatpush.bf16.msra.mxu0 %v3223
    %4028 = vmatpush.bf16.msra.mxu0 %v3219
    %4029 = vmatmul.bf16.gmra.mxu0 %v2143
    %v4030 = vpop.f32.mrf.mxu0
    %v4031 = vadd.f32 %v4018, %v4030
    %v4032 = vpop.f32.mrf.mxu0
    %4033 = vdwg.mxu0
    %4034 = vmatpush.bf16.msra.mxu0 %v3279
    %4035 = vmatpush.bf16.msra.mxu0 %v3275
    %4036 = vmatpush.bf16.msra.mxu0 %v3271
    %4037 = vmatpush.bf16.msra.mxu0 %v3267
    %4038 = vmatpush.bf16.msra.mxu0 %v3263
    %4039 = vmatpush.bf16.msra.mxu0 %v3259
    %4040 = vmatpush.bf16.msra.mxu0 %v3255
    %4041 = vmatpush.bf16.msra.mxu0 %v3251
    %4042 = vmatmul.bf16.gmra.mxu0 %v2144
    %v4043 = vpop.f32.mrf.mxu0
    %v4044 = vadd.f32 %v4031, %v4043
    %v4045 = vpop.f32.mrf.mxu0
    %4046 = vdwg.mxu0
    %4047 = vmatpush.bf16.msra.mxu0 %v3311
    %4048 = vmatpush.bf16.msra.mxu0 %v3307
    %4049 = vmatpush.bf16.msra.mxu0 %v3303
    %4050 = vmatpush.bf16.msra.mxu0 %v3299
    %4051 = vmatpush.bf16.msra.mxu0 %v3295
    %4052 = vmatpush.bf16.msra.mxu0 %v3291
    %4053 = vmatpush.bf16.msra.mxu0 %v3287
    %4054 = vmatpush.bf16.msra.mxu0 %v3283
    %4055 = vmatmul.bf16.gmra.mxu0 %v2145
    %v4056 = vpop.f32.mrf.mxu0
    %v4057 = vadd.f32 %v4044, %v4056
    %v4058 = vpop.f32.mrf.mxu0
    %4059 = vdwg.mxu0
    %4060 = vmatpush.bf16.msra.mxu0 %v3343
    %4061 = vmatpush.bf16.msra.mxu0 %v3339
    %4062 = vmatpush.bf16.msra.mxu0 %v3335
    %4063 = vmatpush.bf16.msra.mxu0 %v3331
    %4064 = vmatpush.bf16.msra.mxu0 %v3327
    %4065 = vmatpush.bf16.msra.mxu0 %v3323
    %4066 = vmatpush.bf16.msra.mxu0 %v3319
    %4067 = vmatpush.bf16.msra.mxu0 %v3315
    %4068 = vmatmul.bf16.gmra.mxu0 %v2146
    %v4069 = vpop.f32.mrf.mxu0
    %v4070 = vadd.f32 %v4057, %v4069
    %v4071 = vpop.f32.mrf.mxu0
    %4072 = vdwg.mxu0
    %4073 = vmatpush.bf16.msra.mxu0 %v3375
    %4074 = vmatpush.bf16.msra.mxu0 %v3371
    %4075 = vmatpush.bf16.msra.mxu0 %v3367
    %4076 = vmatpush.bf16.msra.mxu0 %v3363
    %4077 = vmatpush.bf16.msra.mxu0 %v3359
    %4078 = vmatpush.bf16.msra.mxu0 %v3355
    %4079 = vmatpush.bf16.msra.mxu0 %v3351
    %4080 = vmatpush.bf16.msra.mxu0 %v3347
    %4081 = vmatmul.bf16.gmra.mxu0 %v2147
    %v4082 = vpop.f32.mrf.mxu0
    %v4083 = vadd.f32 %v4070, %v4082
    %v4084 = vpop.f32.mrf.mxu0
    %4085 = vdwg.mxu0
    %4086 = vmatpush.bf16.msra.mxu0 %v3407
    %4087 = vmatpush.bf16.msra.mxu0 %v3403
    %4088 = vmatpush.bf16.msra.mxu0 %v3399
    %4089 = vmatpush.bf16.msra.mxu0 %v3395
    %4090 = vmatpush.bf16.msra.mxu0 %v3391
    %4091 = vmatpush.bf16.msra.mxu0 %v3387
    %4092 = vmatpush.bf16.msra.mxu0 %v3383
    %4093 = vmatpush.bf16.msra.mxu0 %v3379
    %4094 = vmatmul.bf16.gmra.mxu0 %v2148
    %v4095 = vpop.f32.mrf.mxu0
    %v4096 = vadd.f32 %v4083, %v4095
    %v4097 = vpop.f32.mrf.mxu0
    %4098 = vdwg.mxu0
    %4099 = vmatpush.bf16.msra.mxu0 %v3439
    %4100 = vmatpush.bf16.msra.mxu0 %v3435
    %4101 = vmatpush.bf16.msra.mxu0 %v3431
    %4102 = vmatpush.bf16.msra.mxu0 %v3427
    %4103 = vmatpush.bf16.msra.mxu0 %v3423
    %4104 = vmatpush.bf16.msra.mxu0 %v3419
    %4105 = vmatpush.bf16.msra.mxu0 %v3415
    %4106 = vmatpush.bf16.msra.mxu0 %v3411
    %4107 = vmatmul.bf16.gmra.mxu0 %v2149
    %v4108 = vpop.f32.mrf.mxu0
    %v4109 = vadd.f32 %v4096, %v4108
    %v4110 = vpop.f32.mrf.mxu0
    %4111 = vdwg.mxu0
    %v4112 = vpack.c.bf16 %v3901, %v3797
    %v4113 = vpack.c.bf16 %v4109, %v4005
    %v4114 = vunpack.c.l.bf16 %v4112
    %v4115 = vunpack.c.h.bf16 %v4112
    %v4116 = vunpack.c.l.bf16 %v4113
    %v4117 = vunpack.c.h.bf16 %v4113
    %v4118 = vmax.f32 %v4114, 0.0
    %v4119 = vmax.f32 %v4115, 0.0
    %v4120 = vmax.f32 %v4116, 0.0
    %v4121 = vmax.f32 %v4117, 0.0
    %v4122 = vpack.c.bf16 %v4118, %v4118
    %v4123 = vpack.c.bf16 %v4119, %v4119
    %v4124 = vpack.c.bf16 %v4120, %v4120
    %v4125 = vpack.c.bf16 %v4121, %v4121
    %v4126 = vld [vmem:[#allocation11] sm:$0xff]
    %v4127 = vld [vmem:[#allocation11 + $0x8] sm:$0xff]
    %v4128 = vld [vmem:[#allocation11 + $0x10] sm:$0xff]
    %v4129 = vld [vmem:[#allocation11 + $0x18] sm:$0xff]
    %v4130 = vld [vmem:[#allocation11 + $0x20] sm:$0xff]
    %v4131 = vld [vmem:[#allocation11 + $0x28] sm:$0xff]
    %v4132 = vld [vmem:[#allocation11 + $0x30] sm:$0xff]
    %v4133 = vld [vmem:[#allocation11 + $0x38] sm:$0xff]
    %v4134 = vld [vmem:[#allocation11 + $0x40] sm:$0xff]
    %v4135 = vld [vmem:[#allocation11 + $0x48] sm:$0xff]
    %v4136 = vld [vmem:[#allocation11 + $0x50] sm:$0xff]
    %v4137 = vld [vmem:[#allocation11 + $0x58] sm:$0xff]
    %v4138 = vld [vmem:[#allocation11 + $0x60] sm:$0xff]
    %v4139 = vld [vmem:[#allocation11 + $0x68] sm:$0xff]
    %v4140 = vld [vmem:[#allocation11 + $0x70] sm:$0xff]
    %v4141 = vld [vmem:[#allocation11 + $0x78] sm:$0xff]
    %v4142 = vld [vmem:[#allocation11 + $0x80] sm:$0xff]
    %v4143 = vld [vmem:[#allocation11 + $0x88] sm:$0xff]
    %v4144 = vld [vmem:[#allocation11 + $0x90] sm:$0xff]
    %v4145 = vld [vmem:[#allocation11 + $0x98] sm:$0xff]
    %v4146 = vld [vmem:[#allocation11 + $0xa0] sm:$0xff]
    %v4147 = vld [vmem:[#allocation11 + $0xa8] sm:$0xff]
    %v4148 = vld [vmem:[#allocation11 + $0xb0] sm:$0xff]
    %v4149 = vld [vmem:[#allocation11 + $0xb8] sm:$0xff]
    %v4150 = vld [vmem:[#allocation11 + $0xc0] sm:$0xff]
    %v4151 = vld [vmem:[#allocation11 + $0xc8] sm:$0xff]
    %v4152 = vld [vmem:[#allocation11 + $0xd0] sm:$0xff]
    %v4153 = vld [vmem:[#allocation11 + $0xd8] sm:$0xff]
    %v4154 = vld [vmem:[#allocation11 + $0xe0] sm:$0xff]
    %v4155 = vld [vmem:[#allocation11 + $0xe8] sm:$0xff]
    %v4156 = vld [vmem:[#allocation11 + $0xf0] sm:$0xff]
    %v4157 = vld [vmem:[#allocation11 + $0xf8] sm:$0xff]
    %v4158 = vld [vmem:[#allocation11 + $0x100] sm:$0xff]
    %v4159 = vld [vmem:[#allocation11 + $0x108] sm:$0xff]
    %v4160 = vld [vmem:[#allocation11 + $0x110] sm:$0xff]
    %v4161 = vld [vmem:[#allocation11 + $0x118] sm:$0xff]
    %v4162 = vld [vmem:[#allocation11 + $0x120] sm:$0xff]
    %v4163 = vld [vmem:[#allocation11 + $0x128] sm:$0xff]
    %v4164 = vld [vmem:[#allocation11 + $0x130] sm:$0xff]
    %v4165 = vld [vmem:[#allocation11 + $0x138] sm:$0xff]
    %v4166 = vld [vmem:[#allocation11 + $0x140] sm:$0xff]
    %v4167 = vld [vmem:[#allocation11 + $0x148] sm:$0xff]
    %v4168 = vld [vmem:[#allocation11 + $0x150] sm:$0xff]
    %v4169 = vld [vmem:[#allocation11 + $0x158] sm:$0xff]
    %v4170 = vld [vmem:[#allocation11 + $0x160] sm:$0xff]
    %v4171 = vld [vmem:[#allocation11 + $0x168] sm:$0xff]
    %v4172 = vld [vmem:[#allocation11 + $0x170] sm:$0xff]
    %v4173 = vld [vmem:[#allocation11 + $0x178] sm:$0xff]
    %v4174 = vld [vmem:[#allocation11 + $0x180] sm:$0xff]
    %v4175 = vld [vmem:[#allocation11 + $0x188] sm:$0xff]
    %v4176 = vld [vmem:[#allocation11 + $0x190] sm:$0xff]
    %v4177 = vld [vmem:[#allocation11 + $0x198] sm:$0xff]
    %v4178 = vld [vmem:[#allocation11 + $0x1a0] sm:$0xff]
    %v4179 = vld [vmem:[#allocation11 + $0x1a8] sm:$0xff]
    %v4180 = vld [vmem:[#allocation11 + $0x1b0] sm:$0xff]
    %v4181 = vld [vmem:[#allocation11 + $0x1b8] sm:$0xff]
    %v4182 = vld [vmem:[#allocation11 + $0x1c0] sm:$0xff]
    %v4183 = vld [vmem:[#allocation11 + $0x1c8] sm:$0xff]
    %v4184 = vld [vmem:[#allocation11 + $0x1d0] sm:$0xff]
    %v4185 = vld [vmem:[#allocation11 + $0x1d8] sm:$0xff]
    %v4186 = vld [vmem:[#allocation11 + $0x1e0] sm:$0xff]
    %v4187 = vld [vmem:[#allocation11 + $0x1e8] sm:$0xff]
    %v4188 = vld [vmem:[#allocation11 + $0x1f0] sm:$0xff]
    %v4189 = vld [vmem:[#allocation11 + $0x1f8] sm:$0xff]
    %v4190 = vld [vmem:[%s6] sm:$0x3]
    %v4192 = vperm.slane %v4190, 0
    %v4193 = vperm.slane %v4190, 1
    %v4260 = vunpack.c.l.b16 %v4126
    %v4261 = vunpack.c.h.b16 %v4126
    %v4262 = vunpack.c.l.b16 %v4127
    %v4263 = vunpack.c.h.b16 %v4127
    %v4264 = vunpack.c.l.b16 %v4128
    %v4265 = vunpack.c.h.b16 %v4128
    %v4266 = vunpack.c.l.b16 %v4129
    %v4267 = vunpack.c.h.b16 %v4129
    %v4268 = vunpack.c.l.b16 %v4130
    %v4269 = vunpack.c.h.b16 %v4130
    %v4270 = vunpack.c.l.b16 %v4131
    %v4271 = vunpack.c.h.b16 %v4131
    %v4272 = vunpack.c.l.b16 %v4132
    %v4273 = vunpack.c.h.b16 %v4132
    %v4274 = vunpack.c.l.b16 %v4133
    %v4275 = vunpack.c.h.b16 %v4133
    %v4276 = vunpack.c.l.b16 %v4134
    %v4277 = vunpack.c.h.b16 %v4134
    %v4278 = vunpack.c.l.b16 %v4135
    %v4279 = vunpack.c.h.b16 %v4135
    %v4280 = vunpack.c.l.b16 %v4136
    %v4281 = vunpack.c.h.b16 %v4136
    %v4282 = vunpack.c.l.b16 %v4137
    %v4283 = vunpack.c.h.b16 %v4137
    %v4284 = vunpack.c.l.b16 %v4138
    %v4285 = vunpack.c.h.b16 %v4138
    %v4286 = vunpack.c.l.b16 %v4139
    %v4287 = vunpack.c.h.b16 %v4139
    %v4288 = vunpack.c.l.b16 %v4140
    %v4289 = vunpack.c.h.b16 %v4140
    %v4290 = vunpack.c.l.b16 %v4141
    %v4291 = vunpack.c.h.b16 %v4141
    %v4292 = vunpack.c.l.b16 %v4142
    %v4293 = vunpack.c.h.b16 %v4142
    %v4294 = vunpack.c.l.b16 %v4143
    %v4295 = vunpack.c.h.b16 %v4143
    %v4296 = vunpack.c.l.b16 %v4144
    %v4297 = vunpack.c.h.b16 %v4144
    %v4298 = vunpack.c.l.b16 %v4145
    %v4299 = vunpack.c.h.b16 %v4145
    %v4300 = vunpack.c.l.b16 %v4146
    %v4301 = vunpack.c.h.b16 %v4146
    %v4302 = vunpack.c.l.b16 %v4147
    %v4303 = vunpack.c.h.b16 %v4147
    %v4304 = vunpack.c.l.b16 %v4148
    %v4305 = vunpack.c.h.b16 %v4148
    %v4306 = vunpack.c.l.b16 %v4149
    %v4307 = vunpack.c.h.b16 %v4149
    %v4308 = vunpack.c.l.b16 %v4150
    %v4309 = vunpack.c.h.b16 %v4150
    %v4310 = vunpack.c.l.b16 %v4151
    %v4311 = vunpack.c.h.b16 %v4151
    %v4312 = vunpack.c.l.b16 %v4152
    %v4313 = vunpack.c.h.b16 %v4152
    %v4314 = vunpack.c.l.b16 %v4153
    %v4315 = vunpack.c.h.b16 %v4153
    %v4316 = vunpack.c.l.b16 %v4154
    %v4317 = vunpack.c.h.b16 %v4154
    %v4318 = vunpack.c.l.b16 %v4155
    %v4319 = vunpack.c.h.b16 %v4155
    %v4320 = vunpack.c.l.b16 %v4156
    %v4321 = vunpack.c.h.b16 %v4156
    %v4322 = vunpack.c.l.b16 %v4157
    %v4323 = vunpack.c.h.b16 %v4157
    %v4324 = vunpack.c.l.b16 %v4158
    %v4325 = vunpack.c.h.b16 %v4158
    %v4326 = vunpack.c.l.b16 %v4159
    %v4327 = vunpack.c.h.b16 %v4159
    %v4328 = vunpack.c.l.b16 %v4160
    %v4329 = vunpack.c.h.b16 %v4160
    %v4330 = vunpack.c.l.b16 %v4161
    %v4331 = vunpack.c.h.b16 %v4161
    %v4332 = vunpack.c.l.b16 %v4162
    %v4333 = vunpack.c.h.b16 %v4162
    %v4334 = vunpack.c.l.b16 %v4163
    %v4335 = vunpack.c.h.b16 %v4163
    %v4336 = vunpack.c.l.b16 %v4164
    %v4337 = vunpack.c.h.b16 %v4164
    %v4338 = vunpack.c.l.b16 %v4165
    %v4339 = vunpack.c.h.b16 %v4165
    %v4340 = vunpack.c.l.b16 %v4166
    %v4341 = vunpack.c.h.b16 %v4166
    %v4342 = vunpack.c.l.b16 %v4167
    %v4343 = vunpack.c.h.b16 %v4167
    %v4344 = vunpack.c.l.b16 %v4168
    %v4345 = vunpack.c.h.b16 %v4168
    %v4346 = vunpack.c.l.b16 %v4169
    %v4347 = vunpack.c.h.b16 %v4169
    %v4348 = vunpack.c.l.b16 %v4170
    %v4349 = vunpack.c.h.b16 %v4170
    %v4350 = vunpack.c.l.b16 %v4171
    %v4351 = vunpack.c.h.b16 %v4171
    %v4352 = vunpack.c.l.b16 %v4172
    %v4353 = vunpack.c.h.b16 %v4172
    %v4354 = vunpack.c.l.b16 %v4173
    %v4355 = vunpack.c.h.b16 %v4173
    %v4356 = vunpack.c.l.b16 %v4174
    %v4357 = vunpack.c.h.b16 %v4174
    %v4358 = vunpack.c.l.b16 %v4175
    %v4359 = vunpack.c.h.b16 %v4175
    %v4360 = vunpack.c.l.b16 %v4176
    %v4361 = vunpack.c.h.b16 %v4176
    %v4362 = vunpack.c.l.b16 %v4177
    %v4363 = vunpack.c.h.b16 %v4177
    %v4364 = vunpack.c.l.b16 %v4178
    %v4365 = vunpack.c.h.b16 %v4178
    %v4366 = vunpack.c.l.b16 %v4179
    %v4367 = vunpack.c.h.b16 %v4179
    %v4368 = vunpack.c.l.b16 %v4180
    %v4369 = vunpack.c.h.b16 %v4180
    %v4370 = vunpack.c.l.b16 %v4181
    %v4371 = vunpack.c.h.b16 %v4181
    %v4372 = vunpack.c.l.b16 %v4182
    %v4373 = vunpack.c.h.b16 %v4182
    %v4374 = vunpack.c.l.b16 %v4183
    %v4375 = vunpack.c.h.b16 %v4183
    %v4376 = vunpack.c.l.b16 %v4184
    %v4377 = vunpack.c.h.b16 %v4184
    %v4378 = vunpack.c.l.b16 %v4185
    %v4379 = vunpack.c.h.b16 %v4185
    %v4380 = vunpack.c.l.b16 %v4186
    %v4381 = vunpack.c.h.b16 %v4186
    %v4382 = vunpack.c.l.b16 %v4187
    %v4383 = vunpack.c.h.b16 %v4187
    %v4384 = vunpack.c.l.b16 %v4188
    %v4385 = vunpack.c.h.b16 %v4188
    %v4386 = vunpack.c.l.b16 %v4189
    %v4387 = vunpack.c.h.b16 %v4189
    %v4388 = vpack.c.b16 %v4262, %v4260
    %v4389 = vpack.c.b16 %v4263, %v4261
    %v4390 = vpack.c.b16 %v4266, %v4264
    %v4391 = vpack.c.b16 %v4267, %v4265
    %v4392 = vpack.c.b16 %v4270, %v4268
    %v4393 = vpack.c.b16 %v4271, %v4269
    %v4394 = vpack.c.b16 %v4274, %v4272
    %v4395 = vpack.c.b16 %v4275, %v4273
    %v4396 = vpack.c.b16 %v4278, %v4276
    %v4397 = vpack.c.b16 %v4279, %v4277
    %v4398 = vpack.c.b16 %v4282, %v4280
    %v4399 = vpack.c.b16 %v4283, %v4281
    %v4400 = vpack.c.b16 %v4286, %v4284
    %v4401 = vpack.c.b16 %v4287, %v4285
    %v4402 = vpack.c.b16 %v4290, %v4288
    %v4403 = vpack.c.b16 %v4291, %v4289
    %v4404 = vpack.c.b16 %v4294, %v4292
    %v4405 = vpack.c.b16 %v4295, %v4293
    %v4406 = vpack.c.b16 %v4298, %v4296
    %v4407 = vpack.c.b16 %v4299, %v4297
    %v4408 = vpack.c.b16 %v4302, %v4300
    %v4409 = vpack.c.b16 %v4303, %v4301
    %v4410 = vpack.c.b16 %v4306, %v4304
    %v4411 = vpack.c.b16 %v4307, %v4305
    %v4412 = vpack.c.b16 %v4310, %v4308
    %v4413 = vpack.c.b16 %v4311, %v4309
    %v4414 = vpack.c.b16 %v4314, %v4312
    %v4415 = vpack.c.b16 %v4315, %v4313
    %v4416 = vpack.c.b16 %v4318, %v4316
    %v4417 = vpack.c.b16 %v4319, %v4317
    %v4418 = vpack.c.b16 %v4322, %v4320
    %v4419 = vpack.c.b16 %v4323, %v4321
    %v4420 = vpack.c.b16 %v4326, %v4324
    %v4421 = vpack.c.b16 %v4327, %v4325
    %v4422 = vpack.c.b16 %v4330, %v4328
    %v4423 = vpack.c.b16 %v4331, %v4329
    %v4424 = vpack.c.b16 %v4334, %v4332
    %v4425 = vpack.c.b16 %v4335, %v4333
    %v4426 = vpack.c.b16 %v4338, %v4336
    %v4427 = vpack.c.b16 %v4339, %v4337
    %v4428 = vpack.c.b16 %v4342, %v4340
    %v4429 = vpack.c.b16 %v4343, %v4341
    %v4430 = vpack.c.b16 %v4346, %v4344
    %v4431 = vpack.c.b16 %v4347, %v4345
    %v4432 = vpack.c.b16 %v4350, %v4348
    %v4433 = vpack.c.b16 %v4351, %v4349
    %v4434 = vpack.c.b16 %v4354, %v4352
    %v4435 = vpack.c.b16 %v4355, %v4353
    %v4436 = vpack.c.b16 %v4358, %v4356
    %v4437 = vpack.c.b16 %v4359, %v4357
    %v4438 = vpack.c.b16 %v4362, %v4360
    %v4439 = vpack.c.b16 %v4363, %v4361
    %v4440 = vpack.c.b16 %v4366, %v4364
    %v4441 = vpack.c.b16 %v4367, %v4365
    %v4442 = vpack.c.b16 %v4370, %v4368
    %v4443 = vpack.c.b16 %v4371, %v4369
    %v4444 = vpack.c.b16 %v4374, %v4372
    %v4445 = vpack.c.b16 %v4375, %v4373
    %v4446 = vpack.c.b16 %v4378, %v4376
    %v4447 = vpack.c.b16 %v4379, %v4377
    %v4448 = vpack.c.b16 %v4382, %v4380
    %v4449 = vpack.c.b16 %v4383, %v4381
    %v4450 = vpack.c.b16 %v4386, %v4384
    %v4451 = vpack.c.b16 %v4387, %v4385
    %4516 = vmatpush.bf16.msra.mxu0 %v4402
    %4517 = vmatpush.bf16.msra.mxu0 %v4400
    %4518 = vmatpush.bf16.msra.mxu0 %v4398
    %4519 = vmatpush.bf16.msra.mxu0 %v4396
    %4520 = vmatpush.bf16.msra.mxu0 %v4394
    %4521 = vmatpush.bf16.msra.mxu0 %v4392
    %4522 = vmatpush.bf16.msra.mxu0 %v4390
    %4523 = vmatpush.bf16.msra.mxu0 %v4388
    %4524 = vmatmul.bf16.gmra.mxu0 %v4122
    %v4525 = vpop.f32.mrf.mxu0
    %v4526 = vadd.f32 %v4192, %v4525
    %v4527 = vpop.f32.mrf.mxu0
    %4528 = vdwg.mxu0
    %4529 = vmatpush.bf16.msra.mxu0 %v4418
    %4530 = vmatpush.bf16.msra.mxu0 %v4416
    %4531 = vmatpush.bf16.msra.mxu0 %v4414
    %4532 = vmatpush.bf16.msra.mxu0 %v4412
    %4533 = vmatpush.bf16.msra.mxu0 %v4410
    %4534 = vmatpush.bf16.msra.mxu0 %v4408
    %4535 = vmatpush.bf16.msra.mxu0 %v4406
    %4536 = vmatpush.bf16.msra.mxu0 %v4404
    %4537 = vmatmul.bf16.gmra.mxu0 %v4123
    %v4538 = vpop.f32.mrf.mxu0
    %v4539 = vadd.f32 %v4526, %v4538
    %v4540 = vpop.f32.mrf.mxu0
    %4541 = vdwg.mxu0
    %4542 = vmatpush.bf16.msra.mxu0 %v4434
    %4543 = vmatpush.bf16.msra.mxu0 %v4432
    %4544 = vmatpush.bf16.msra.mxu0 %v4430
    %4545 = vmatpush.bf16.msra.mxu0 %v4428
    %4546 = vmatpush.bf16.msra.mxu0 %v4426
    %4547 = vmatpush.bf16.msra.mxu0 %v4424
    %4548 = vmatpush.bf16.msra.mxu0 %v4422
    %4549 = vmatpush.bf16.msra.mxu0 %v4420
    %4550 = vmatmul.bf16.gmra.mxu0 %v4124
    %v4551 = vpop.f32.mrf.mxu0
    %v4552 = vadd.f32 %v4539, %v4551
    %v4553 = vpop.f32.mrf.mxu0
    %4554 = vdwg.mxu0
    %4555 = vmatpush.bf16.msra.mxu0 %v4450
    %4556 = vmatpush.bf16.msra.mxu0 %v4448
    %4557 = vmatpush.bf16.msra.mxu0 %v4446
    %4558 = vmatpush.bf16.msra.mxu0 %v4444
    %4559 = vmatpush.bf16.msra.mxu0 %v4442
    %4560 = vmatpush.bf16.msra.mxu0 %v4440
    %4561 = vmatpush.bf16.msra.mxu0 %v4438
    %4562 = vmatpush.bf16.msra.mxu0 %v4436
    %4563 = vmatmul.bf16.gmra.mxu0 %v4125
    %v4564 = vpop.f32.mrf.mxu0
    %v4565 = vadd.f32 %v4552, %v4564
    %v4566 = vpop.f32.mrf.mxu0
    %4567 = vdwg.mxu0
    %4568 = vmatpush.bf16.msra.mxu0 %v4403
    %4569 = vmatpush.bf16.msra.mxu0 %v4401
    %4570 = vmatpush.bf16.msra.mxu0 %v4399
    %4571 = vmatpush.bf16.msra.mxu0 %v4397
    %4572 = vmatpush.bf16.msra.mxu0 %v4395
    %4573 = vmatpush.bf16.msra.mxu0 %v4393
    %4574 = vmatpush.bf16.msra.mxu0 %v4391
    %4575 = vmatpush.bf16.msra.mxu0 %v4389
    %4576 = vmatmul.bf16.gmra.mxu0 %v4122
    %v4577 = vpop.f32.mrf.mxu0
    %v4578 = vadd.f32 %v4193, %v4577
    %v4579 = vpop.f32.mrf.mxu0
    %4580 = vdwg.mxu0
    %4581 = vmatpush.bf16.msra.mxu0 %v4419
    %4582 = vmatpush.bf16.msra.mxu0 %v4417
    %4583 = vmatpush.bf16.msra.mxu0 %v4415
    %4584 = vmatpush.bf16.msra.mxu0 %v4413
    %4585 = vmatpush.bf16.msra.mxu0 %v4411
    %4586 = vmatpush.bf16.msra.mxu0 %v4409
    %4587 = vmatpush.bf16.msra.mxu0 %v4407
    %4588 = vmatpush.bf16.msra.mxu0 %v4405
    %4589 = vmatmul.bf16.gmra.mxu0 %v4123
    %v4590 = vpop.f32.mrf.mxu0
    %v4591 = vadd.f32 %v4578, %v4590
    %v4592 = vpop.f32.mrf.mxu0
    %4593 = vdwg.mxu0
    %4594 = vmatpush.bf16.msra.mxu0 %v4435
    %4595 = vmatpush.bf16.msra.mxu0 %v4433
    %4596 = vmatpush.bf16.msra.mxu0 %v4431
    %4597 = vmatpush.bf16.msra.mxu0 %v4429
    %4598 = vmatpush.bf16.msra.mxu0 %v4427
    %4599 = vmatpush.bf16.msra.mxu0 %v4425
    %4600 = vmatpush.bf16.msra.mxu0 %v4423
    %4601 = vmatpush.bf16.msra.mxu0 %v4421
    %4602 = vmatmul.bf16.gmra.mxu0 %v4124
    %v4603 = vpop.f32.mrf.mxu0
    %v4604 = vadd.f32 %v4591, %v4603
    %v4605 = vpop.f32.mrf.mxu0
    %4606 = vdwg.mxu0
    %4607 = vmatpush.bf16.msra.mxu0 %v4451
    %4608 = vmatpush.bf16.msra.mxu0 %v4449
    %4609 = vmatpush.bf16.msra.mxu0 %v4447
    %4610 = vmatpush.bf16.msra.mxu0 %v4445
    %4611 = vmatpush.bf16.msra.mxu0 %v4443
    %4612 = vmatpush.bf16.msra.mxu0 %v4441
    %4613 = vmatpush.bf16.msra.mxu0 %v4439
    %4614 = vmatpush.bf16.msra.mxu0 %v4437
    %4615 = vmatmul.bf16.gmra.mxu0 %v4125
    %v4616 = vpop.f32.mrf.mxu0
    %v4617 = vadd.f32 %v4604, %v4616
    %v4618 = vpop.f32.mrf.mxu0
    %4619 = vdwg.mxu0
    %v4620 = vpack.c.bf16 %v4617, %v4565
    %v4621 = vunpack.c.l.bf16 %v4620
    %v4622 = vunpack.c.h.bf16 %v4620
    %v4623 = vmax.f32 %v4621, 0.0
    %v4624 = vmax.f32 %v4622, 0.0
    %v4625 = vpack.c.bf16 %v4623, %v4623
    %v4626 = vpack.c.bf16 %v4624, %v4624
    %v4627 = vld [vmem:[#allocation13] sm:$0xf]
    %v4628 = vld [vmem:[#allocation13 + $0x4] sm:$0xf]
    %v4629 = vld [vmem:[#allocation13 + $0x8] sm:$0xf]
    %v4630 = vld [vmem:[#allocation13 + $0xc] sm:$0xf]
    %v4631 = vld [vmem:[#allocation13 + $0x10] sm:$0xf]
    %v4632 = vld [vmem:[#allocation13 + $0x14] sm:$0xf]
    %v4633 = vld [vmem:[#allocation13 + $0x18] sm:$0xf]
    %v4634 = vld [vmem:[#allocation13 + $0x1c] sm:$0xf]
    %v4635 = vld [vmem:[#allocation13 + $0x20] sm:$0xf]
    %v4636 = vld [vmem:[#allocation13 + $0x24] sm:$0xf]
    %v4637 = vld [vmem:[#allocation13 + $0x28] sm:$0xf]
    %v4638 = vld [vmem:[#allocation13 + $0x2c] sm:$0xf]
    %v4639 = vld [vmem:[#allocation13 + $0x30] sm:$0xf]
    %v4640 = vld [vmem:[#allocation13 + $0x34] sm:$0xf]
    %v4641 = vld [vmem:[#allocation13 + $0x38] sm:$0xf]
    %v4642 = vld [vmem:[#allocation13 + $0x3c] sm:$0xf]
    %v4643 = vld [vmem:[#allocation13 + $0x40] sm:$0xf]
    %v4644 = vld [vmem:[#allocation13 + $0x44] sm:$0xf]
    %v4645 = vld [vmem:[#allocation13 + $0x48] sm:$0xf]
    %v4646 = vld [vmem:[#allocation13 + $0x4c] sm:$0xf]
    %v4647 = vld [vmem:[#allocation13 + $0x50] sm:$0xf]
    %v4648 = vld [vmem:[#allocation13 + $0x54] sm:$0xf]
    %v4649 = vld [vmem:[#allocation13 + $0x58] sm:$0xf]
    %v4650 = vld [vmem:[#allocation13 + $0x5c] sm:$0xf]
    %v4651 = vld [vmem:[#allocation13 + $0x60] sm:$0xf]
    %v4652 = vld [vmem:[#allocation13 + $0x64] sm:$0xf]
    %v4653 = vld [vmem:[#allocation13 + $0x68] sm:$0xf]
    %v4654 = vld [vmem:[#allocation13 + $0x6c] sm:$0xf]
    %v4655 = vld [vmem:[#allocation13 + $0x70] sm:$0xf]
    %v4656 = vld [vmem:[#allocation13 + $0x74] sm:$0xf]
    %v4657 = vld [vmem:[#allocation13 + $0x78] sm:$0xf]
    %v4658 = vld [vmem:[#allocation13 + $0x7c] sm:$0xf]
    %v4659 = vld [vmem:[%s8] sm:$0x1]
    %v4661 = vperm.slane %v4659, 0
    %v4695 = vunpack.c.l.b16 %v4627
    %v4696 = vunpack.c.l.b16 %v4628
    %v4697 = vunpack.c.l.b16 %v4629
    %v4698 = vunpack.c.l.b16 %v4630
    %v4699 = vunpack.c.l.b16 %v4631
    %v4700 = vunpack.c.l.b16 %v4632
    %v4701 = vunpack.c.l.b16 %v4633
    %v4702 = vunpack.c.l.b16 %v4634
    %v4703 = vunpack.c.l.b16 %v4635
    %v4704 = vunpack.c.l.b16 %v4636
    %v4705 = vunpack.c.l.b16 %v4637
    %v4706 = vunpack.c.l.b16 %v4638
    %v4707 = vunpack.c.l.b16 %v4639
    %v4708 = vunpack.c.l.b16 %v4640
    %v4709 = vunpack.c.l.b16 %v4641
    %v4710 = vunpack.c.l.b16 %v4642
    %v4711 = vunpack.c.l.b16 %v4643
    %v4712 = vunpack.c.l.b16 %v4644
    %v4713 = vunpack.c.l.b16 %v4645
    %v4714 = vunpack.c.l.b16 %v4646
    %v4715 = vunpack.c.l.b16 %v4647
    %v4716 = vunpack.c.l.b16 %v4648
    %v4717 = vunpack.c.l.b16 %v4649
    %v4718 = vunpack.c.l.b16 %v4650
    %v4719 = vunpack.c.l.b16 %v4651
    %v4720 = vunpack.c.l.b16 %v4652
    %v4721 = vunpack.c.l.b16 %v4653
    %v4722 = vunpack.c.l.b16 %v4654
    %v4723 = vunpack.c.l.b16 %v4655
    %v4724 = vunpack.c.l.b16 %v4656
    %v4725 = vunpack.c.l.b16 %v4657
    %v4726 = vunpack.c.l.b16 %v4658
    %v4727 = vpack.c.b16 %v4696, %v4695
    %v4728 = vpack.c.b16 %v4698, %v4697
    %v4729 = vpack.c.b16 %v4700, %v4699
    %v4730 = vpack.c.b16 %v4702, %v4701
    %v4731 = vpack.c.b16 %v4704, %v4703
    %v4732 = vpack.c.b16 %v4706, %v4705
    %v4733 = vpack.c.b16 %v4708, %v4707
    %v4734 = vpack.c.b16 %v4710, %v4709
    %v4735 = vpack.c.b16 %v4712, %v4711
    %v4736 = vpack.c.b16 %v4714, %v4713
    %v4737 = vpack.c.b16 %v4716, %v4715
    %v4738 = vpack.c.b16 %v4718, %v4717
    %v4739 = vpack.c.b16 %v4720, %v4719
    %v4740 = vpack.c.b16 %v4722, %v4721
    %v4741 = vpack.c.b16 %v4724, %v4723
    %v4742 = vpack.c.b16 %v4726, %v4725
    %4759 = vmatpush.bf16.msra.mxu0 %v4734
    %4760 = vmatpush.bf16.msra.mxu0 %v4733
    %4761 = vmatpush.bf16.msra.mxu0 %v4732
    %4762 = vmatpush.bf16.msra.mxu0 %v4731
    %4763 = vmatpush.bf16.msra.mxu0 %v4730
    %4764 = vmatpush.bf16.msra.mxu0 %v4729
    %4765 = vmatpush.bf16.msra.mxu0 %v4728
    %4766 = vmatpush.bf16.msra.mxu0 %v4727
    %4767 = vmatmul.bf16.gmra.mxu0 %v4625
    %v4768 = vpop.f32.mrf.mxu0
    %v4769 = vadd.f32 %v4661, %v4768
    %v4770 = vpop.f32.mrf.mxu0
    %4771 = vdwg.mxu0
    %4772 = vmatpush.bf16.msra.mxu0 %v4742
    %4773 = vmatpush.bf16.msra.mxu0 %v4741
    %4774 = vmatpush.bf16.msra.mxu0 %v4740
    %4775 = vmatpush.bf16.msra.mxu0 %v4739
    %4776 = vmatpush.bf16.msra.mxu0 %v4738
    %4777 = vmatpush.bf16.msra.mxu0 %v4737
    %4778 = vmatpush.bf16.msra.mxu0 %v4736
    %4779 = vmatpush.bf16.msra.mxu0 %v4735
    %4780 = vmatmul.bf16.gmra.mxu0 %v4626
    %v4781 = vpop.f32.mrf.mxu0
    %v4782 = vadd.f32 %v4769, %v4781
    %v4783 = vpop.f32.mrf.mxu0
    %4784 = vdwg.mxu0
    %4785 = vst [vmem:[#allocation14] sm:$0xff] %v4782
    // Predicated region
    $region66: #{tpu_custom_call.1} parent=1 // pred_check
      _
    $region67: #{tpu_custom_call.1} parent=1 // pred_check_branch
      %4787 = sbr.rel (0) target = $region69
    $region68: #{tpu_custom_call.1} parent=1 // pred_region
      %4789 = vsyncadd [#allocation4], 0
      %s4791 = sshll.u32 [#allocation14], 4
      %s4792 = int_to_ptr.vmem [resolvable:$true] %s4791
      %s4793 = sshll.u32 %s9, 4
      %s4794 = int_to_ptr.hbm [resolvable:$true] %s4793
      %4796 = dma.vmem_to_hbm [thread:$0]  %s4792, 128, %s4794, [#allocation4]
    $region69: #{tpu_custom_call.1} parent=1 // pred_fallthru
      _
    // Predicated region
    $region70: #{tpu_custom_call.1} parent=1 // pred_check
      _
    $region71: #{tpu_custom_call.1} parent=1 // pred_check_branch
      %4798 = sbr.rel (0) target = $region73
    $region72: #{tpu_custom_call.1} parent=1 // pred_region
      %4800 = dma.done [#allocation4], 128
    $region73: #{tpu_custom_call.1} parent=1 // pred_fallthru
      _
    %4801 = vsyncpa [#allocation3], 1
    %4802 = vsyncpa [#allocation6], 1
    %4803 = vsyncpa [#allocation9], 1
    %4804 = vsyncpa [#allocation12], 1
    %4805 = vsyncpa [#allocation4], 1

</llo_original>
